<compile_context>
chip_gen: v7x
topology: tpu7x:2x2x1
jax: 0.10.0
libtpu: 0.0.40
codegen_flags: <defaults>
</compile_context>

<pallas_src>
import functools

import jax
import jax.numpy as jnp
from jax import lax
from jax.experimental import pallas as pl
from jax.experimental.pallas import tpu as pltpu


# Safe on v5e/v6e/v7x (v7x physical VMEM is 64 MiB; 32 MiB scoped is the
# default and all production-dim tile budgets below stay under it).
VMEM_LIMIT = 32 * 1024 * 1024

# Tile targets (256-aligned output tiles for the 2x256 MXU on v6e/v7x,
# K >= 512 to amortize pipeline fill).  FFN tiles are chosen so that the
# double-buffered wg/wu/wd blocks + resident accumulator fit in 32 MiB at
# d_llm=4096 / d_ff=11008.  Fall back to full-extent blocks whenever the
# dimension is small or not divisible (always layout-legal).
LIN_TM, LIN_TN, LIN_TK = 256, 256, 512
FFN_TM, FFN_TF = 128, 256
ATTN_BQ, ATTN_BK = 256, 256


def _tile(dim, target):
    return target if (dim >= target and dim % target == 0) else dim


# ----------------------------- Pallas kernels ------------------------------

def _linear_kernel(x_ref, w_ref, b_ref, o_ref, acc_ref):
    # y = x @ W + b ; K-tiled with a resident f32 accumulator (P1 + P3).
    k = pl.program_id(2)

    @pl.when(k == 0)
    def _():
        acc_ref[...] = jnp.zeros_like(acc_ref)

    acc_ref[...] += jnp.dot(x_ref[...].astype(jnp.bfloat16), w_ref[...],
                            preferred_element_type=jnp.float32)

    @pl.when(k == pl.num_programs(2) - 1)
    def _():
        o_ref[...] = (acc_ref[...] + b_ref[...]).astype(o_ref.dtype)


def pallas_linear(x, w, b, out_dtype=jnp.float32):
    M, K = x.shape
    N = w.shape[1]
    tm, tn, tk = _tile(M, LIN_TM), _tile(N, LIN_TN), _tile(K, LIN_TK)
    return pl.pallas_call(
        _linear_kernel,
        out_shape=jax.ShapeDtypeStruct((M, N), out_dtype),
        grid=(M // tm, N // tn, K // tk),
        in_specs=[pl.BlockSpec((tm, tk), lambda i, j, k: (i, k)),
                  pl.BlockSpec((tk, tn), lambda i, j, k: (k, j)),
                  pl.BlockSpec((1, tn), lambda i, j, k: (0, j))],
        out_specs=pl.BlockSpec((tm, tn), lambda i, j, k: (i, j)),
        scratch_shapes=[pltpu.VMEM((tm, tn), jnp.float32)],
        compiler_params=pltpu.CompilerParams(
            dimension_semantics=("parallel", "parallel", "arbitrary"),
            vmem_limit_bytes=VMEM_LIMIT),
    )(x, w, b)


def _rmsnorm_kernel(x_ref, w_ref, o_ref, *, eps):
    x = x_ref[...].astype(jnp.float32)
    var = jnp.mean(x * x, axis=-1, keepdims=True)
    o_ref[...] = x * lax.rsqrt(var + eps) * w_ref[...]


def pallas_rmsnorm(x, w, eps=1e-5):
    M, D = x.shape
    tm = _tile(M, LIN_TM)
    return pl.pallas_call(
        functools.partial(_rmsnorm_kernel, eps=eps),
        out_shape=jax.ShapeDtypeStruct((M, D), jnp.float32),
        grid=(M // tm,),
        in_specs=[pl.BlockSpec((tm, D), lambda i: (i, 0)),
                  pl.BlockSpec((1, D), lambda i: (0, 0))],
        out_specs=pl.BlockSpec((tm, D), lambda i: (i, 0)),
        compiler_params=pltpu.CompilerParams(
            dimension_semantics=("parallel",),
            vmem_limit_bytes=VMEM_LIMIT),
    )(x, w)


def _norm_matmul_kernel(x_ref, g_ref, w_ref, o_ref, *, eps):
    # RMSNorm fused into the matmul prologue: norm in f32, MXU operands bf16.
    x = x_ref[...].astype(jnp.float32)
    var = jnp.mean(x * x, axis=-1, keepdims=True)
    h = (x * lax.rsqrt(var + eps) * g_ref[...]).astype(jnp.bfloat16)
    o_ref[...] = jnp.dot(h, w_ref[...],
                         preferred_element_type=jnp.float32).astype(o_ref.dtype)


def pallas_norm_matmul(x, g, w, out_dtype=jnp.bfloat16, eps=1e-5):
    M, D = x.shape
    N = w.shape[1]
    tm, tn = _tile(M, LIN_TM), _tile(N, LIN_TN)
    return pl.pallas_call(
        functools.partial(_norm_matmul_kernel, eps=eps),
        out_shape=jax.ShapeDtypeStruct((M, N), out_dtype),
        grid=(M // tm, N // tn),
        in_specs=[pl.BlockSpec((tm, D), lambda i, j: (i, 0)),
                  pl.BlockSpec((1, D), lambda i, j: (0, 0)),
                  pl.BlockSpec((D, tn), lambda i, j: (0, j))],
        out_specs=pl.BlockSpec((tm, tn), lambda i, j: (i, j)),
        compiler_params=pltpu.CompilerParams(
            dimension_semantics=("parallel", "parallel"),
            vmem_limit_bytes=VMEM_LIMIT),
    )(x, g, w)


def _swiglu_kernel(x_ref, g_ref, wg_ref, wu_ref, wd_ref, o_ref, acc_ref, *, eps):
    # RMSNorm + SwiGLU fused; d_ff is the (last, arbitrary) reduction grid axis,
    # so the (tm, d_ff) intermediate never leaves VMEM.
    f = pl.program_id(1)

    @pl.when(f == 0)
    def _():
        acc_ref[...] = jnp.zeros_like(acc_ref)

    x = x_ref[...].astype(jnp.float32)
    var = jnp.mean(x * x, axis=-1, keepdims=True)
    h = (x * lax.rsqrt(var + eps) * g_ref[...]).astype(jnp.bfloat16)
    g = jnp.dot(h, wg_ref[...], preferred_element_type=jnp.float32)
    u = jnp.dot(h, wu_ref[...], preferred_element_type=jnp.float32)
    a = (g * (1.0 / (1.0 + jnp.exp(-g))) * u).astype(jnp.bfloat16)  # SiLU in f32
    acc_ref[...] += jnp.dot(a, wd_ref[...], preferred_element_type=jnp.float32)

    @pl.when(f == pl.num_programs(1) - 1)
    def _():
        o_ref[...] = acc_ref[...]


def pallas_swiglu(x, g, wg, wu, wd, eps=1e-5):
    M, D = x.shape
    F = wg.shape[1]
    tm, tf = _tile(M, FFN_TM), _tile(F, FFN_TF)
    return pl.pallas_call(
        functools.partial(_swiglu_kernel, eps=eps),
        out_shape=jax.ShapeDtypeStruct((M, D), jnp.float32),
        grid=(M // tm, F // tf),
        in_specs=[pl.BlockSpec((tm, D), lambda i, f: (i, 0)),
                  pl.BlockSpec((1, D), lambda i, f: (0, 0)),
                  pl.BlockSpec((D, tf), lambda i, f: (0, f)),
                  pl.BlockSpec((D, tf), lambda i, f: (0, f)),
                  pl.BlockSpec((tf, D), lambda i, f: (f, 0))],
        out_specs=pl.BlockSpec((tm, D), lambda i, f: (i, 0)),
        scratch_shapes=[pltpu.VMEM((tm, D), jnp.float32)],
        compiler_params=pltpu.CompilerParams(
            dimension_semantics=("parallel", "arbitrary"),
            vmem_limit_bytes=VMEM_LIMIT),
    )(x, g, wg, wu, wd)


def _rope_kernel(cos_ref, sin_ref, rot_ref, x_ref, o_ref, *, scale):
    # rotate_half(x) == x @ R (R is a +-1 permutation matrix) -> MXU slot.
    x = x_ref[0]
    rotated = jnp.dot(x.astype(jnp.bfloat16), rot_ref[...],
                      preferred_element_type=jnp.float32)
    xf = x.astype(jnp.float32)
    o_ref[0] = ((xf * cos_ref[...] + rotated * sin_ref[...]) * scale
                ).astype(o_ref.dtype)


def pallas_rope(x, cos, sin, rot, scale=1.0):
    # x: (B*H, S, Dh) -> RoPE'd bf16 of the same shape (q additionally carries
    # the 1/sqrt(Dh) attention scale so the flash kernel never rescales).
    BH, S, Dh = x.shape
    bs = _tile(S, ATTN_BQ)
    return pl.pallas_call(
        functools.partial(_rope_kernel, scale=scale),
        out_shape=jax.ShapeDtypeStruct((BH, S, Dh), jnp.bfloat16),
        grid=(BH, S // bs),
        in_specs=[pl.BlockSpec((bs, Dh), lambda b, si: (si, 0)),
                  pl.BlockSpec((bs, Dh), lambda b, si: (si, 0)),
                  pl.BlockSpec((Dh, Dh), lambda b, si: (0, 0)),
                  pl.BlockSpec((1, bs, Dh), lambda b, si: (b, si, 0))],
        out_specs=pl.BlockSpec((1, bs, Dh), lambda b, si: (b, si, 0)),
        compiler_params=pltpu.CompilerParams(
            dimension_semantics=("parallel", "parallel"),
            vmem_limit_bytes=VMEM_LIMIT),
    )(cos, sin, rot, x)


def _flash_attn_kernel(q_ref, k_ref, v_ref, o_ref, m_sc, l_sc, acc_sc,
                       *, block_q, block_k):
    qi = pl.program_id(1)
    ki = pl.program_id(2)

    @pl.when(ki == 0)
    def _():
        m_sc[...] = jnp.full_like(m_sc, -jnp.inf)
        l_sc[...] = jnp.zeros_like(l_sc)
        acc_sc[...] = jnp.zeros_like(acc_sc)

    # Skip kv blocks that are entirely above the causal diagonal.
    @pl.when(ki * block_k < (qi + 1) * block_q)
    def _():
        s = lax.dot_general(q_ref[0], k_ref[0],
                            (((1,), (1,)), ((), ())),
                            preferred_element_type=jnp.float32)     # (bq, bk) f32
        row = qi * block_q + lax.broadcasted_iota(jnp.int32, s.shape, 0)
        col = ki * block_k + lax.broadcasted_iota(jnp.int32, s.shape, 1)
        s = jnp.where(col <= row, s, -1e30)                         # causal, f32
        m_cur = jnp.max(s, axis=-1, keepdims=True)
        m_new = jnp.maximum(m_sc[...], m_cur)
        alpha = jnp.exp(m_sc[...] - m_new)
        p = jnp.exp(s - m_new)
        l_sc[...] = alpha * l_sc[...] + jnp.sum(p, axis=-1, keepdims=True)
        acc_sc[...] = alpha * acc_sc[...] + jnp.dot(
            p.astype(jnp.bfloat16), v_ref[0], preferred_element_type=jnp.float32)
        m_sc[...] = m_new

    @pl.when(ki == pl.num_programs(2) - 1)
    def _():
        o_ref[0] = (acc_sc[...] * pl.reciprocal(l_sc[...], approx=True)
                    ).astype(o_ref.dtype)


def pallas_flash_attention(q, k, v):
    # q/k already RoPE'd + scaled (bf16).  v is bf16 from the QKV projection.
    BH, S, Dh = q.shape
    bq, bk = _tile(S, ATTN_BQ), _tile(S, ATTN_BK)
    kern = functools.partial(_flash_attn_kernel, block_q=bq, block_k=bk)
    return pl.pallas_call(
        kern,
        out_shape=jax.ShapeDtypeStruct((BH, S, Dh), jnp.bfloat16),
        grid=(BH, S // bq, S // bk),
        in_specs=[
            pl.BlockSpec((1, bq, Dh), lambda b, qi, ki: (b, qi, 0)),  # q
            pl.BlockSpec((1, bk, Dh), lambda b, qi, ki: (b, ki, 0)),  # k
            pl.BlockSpec((1, bk, Dh), lambda b, qi, ki: (b, ki, 0)),  # v
        ],
        out_specs=pl.BlockSpec((1, bq, Dh), lambda b, qi, ki: (b, qi, 0)),
        scratch_shapes=[pltpu.VMEM((bq, 1), jnp.float32),
                        pltpu.VMEM((bq, 1), jnp.float32),
                        pltpu.VMEM((bq, Dh), jnp.float32)],
        compiler_params=pltpu.CompilerParams(
            dimension_semantics=("parallel", "parallel", "arbitrary"),
            vmem_limit_bytes=VMEM_LIMIT),
    )(q, k, v)


def _head_kernel(x_ref, w1_ref, b1_ref, w2_ref, b2_ref, o_ref):
    # out_layer = Linear -> Dropout(0.3, identity at inference) -> Linear,
    # fused into one launch (both matrices are tiny relative to the trunk).
    h = jnp.dot(x_ref[...].astype(jnp.bfloat16), w1_ref[...],
                preferred_element_type=jnp.float32) + b1_ref[...]
    o_ref[...] = jnp.dot(h.astype(jnp.bfloat16), w2_ref[...],
                         preferred_element_type=jnp.float32) + b2_ref[...]


def pallas_head(x, w1, b1, w2, b2):
    M, K = x.shape
    H = w1.shape[1]
    return pl.pallas_call(
        _head_kernel,
        out_shape=jax.ShapeDtypeStruct((M, 1), jnp.float32),
        grid=(1,),
        in_specs=[pl.BlockSpec((M, K), lambda i: (0, 0)),
                  pl.BlockSpec((K, H), lambda i: (0, 0)),
                  pl.BlockSpec((1, H), lambda i: (0, 0)),
                  pl.BlockSpec((H, 1), lambda i: (0, 0)),
                  pl.BlockSpec((1, 1), lambda i: (0, 0))],
        out_specs=pl.BlockSpec((M, 1), lambda i: (0, 0)),
        compiler_params=pltpu.CompilerParams(vmem_limit_bytes=VMEM_LIMIT),
    )(x, w1, b1, w2, b2)


def _stats_kernel(stats_ref, o_ref, *, sentinel):
    # per-row masked min / max / median / trend, matching the PyTorch loop:
    #   valid = stats[i][stats[i] != -11.0]; trend = diff().sum() = last - first
    s = stats_ref[...]                                     # (B, L)
    B, L = s.shape
    valid = s != sentinel
    idx = lax.broadcasted_iota(jnp.int32, (B, L), 1)
    n = jnp.sum(valid.astype(jnp.float32), axis=1, keepdims=True)        # (B, 1)
    minv = jnp.min(jnp.where(valid, s, jnp.inf), axis=1, keepdims=True)
    maxv = jnp.max(jnp.where(valid, s, -jnp.inf), axis=1, keepdims=True)
    # torch.median(valid) == element of stable rank (n_valid - 1) // 2
    rank = jnp.zeros((B, L), jnp.float32)
    for i in range(L):                                     # static unroll (L small)
        s_i = s[:, i:i + 1]
        v_i = valid[:, i:i + 1]
        less = (s_i < s) | ((s_i == s) & (i < idx))
        rank = rank + jnp.where(v_i & less, 1.0, 0.0)
    kk = jnp.floor((n - 1.0) * 0.5)
    med = jnp.sum(jnp.where(valid & (rank == kk), s, 0.0), axis=1, keepdims=True)
    idxf = idx.astype(jnp.float32)
    first_idx = jnp.min(jnp.where(valid, idxf, jnp.float32(L)), axis=1, keepdims=True)
    last_idx = jnp.max(jnp.where(valid, idxf, -1.0), axis=1, keepdims=True)
    first_val = jnp.sum(jnp.where(idxf == first_idx, s, 0.0), axis=1, keepdims=True)
    last_val = jnp.sum(jnp.where(idxf == last_idx, s, 0.0), axis=1, keepdims=True)
    trend = jnp.where(n > 1.0, last_val - first_val, 0.0)
    nan = jnp.float32(jnp.nan)
    minv = jnp.where(n > 0.0, minv, nan)
    maxv = jnp.where(n > 0.0, maxv, nan)
    med = jnp.where(n > 0.0, med, nan)
    oi = lax.broadcasted_iota(jnp.int32, (B, 4), 1)
    o_ref[...] = jnp.where(oi == 0, minv,
                 jnp.where(oi == 1, maxv,
                 jnp.where(oi == 2, med, trend)))


def pallas_stats(stats, sentinel=-11.0):
    B, L = stats.shape
    return pl.pallas_call(
        functools.partial(_stats_kernel, sentinel=sentinel),
        out_shape=jax.ShapeDtypeStruct((B, 4), jnp.float32),
        grid=(1,),
        in_specs=[pl.BlockSpec((B, L), lambda i: (0, 0))],
        out_specs=pl.BlockSpec((B, 4), lambda i: (0, 0)),
        compiler_params=pltpu.CompilerParams(vmem_limit_bytes=VMEM_LIMIT),
    )(stats)


# ------------------------------- JAX glue -----------------------------------

def _rope_cos_sin(S, Dh):
    inv_freq = 1.0 / (10000.0 ** (jnp.arange(0, Dh, 2, dtype=jnp.float32) / Dh))
    t = jnp.arange(S, dtype=jnp.float32)
    freqs = jnp.outer(t, inv_freq)                         # (S, Dh/2)
    emb = jnp.concatenate([freqs, freqs], axis=-1)         # (S, Dh)
    return jnp.cos(emb), jnp.sin(emb)


def _rope_rotation_matrix(Dh):
    # rotate_half(x) = [-x2, x1] expressed as x @ R (exact +-1 values in bf16),
    # so the rotation runs on the MXU slot inside the RoPE kernel.
    h = Dh // 2
    r = jnp.zeros((Dh, Dh), jnp.float32)
    r = r.at[jnp.arange(h) + h, jnp.arange(h)].set(-1.0)
    r = r.at[jnp.arange(h), jnp.arange(h) + h].set(1.0)
    return r.astype(jnp.bfloat16)


def _llama_layer(x, lp, cos, sin, rot, n_heads):
    B, S, D = x.shape
    Dh = D // n_heads

    # fused RMSNorm + QKV projection (single W_qkv, bf16 output)
    qkv = pallas_norm_matmul(x.reshape(B * S, D), lp['ln1'], lp['wqkv'])
    qkv = qkv.reshape(B, S, 3, n_heads, Dh)
    q = jnp.transpose(qkv[:, :, 0], (0, 2, 1, 3)).reshape(B * n_heads, S, Dh)
    k = jnp.transpose(qkv[:, :, 1], (0, 2, 1, 3)).reshape(B * n_heads, S, Dh)
    v = jnp.transpose(qkv[:, :, 2], (0, 2, 1, 3)).reshape(B * n_heads, S, Dh)

    # RoPE applied once per position (outside the kv loop); q carries the
    # 1/sqrt(Dh) softmax scale so the flash kernel never rescales.
    scale = 1.0 / (Dh ** 0.5)
    q = pallas_rope(q, cos, sin, rot, scale=scale)
    k = pallas_rope(k, cos, sin, rot, scale=1.0)

    o = pallas_flash_attention(q, k, v)                         # (BH, S, Dh) bf16
    o = jnp.transpose(o.reshape(B, n_heads, S, Dh), (0, 2, 1, 3)).reshape(B * S, D)
    o = pallas_linear(o, lp['wo'], jnp.zeros((1, D), jnp.float32))   # no bias in LLaMA
    x = x + o.reshape(B, S, D)

    # fused RMSNorm + SwiGLU MLP
    m = pallas_swiglu(x.reshape(B * S, D), lp['ln2'], lp['wg'], lp['wu'], lp['wd'])
    return x + m.reshape(B, S, D)


def llm_decoder_forward(params, text_embed, vision_embed, stats, *, n_heads):
    B, St, Dm = text_embed.shape
    Sv = vision_embed.shape[1]
    d_llm = params['in_w'].shape[1]

    # in_layer: shared Linear(d_model, d_llm) applied to text & vision embeds
    te = pallas_linear(text_embed.reshape(B * St, Dm),
                       params['in_w'], params['in_b']).reshape(B, St, d_llm)
    ve = pallas_linear(vision_embed.reshape(B * Sv, Dm),
                       params['in_w'], params['in_b']).reshape(B, Sv, d_llm)

    # per-sample masked min / max / median / trend (feeds the prompt in PyTorch)
    stat_summary = pallas_stats(stats)                     # (B, 4)
    # TODO(synk): f-string prompt building, the HF tokenizer and the pretrained
    # 4-bit LLaMA-2 input-embedding lookup have no Pallas equivalent;
    # deterministic synthetic prompt embeddings (B, P, d_llm) stand in for them.
    prompt_embeds = params['prompt_embeds']

    x = jnp.concatenate([prompt_embeds, te, ve], axis=1)   # (B, S, d_llm), f32
    S = x.shape[1]
    Dh = d_llm // n_heads

    # RoPE tables hoisted out of the per-layer loop
    cos, sin = _rope_cos_sin(S, Dh)
    rot = _rope_rotation_matrix(Dh)

    # frozen LLaMA decoder stack (causal attn + RoPE + SwiGLU), synthetic weights
    for lp in params['layers']:
        x = _llama_layer(x, lp, cos, sin, rot, n_heads)
    x = pallas_rmsnorm(x.reshape(B * S, d_llm), params['final_ln']).reshape(B, S, d_llm)

    dec = jnp.mean(x, axis=1)                              # mean over sequence
    # out_layer: Linear -> Dropout(0.3, inference-mode identity) -> Linear, fused
    out = pallas_head(dec, params['out_w1'], params['out_b1'],
                      params['out_w2'], params['out_b2'])  # (B, 1)
    return out, stat_summary


def init_params(key, *, d_model, d_llm, d_hidden, d_ff, n_layers, B, P):
    keys = iter(jax.random.split(key, 16 + 8 * n_layers))
    bf = jnp.bfloat16

    def nxt(shape, scale, dtype=jnp.float32):
        return (jax.random.normal(next(keys), shape, jnp.float32) * scale).astype(dtype)

    params = {
        'in_w': nxt((d_model, d_llm), d_model ** -0.5, bf),
        'in_b': nxt((1, d_llm), 0.01),
        'out_w1': nxt((d_llm, d_hidden), d_llm ** -0.5, bf),
        'out_b1': nxt((1, d_hidden), 0.01),
        'out_w2': nxt((d_hidden, 1), d_hidden ** -0.5, bf),
        'out_b2': nxt((1, 1), 0.01),
        'final_ln': jnp.ones((1, d_llm), jnp.float32),
        'prompt_embeds': nxt((B, P, d_llm), 0.02),
        'layers': [],
    }
    for _ in range(n_layers):
        params['layers'].append({
            'ln1': jnp.ones((1, d_llm), jnp.float32),
            'ln2': jnp.ones((1, d_llm), jnp.float32),
            'wqkv': nxt((d_llm, 3 * d_llm), d_llm ** -0.5, bf),   # [Wq | Wk | Wv]
            'wo': nxt((d_llm, d_llm), d_llm ** -0.5, bf),
            'wg': nxt((d_llm, d_ff), d_llm ** -0.5, bf),
            'wu': nxt((d_llm, d_ff), d_llm ** -0.5, bf),
            'wd': nxt((d_ff, d_llm), d_ff ** -0.5, bf),
        })
    return params


if __name__ == "__main__":
    B, St, Sv, P = 2, 4, 4, 8
    d_model, d_llm, d_hidden, d_ff = 32, 64, 32, 128
    n_heads, n_layers, L_stats = 4, 2, 8

    key = jax.random.PRNGKey(0)
    k_p, k_t, k_v, k_s = jax.random.split(key, 4)
    params = init_params(k_p, d_model=d_model, d_llm=d_llm, d_hidden=d_hidden,
                         d_ff=d_ff, n_layers=n_layers, B=B, P=P)
    text_embed = jax.random.normal(k_t, (B, St, d_model), jnp.float32)
    vision_embed = jax.random.normal(k_v, (B, Sv, d_model), jnp.float32)
    stats = jax.random.normal(k_s, (B, L_stats), jnp.float32)
    # inject the -11.0 "missing value" sentinel used by the PyTorch code
    stats = stats.at[0, 1].set(-11.0).at[1, 0].set(-11.0).at[1, 5].set(-11.0)

    fwd = jax.jit(functools.partial(llm_decoder_forward, n_heads=n_heads))
    out, stat_summary = fwd(params, text_embed, vision_embed, stats)
    jax.block_until_ready((out, stat_summary))
    assert out.shape == (B, 1)
    assert stat_summary.shape == (B, 4)
    print("KERNEL_OK")
</pallas_src>

<mosaic_0001>
module attributes {stable_mosaic.version = 11 : i64} {
  func.func @_linear_kernel(%arg0: i32, %arg1: i32, %arg2: i32, %arg3: memref<8x32xf32, #tpu.memory_space<vmem>>, %arg4: memref<32x64xbf16, #tpu.memory_space<vmem>>, %arg5: memref<1x64xf32, #tpu.memory_space<vmem>>, %arg6: memref<8x64xf32, #tpu.memory_space<vmem>>, %arg7: memref<8x64xf32, #tpu.memory_space<vmem>>) attributes {dimension_semantics = [#tpu.dimension_semantics<parallel>, #tpu.dimension_semantics<parallel>, #tpu.dimension_semantics<arbitrary>], iteration_bounds = array<i64: 1, 1, 1>, scalar_prefetch = 0 : i64, scratch_operands = 1 : i64, tpu.core_type = #tpu.core_type<tc>, window_params = [{transform_indices = @transform_0, window_bounds = array<i64: 8, 32>}, {transform_indices = @transform_1, window_bounds = array<i64: 32, 64>}, {transform_indices = @transform_2, window_bounds = array<i64: 1, 64>}, {transform_indices = @transform_3, window_bounds = array<i64: 8, 64>}]} {
    %c0_i32 = arith.constant 0 : i32
    %0 = arith.cmpi eq, %arg2, %c0_i32 : i32
    %1 = arith.extui %0 : i1 to i32
    %c0_i32_0 = arith.constant 0 : i32
    %2 = arith.cmpi ne, %1, %c0_i32_0 : i32
    scf.if %2 {
      %cst_10 = arith.constant 0.000000e+00 : f32
      %13 = vector.broadcast %cst_10 : f32 to vector<8x64xf32>
      %c0_11 = arith.constant 0 : index
      %c0_12 = arith.constant 0 : index
      %14 = vector.load %arg7[%c0_11, %c0_12] : memref<8x64xf32, #tpu.memory_space<vmem>>, vector<8x64xf32>
      tpu.vector_store %arg7[%c0_11, %c0_12], %13 {strides = array<i32>} : memref<8x64xf32, #tpu.memory_space<vmem>>, vector<8x64xf32>,
    } else {
    }
    %c0 = arith.constant 0 : index
    %c0_1 = arith.constant 0 : index
    %3 = vector.load %arg7[%c0, %c0_1] : memref<8x64xf32, #tpu.memory_space<vmem>>, vector<8x64xf32>
    %c0_2 = arith.constant 0 : index
    %c0_3 = arith.constant 0 : index
    %4 = vector.load %arg3[%c0_2, %c0_3] : memref<8x32xf32, #tpu.memory_space<vmem>>, vector<8x32xf32>
    %5 = arith.truncf %4 : vector<8x32xf32> to vector<8x32xbf16>
    %c0_4 = arith.constant 0 : index
    %c0_5 = arith.constant 0 : index
    %6 = vector.load %arg4[%c0_4, %c0_5] : memref<32x64xbf16, #tpu.memory_space<vmem>>, vector<32x64xbf16>
    %cst = arith.constant dense<0.000000e+00> : vector<8x64xf32>
    %7 = tpu.matmul %5, %6, %cst {dimension_numbers = #tpu.dot_dimension_numbers<[1], [0], [0], [1], [0, 0, 1, 1], [], []>} : vector<8x32xbf16>, vector<32x64xbf16>, vector<8x64xf32> -> vector<8x64xf32>
    %8 = arith.addf %3, %7 : vector<8x64xf32>
    %c0_6 = arith.constant 0 : index
    %c0_7 = arith.constant 0 : index
    %9 = vector.load %arg7[%c0_6, %c0_7] : memref<8x64xf32, #tpu.memory_space<vmem>>, vector<8x64xf32>
    tpu.vector_store %arg7[%c0_6, %c0_7], %8 {strides = array<i32>} : memref<8x64xf32, #tpu.memory_space<vmem>>, vector<8x64xf32>,
    %c0_i32_8 = arith.constant 0 : i32
    %10 = arith.cmpi eq, %arg2, %c0_i32_8 : i32
    %11 = arith.extui %10 : i1 to i32
    %c0_i32_9 = arith.constant 0 : i32
    %12 = arith.cmpi ne, %11, %c0_i32_9 : i32
    scf.if %12 {
      %c0_10 = arith.constant 0 : index
      %c0_11 = arith.constant 0 : index
      %13 = vector.load %arg7[%c0_10, %c0_11] : memref<8x64xf32, #tpu.memory_space<vmem>>, vector<8x64xf32>
      %c0_12 = arith.constant 0 : index
      %c0_13 = arith.constant 0 : index
      %14 = vector.load %arg5[%c0_12, %c0_13] : memref<1x64xf32, #tpu.memory_space<vmem>>, vector<1x64xf32>
      %15 = vector.broadcast %14 : vector<1x64xf32> to vector<8x64xf32>
      %16 = arith.addf %13, %15 : vector<8x64xf32>
      %c0_14 = arith.constant 0 : index
      %c0_15 = arith.constant 0 : index
      %17 = vector.load %arg6[%c0_14, %c0_15] : memref<8x64xf32, #tpu.memory_space<vmem>>, vector<8x64xf32>
      tpu.vector_store %arg6[%c0_14, %c0_15], %16 {strides = array<i32>} : memref<8x64xf32, #tpu.memory_space<vmem>>, vector<8x64xf32>,
    } else {
    }
    return
  }
  func.func @transform_0(%arg0: i32, %arg1: i32, %arg2: i32) -> (i32, i32) {
    %c0_i32 = arith.constant 0 : i32
    return %arg0, %arg2 : i32, i32
  }
  func.func @transform_1(%arg0: i32, %arg1: i32, %arg2: i32) -> (i32, i32) {
    %c0_i32 = arith.constant 0 : i32
    return %arg2, %arg1 : i32, i32
  }
  func.func @transform_2(%arg0: i32, %arg1: i32, %arg2: i32) -> (i32, i32) {
    %c0_i32 = arith.constant 0 : i32
    %c0_i32_0 = arith.constant 0 : i32
    return %c0_i32, %arg1 : i32, i32
  }
  func.func @transform_3(%arg0: i32, %arg1: i32, %arg2: i32) -> (i32, i32) {
    %c0_i32 = arith.constant 0 : i32
    return %arg0, %arg1 : i32, i32
  }
}

module attributes {stable_mosaic.version = 11 : i64} {
  func.func @_norm_matmul_kernel(%arg0: i32, %arg1: i32, %arg2: memref<32x64xf32, #tpu.memory_space<vmem>>, %arg3: memref<1x64xf32, #tpu.memory_space<vmem>>, %arg4: memref<64x192xbf16, #tpu.memory_space<vmem>>, %arg5: memref<32x192xbf16, #tpu.memory_space<vmem>>) attributes {dimension_semantics = [#tpu.dimension_semantics<parallel>, #tpu.dimension_semantics<parallel>], iteration_bounds = array<i64: 1, 1>, scalar_prefetch = 0 : i64, scratch_operands = 0 : i64, tpu.core_type = #tpu.core_type<tc>, window_params = [{transform_indices = @transform_0, window_bounds = array<i64: 32, 64>}, {pipeline_mode = #tpu.pipeline_mode<synchronous>, transform_indices = @transform_1, window_bounds = array<i64: 1, 64>}, {transform_indices = @transform_2, window_bounds = array<i64: 64, 192>}, {transform_indices = @transform_3, window_bounds = array<i64: 32, 192>}]} {
    %c0 = arith.constant 0 : index
    %c0_0 = arith.constant 0 : index
    %0 = vector.load %arg2[%c0, %c0_0] : memref<32x64xf32, #tpu.memory_space<vmem>>, vector<32x64xf32>
    %1 = arith.mulf %0, %0 : vector<32x64xf32>
    %cst = arith.constant dense<0.000000e+00> : vector<32xf32>
    %2 = vector.multi_reduction <add>, %1, %cst [1] : vector<32x64xf32> to vector<32xf32>
    %3 = vector.shape_cast %2 : vector<32xf32> to vector<32x1xf32>
    %cst_1 = arith.constant 6.400000e+01 : f32
    %4 = vector.broadcast %cst_1 : f32 to vector<32x1xf32>
    %5 = arith.divf %3, %4 : vector<32x1xf32>
    %cst_2 = arith.constant 9.99999974E-6 : f32
    %6 = vector.broadcast %cst_2 : f32 to vector<32x1xf32>
    %7 = arith.addf %5, %6 : vector<32x1xf32>
    %8 = math.rsqrt %7 : vector<32x1xf32>
    %9 = vector.broadcast %8 : vector<32x1xf32> to vector<32x64xf32>
    %10 = arith.mulf %0, %9 : vector<32x64xf32>
    %c0_3 = arith.constant 0 : index
    %c0_4 = arith.constant 0 : index
    %11 = vector.load %arg3[%c0_3, %c0_4] : memref<1x64xf32, #tpu.memory_space<vmem>>, vector<1x64xf32>
    %12 = vector.broadcast %11 : vector<1x64xf32> to vector<32x64xf32>
    %13 = arith.mulf %10, %12 : vector<32x64xf32>
    %14 = arith.truncf %13 : vector<32x64xf32> to vector<32x64xbf16>
    %c0_5 = arith.constant 0 : index
    %c0_6 = arith.constant 0 : index
    %15 = vector.load %arg4[%c0_5, %c0_6] : memref<64x192xbf16, #tpu.memory_space<vmem>>, vector<64x192xbf16>
    %cst_7 = arith.constant dense<0.000000e+00> : vector<32x192xf32>
    %16 = tpu.matmul %14, %15, %cst_7 {dimension_numbers = #tpu.dot_dimension_numbers<[1], [0], [0], [1], [0, 0, 1, 1], [], []>} : vector<32x64xbf16>, vector<64x192xbf16>, vector<32x192xf32> -> vector<32x192xf32>
    %17 = arith.truncf %16 : vector<32x192xf32> to vector<32x192xbf16>
    %c0_8 = arith.constant 0 : index
    %c0_9 = arith.constant 0 : index
    %18 = vector.load %arg5[%c0_8, %c0_9] : memref<32x192xbf16, #tpu.memory_space<vmem>>, vector<32x192xbf16>
    tpu.vector_store %arg5[%c0_8, %c0_9], %17 {strides = array<i32>} : memref<32x192xbf16, #tpu.memory_space<vmem>>, vector<32x192xbf16>,
    return
  }
  func.func @transform_0(%arg0: i32, %arg1: i32) -> (i32, i32) {
    %c0_i32 = arith.constant 0 : i32
    %c0_i32_0 = arith.constant 0 : i32
    return %arg0, %c0_i32 : i32, i32
  }
  func.func @transform_1(%arg0: i32, %arg1: i32) -> (i32, i32) {
    %c0_i32 = arith.constant 0 : i32
    %c0_i32_0 = arith.constant 0 : i32
    %c0_i32_1 = arith.constant 0 : i32
    return %c0_i32, %c0_i32_0 : i32, i32
  }
  func.func @transform_2(%arg0: i32, %arg1: i32) -> (i32, i32) {
    %c0_i32 = arith.constant 0 : i32
    %c0_i32_0 = arith.constant 0 : i32
    return %c0_i32, %arg1 : i32, i32
  }
  func.func @transform_3(%arg0: i32, %arg1: i32) -> (i32, i32) {
    %c0_i32 = arith.constant 0 : i32
    return %arg0, %arg1 : i32, i32
  }
}

module attributes {stable_mosaic.version = 11 : i64} {
  func.func @_rope_kernel(%arg0: i32, %arg1: i32, %arg2: memref<16x16xf32, #tpu.memory_space<vmem>>, %arg3: memref<16x16xf32, #tpu.memory_space<vmem>>, %arg4: memref<16x16xbf16, #tpu.memory_space<vmem>>, %arg5: memref<1x16x16xbf16, #tpu.memory_space<vmem>>, %arg6: memref<1x16x16xbf16, #tpu.memory_space<vmem>>) attributes {dimension_semantics = [#tpu.dimension_semantics<parallel>, #tpu.dimension_semantics<parallel>], iteration_bounds = array<i64: 8, 1>, scalar_prefetch = 0 : i64, scratch_operands = 0 : i64, tpu.core_type = #tpu.core_type<tc>, window_params = [{transform_indices = @transform_0, window_bounds = array<i64: 16, 16>}, {transform_indices = @transform_1, window_bounds = array<i64: 16, 16>}, {pipeline_mode = #tpu.pipeline_mode<synchronous>, transform_indices = @transform_2, window_bounds = array<i64: 16, 16>}, {transform_indices = @transform_3, window_bounds = array<i64: 1, 16, 16>}, {transform_indices = @transform_4, window_bounds = array<i64: 1, 16, 16>}]} {
    %c0 = arith.constant 0 : index
    %c0_0 = arith.constant 0 : index
    %c0_1 = arith.constant 0 : index
    %0 = vector.load %arg5[%c0, %c0_0, %c0_1] : memref<1x16x16xbf16, #tpu.memory_space<vmem>>, vector<1x16x16xbf16>
    %1 = vector.shape_cast %0 : vector<1x16x16xbf16> to vector<16x16xbf16>
    %c0_2 = arith.constant 0 : index
    %c0_3 = arith.constant 0 : index
    %2 = vector.load %arg4[%c0_2, %c0_3] : memref<16x16xbf16, #tpu.memory_space<vmem>>, vector<16x16xbf16>
    %cst = arith.constant dense<0.000000e+00> : vector<16x16xf32>
    %3 = tpu.matmul %1, %2, %cst {dimension_numbers = #tpu.dot_dimension_numbers<[1], [0], [0], [1], [0, 0, 1, 1], [], []>} : vector<16x16xbf16>, vector<16x16xbf16>, vector<16x16xf32> -> vector<16x16xf32>
    %4 = arith.extf %1 : vector<16x16xbf16> to vector<16x16xf32>
    %c0_4 = arith.constant 0 : index
    %c0_5 = arith.constant 0 : index
    %5 = vector.load %arg2[%c0_4, %c0_5] : memref<16x16xf32, #tpu.memory_space<vmem>>, vector<16x16xf32>
    %6 = arith.mulf %4, %5 : vector<16x16xf32>
    %c0_6 = arith.constant 0 : index
    %c0_7 = arith.constant 0 : index
    %7 = vector.load %arg3[%c0_6, %c0_7] : memref<16x16xf32, #tpu.memory_space<vmem>>, vector<16x16xf32>
    %8 = arith.mulf %3, %7 : vector<16x16xf32>
    %9 = arith.addf %6, %8 : vector<16x16xf32>
    %cst_8 = arith.constant 1.000000e+00 : f32
    %10 = vector.broadcast %cst_8 : f32 to vector<16x16xf32>
    %11 = arith.mulf %9, %10 : vector<16x16xf32>
    %12 = arith.truncf %11 : vector<16x16xf32> to vector<16x16xbf16>
    %c0_9 = arith.constant 0 : index
    %c0_10 = arith.constant 0 : index
    %c0_11 = arith.constant 0 : index
    %13 = vector.load %arg6[%c0_9, %c0_10, %c0_11] : memref<1x16x16xbf16, #tpu.memory_space<vmem>>, vector<1x16x16xbf16>
    %14 = vector.shape_cast %13 : vector<1x16x16xbf16> to vector<16x16xbf16>
    %15 = vector.shape_cast %12 : vector<16x16xbf16> to vector<1x16x16xbf16>
    tpu.vector_store %arg6[%c0_9, %c0_10, %c0_11], %15 {strides = array<i32>} : memref<1x16x16xbf16, #tpu.memory_space<vmem>>, vector<1x16x16xbf16>,
    return
  }
  func.func @transform_0(%arg0: i32, %arg1: i32) -> (i32, i32) {
    %c0_i32 = arith.constant 0 : i32
    %c0_i32_0 = arith.constant 0 : i32
    return %arg1, %c0_i32 : i32, i32
  }
  func.func @transform_1(%arg0: i32, %arg1: i32) -> (i32, i32) {
    %c0_i32 = arith.constant 0 : i32
    %c0_i32_0 = arith.constant 0 : i32
    return %arg1, %c0_i32 : i32, i32
  }
  func.func @transform_2(%arg0: i32, %arg1: i32) -> (i32, i32) {
    %c0_i32 = arith.constant 0 : i32
    %c0_i32_0 = arith.constant 0 : i32
    %c0_i32_1 = arith.constant 0 : i32
    return %c0_i32, %c0_i32_0 : i32, i32
  }
  func.func @transform_3(%arg0: i32, %arg1: i32) -> (i32, i32, i32) {
    %c0_i32 = arith.constant 0 : i32
    %c0_i32_0 = arith.constant 0 : i32
    return %arg0, %arg1, %c0_i32 : i32, i32, i32
  }
  func.func @transform_4(%arg0: i32, %arg1: i32) -> (i32, i32, i32) {
    %c0_i32 = arith.constant 0 : i32
    %c0_i32_0 = arith.constant 0 : i32
    return %arg0, %arg1, %c0_i32 : i32, i32, i32
  }
}

module attributes {stable_mosaic.version = 11 : i64} {
  func.func @_rope_kernel(%arg0: i32, %arg1: i32, %arg2: memref<16x16xf32, #tpu.memory_space<vmem>>, %arg3: memref<16x16xf32, #tpu.memory_space<vmem>>, %arg4: memref<16x16xbf16, #tpu.memory_space<vmem>>, %arg5: memref<1x16x16xbf16, #tpu.memory_space<vmem>>, %arg6: memref<1x16x16xbf16, #tpu.memory_space<vmem>>) attributes {dimension_semantics = [#tpu.dimension_semantics<parallel>, #tpu.dimension_semantics<parallel>], iteration_bounds = array<i64: 8, 1>, scalar_prefetch = 0 : i64, scratch_operands = 0 : i64, tpu.core_type = #tpu.core_type<tc>, window_params = [{transform_indices = @transform_0, window_bounds = array<i64: 16, 16>}, {transform_indices = @transform_1, window_bounds = array<i64: 16, 16>}, {pipeline_mode = #tpu.pipeline_mode<synchronous>, transform_indices = @transform_2, window_bounds = array<i64: 16, 16>}, {transform_indices = @transform_3, window_bounds = array<i64: 1, 16, 16>}, {transform_indices = @transform_4, window_bounds = array<i64: 1, 16, 16>}]} {
    %c0 = arith.constant 0 : index
    %c0_0 = arith.constant 0 : index
    %c0_1 = arith.constant 0 : index
    %0 = vector.load %arg5[%c0, %c0_0, %c0_1] : memref<1x16x16xbf16, #tpu.memory_space<vmem>>, vector<1x16x16xbf16>
    %1 = vector.shape_cast %0 : vector<1x16x16xbf16> to vector<16x16xbf16>
    %c0_2 = arith.constant 0 : index
    %c0_3 = arith.constant 0 : index
    %2 = vector.load %arg4[%c0_2, %c0_3] : memref<16x16xbf16, #tpu.memory_space<vmem>>, vector<16x16xbf16>
    %cst = arith.constant dense<0.000000e+00> : vector<16x16xf32>
    %3 = tpu.matmul %1, %2, %cst {dimension_numbers = #tpu.dot_dimension_numbers<[1], [0], [0], [1], [0, 0, 1, 1], [], []>} : vector<16x16xbf16>, vector<16x16xbf16>, vector<16x16xf32> -> vector<16x16xf32>
    %4 = arith.extf %1 : vector<16x16xbf16> to vector<16x16xf32>
    %c0_4 = arith.constant 0 : index
    %c0_5 = arith.constant 0 : index
    %5 = vector.load %arg2[%c0_4, %c0_5] : memref<16x16xf32, #tpu.memory_space<vmem>>, vector<16x16xf32>
    %6 = arith.mulf %4, %5 : vector<16x16xf32>
    %c0_6 = arith.constant 0 : index
    %c0_7 = arith.constant 0 : index
    %7 = vector.load %arg3[%c0_6, %c0_7] : memref<16x16xf32, #tpu.memory_space<vmem>>, vector<16x16xf32>
    %8 = arith.mulf %3, %7 : vector<16x16xf32>
    %9 = arith.addf %6, %8 : vector<16x16xf32>
    %cst_8 = arith.constant 2.500000e-01 : f32
    %10 = vector.broadcast %cst_8 : f32 to vector<16x16xf32>
    %11 = arith.mulf %9, %10 : vector<16x16xf32>
    %12 = arith.truncf %11 : vector<16x16xf32> to vector<16x16xbf16>
    %c0_9 = arith.constant 0 : index
    %c0_10 = arith.constant 0 : index
    %c0_11 = arith.constant 0 : index
    %13 = vector.load %arg6[%c0_9, %c0_10, %c0_11] : memref<1x16x16xbf16, #tpu.memory_space<vmem>>, vector<1x16x16xbf16>
    %14 = vector.shape_cast %13 : vector<1x16x16xbf16> to vector<16x16xbf16>
    %15 = vector.shape_cast %12 : vector<16x16xbf16> to vector<1x16x16xbf16>
    tpu.vector_store %arg6[%c0_9, %c0_10, %c0_11], %15 {strides = array<i32>} : memref<1x16x16xbf16, #tpu.memory_space<vmem>>, vector<1x16x16xbf16>,
    return
  }
  func.func @transform_0(%arg0: i32, %arg1: i32) -> (i32, i32) {
    %c0_i32 = arith.constant 0 : i32
    %c0_i32_0 = arith.constant 0 : i32
    return %arg1, %c0_i32 : i32, i32
  }
  func.func @transform_1(%arg0: i32, %arg1: i32) -> (i32, i32) {
    %c0_i32 = arith.constant 0 : i32
    %c0_i32_0 = arith.constant 0 : i32
    return %arg1, %c0_i32 : i32, i32
  }
  func.func @transform_2(%arg0: i32, %arg1: i32) -> (i32, i32) {
    %c0_i32 = arith.constant 0 : i32
    %c0_i32_0 = arith.constant 0 : i32
    %c0_i32_1 = arith.constant 0 : i32
    return %c0_i32, %c0_i32_0 : i32, i32
  }
  func.func @transform_3(%arg0: i32, %arg1: i32) -> (i32, i32, i32) {
    %c0_i32 = arith.constant 0 : i32
    %c0_i32_0 = arith.constant 0 : i32
    return %arg0, %arg1, %c0_i32 : i32, i32, i32
  }
  func.func @transform_4(%arg0: i32, %arg1: i32) -> (i32, i32, i32) {
    %c0_i32 = arith.constant 0 : i32
    %c0_i32_0 = arith.constant 0 : i32
    return %arg0, %arg1, %c0_i32 : i32, i32, i32
  }
}

module attributes {stable_mosaic.version = 11 : i64} {
  func.func @_flash_attn_kernel(%arg0: i32, %arg1: i32, %arg2: i32, %arg3: memref<1x16x16xbf16, #tpu.memory_space<vmem>>, %arg4: memref<1x16x16xbf16, #tpu.memory_space<vmem>>, %arg5: memref<1x16x16xbf16, #tpu.memory_space<vmem>>, %arg6: memref<1x16x16xbf16, #tpu.memory_space<vmem>>, %arg7: memref<16x1xf32, #tpu.memory_space<vmem>>, %arg8: memref<16x1xf32, #tpu.memory_space<vmem>>, %arg9: memref<16x16xf32, #tpu.memory_space<vmem>>) attributes {dimension_semantics = [#tpu.dimension_semantics<parallel>, #tpu.dimension_semantics<parallel>, #tpu.dimension_semantics<arbitrary>], iteration_bounds = array<i64: 8, 1, 1>, scalar_prefetch = 0 : i64, scratch_operands = 3 : i64, tpu.core_type = #tpu.core_type<tc>, window_params = [{transform_indices = @transform_0, window_bounds = array<i64: 1, 16, 16>}, {transform_indices = @transform_1, window_bounds = array<i64: 1, 16, 16>}, {transform_indices = @transform_2, window_bounds = array<i64: 1, 16, 16>}, {transform_indices = @transform_3, window_bounds = array<i64: 1, 16, 16>}]} {
    %c0_i32 = arith.constant 0 : i32
    %0 = arith.cmpi eq, %arg2, %c0_i32 : i32
    %1 = arith.extui %0 : i1 to i32
    %c0_i32_0 = arith.constant 0 : i32
    %2 = arith.cmpi ne, %1, %c0_i32_0 : i32
    scf.if %2 {
      %cst = arith.constant 0xFF800000 : f32
      %12 = vector.broadcast %cst : f32 to vector<16x1xf32>
      %c0 = arith.constant 0 : index
      %c0_5 = arith.constant 0 : index
      %13 = vector.load %arg7[%c0, %c0_5] : memref<16x1xf32, #tpu.memory_space<vmem>>, vector<16x1xf32>
      tpu.vector_store %arg7[%c0, %c0_5], %12 {strides = array<i32>} : memref<16x1xf32, #tpu.memory_space<vmem>>, vector<16x1xf32>,
      %cst_6 = arith.constant 0.000000e+00 : f32
      %14 = vector.broadcast %cst_6 : f32 to vector<16x1xf32>
      %c0_7 = arith.constant 0 : index
      %c0_8 = arith.constant 0 : index
      %15 = vector.load %arg8[%c0_7, %c0_8] : memref<16x1xf32, #tpu.memory_space<vmem>>, vector<16x1xf32>
      tpu.vector_store %arg8[%c0_7, %c0_8], %14 {strides = array<i32>} : memref<16x1xf32, #tpu.memory_space<vmem>>, vector<16x1xf32>,
      %cst_9 = arith.constant 0.000000e+00 : f32
      %16 = vector.broadcast %cst_9 : f32 to vector<16x16xf32>
      %c0_10 = arith.constant 0 : index
      %c0_11 = arith.constant 0 : index
      %17 = vector.load %arg9[%c0_10, %c0_11] : memref<16x16xf32, #tpu.memory_space<vmem>>, vector<16x16xf32>
      tpu.vector_store %arg9[%c0_10, %c0_11], %16 {strides = array<i32>} : memref<16x16xf32, #tpu.memory_space<vmem>>, vector<16x16xf32>,
    } else {
    }
    %c16_i32 = arith.constant 16 : i32
    %3 = arith.muli %arg2, %c16_i32 : i32
    %c1_i32 = arith.constant 1 : i32
    %4 = arith.addi %arg1, %c1_i32 : i32
    %c16_i32_1 = arith.constant 16 : i32
    %5 = arith.muli %4, %c16_i32_1 : i32
    %6 = arith.cmpi slt, %3, %5 : i32
    %7 = arith.extui %6 : i1 to i32
    %c0_i32_2 = arith.constant 0 : i32
    %8 = arith.cmpi ne, %7, %c0_i32_2 : i32
    scf.if %8 {
      %c0 = arith.constant 0 : index
      %c0_5 = arith.constant 0 : index
      %c0_6 = arith.constant 0 : index
      %12 = vector.load %arg3[%c0, %c0_5, %c0_6] : memref<1x16x16xbf16, #tpu.memory_space<vmem>>, vector<1x16x16xbf16>
      %13 = vector.shape_cast %12 : vector<1x16x16xbf16> to vector<16x16xbf16>
      %c0_7 = arith.constant 0 : index
      %c0_8 = arith.constant 0 : index
      %c0_9 = arith.constant 0 : index
      %14 = vector.load %arg4[%c0_7, %c0_8, %c0_9] : memref<1x16x16xbf16, #tpu.memory_space<vmem>>, vector<1x16x16xbf16>
      %15 = vector.shape_cast %14 : vector<1x16x16xbf16> to vector<16x16xbf16>
      %cst = arith.constant dense<0.000000e+00> : vector<16x16xf32>
      %16 = tpu.matmul %13, %15, %cst {dimension_numbers = #tpu.dot_dimension_numbers<[1], [1], [0], [0], [0, 0, 1, 0], [], []>} : vector<16x16xbf16>, vector<16x16xbf16>, vector<16x16xf32> -> vector<16x16xf32>
      %c16_i32_10 = arith.constant 16 : i32
      %17 = arith.muli %arg1, %c16_i32_10 : i32
      %18 = tpu.iota {dimensions = array<i32: 0>} : vector<16x16xi32>
      %19 = vector.broadcast %17 : i32 to vector<16x16xi32>
      %20 = arith.addi %19, %18 : vector<16x16xi32>
      %c16_i32_11 = arith.constant 16 : i32
      %21 = arith.muli %arg2, %c16_i32_11 : i32
      %22 = tpu.iota {dimensions = array<i32: 1>} : vector<16x16xi32>
      %23 = vector.broadcast %21 : i32 to vector<16x16xi32>
      %24 = arith.addi %23, %22 : vector<16x16xi32>
      %25 = arith.cmpi sle, %24, %20 : vector<16x16xi32>
      %cst_12 = arith.constant -1.000000e+30 : f32
      %26 = vector.broadcast %cst_12 : f32 to vector<16x16xf32>
      %27 = arith.select %25, %16, %26 : vector<16x16xi1>, vector<16x16xf32>
      %cst_13 = arith.constant dense<0xFF800000> : vector<16xf32>
      %28 = vector.multi_reduction <maximumf>, %27, %cst_13 [1] : vector<16x16xf32> to vector<16xf32>
      %29 = vector.shape_cast %28 : vector<16xf32> to vector<16x1xf32>
      %c0_14 = arith.constant 0 : index
      %c0_15 = arith.constant 0 : index
      %30 = vector.load %arg7[%c0_14, %c0_15] : memref<16x1xf32, #tpu.memory_space<vmem>>, vector<16x1xf32>
      %31 = arith.maximumf %30, %29 : vector<16x1xf32>
      %c0_16 = arith.constant 0 : index
      %c0_17 = arith.constant 0 : index
      %32 = vector.load %arg7[%c0_16, %c0_17] : memref<16x1xf32, #tpu.memory_space<vmem>>, vector<16x1xf32>
      %33 = arith.subf %32, %31 : vector<16x1xf32>
      %34 = math.exp %33 : vector<16x1xf32>
      %35 = vector.broadcast %31 : vector<16x1xf32> to vector<16x16xf32>
      %36 = arith.subf %27, %35 : vector<16x16xf32>
      %37 = math.exp %36 : vector<16x16xf32>
      %c0_18 = arith.constant 0 : index
      %c0_19 = arith.constant 0 : index
      %38 = vector.load %arg8[%c0_18, %c0_19] : memref<16x1xf32, #tpu.memory_space<vmem>>, vector<16x1xf32>
      %39 = arith.mulf %34, %38 : vector<16x1xf32>
      %cst_20 = arith.constant dense<0.000000e+00> : vector<16xf32>
      %40 = vector.multi_reduction <add>, %37, %cst_20 [1] : vector<16x16xf32> to vector<16xf32>
      %41 = vector.shape_cast %40 : vector<16xf32> to vector<16x1xf32>
      %42 = arith.addf %39, %41 : vector<16x1xf32>
      %c0_21 = arith.constant 0 : index
      %c0_22 = arith.constant 0 : index
      %43 = vector.load %arg8[%c0_21, %c0_22] : memref<16x1xf32, #tpu.memory_space<vmem>>, vector<16x1xf32>
      tpu.vector_store %arg8[%c0_21, %c0_22], %42 {strides = array<i32>} : memref<16x1xf32, #tpu.memory_space<vmem>>, vector<16x1xf32>,
      %c0_23 = arith.constant 0 : index
      %c0_24 = arith.constant 0 : index
      %44 = vector.load %arg9[%c0_23, %c0_24] : memref<16x16xf32, #tpu.memory_space<vmem>>, vector<16x16xf32>
      %45 = vector.broadcast %34 : vector<16x1xf32> to vector<16x16xf32>
      %46 = arith.mulf %45, %44 : vector<16x16xf32>
      %47 = arith.truncf %37 : vector<16x16xf32> to vector<16x16xbf16>
      %c0_25 = arith.constant 0 : index
      %c0_26 = arith.constant 0 : index
      %c0_27 = arith.constant 0 : index
      %48 = vector.load %arg5[%c0_25, %c0_26, %c0_27] : memref<1x16x16xbf16, #tpu.memory_space<vmem>>, vector<1x16x16xbf16>
      %49 = vector.shape_cast %48 : vector<1x16x16xbf16> to vector<16x16xbf16>
      %cst_28 = arith.constant dense<0.000000e+00> : vector<16x16xf32>
      %50 = tpu.matmul %47, %49, %cst_28 {dimension_numbers = #tpu.dot_dimension_numbers<[1], [0], [0], [1], [0, 0, 1, 1], [], []>} : vector<16x16xbf16>, vector<16x16xbf16>, vector<16x16xf32> -> vector<16x16xf32>
      %51 = arith.addf %46, %50 : vector<16x16xf32>
      %c0_29 = arith.constant 0 : index
      %c0_30 = arith.constant 0 : index
      %52 = vector.load %arg9[%c0_29, %c0_30] : memref<16x16xf32, #tpu.memory_space<vmem>>, vector<16x16xf32>
      tpu.vector_store %arg9[%c0_29, %c0_30], %51 {strides = array<i32>} : memref<16x16xf32, #tpu.memory_space<vmem>>, vector<16x16xf32>,
      %c0_31 = arith.constant 0 : index
      %c0_32 = arith.constant 0 : index
      %53 = vector.load %arg7[%c0_31, %c0_32] : memref<16x1xf32, #tpu.memory_space<vmem>>, vector<16x1xf32>
      tpu.vector_store %arg7[%c0_31, %c0_32], %31 {strides = array<i32>} : memref<16x1xf32, #tpu.memory_space<vmem>>, vector<16x1xf32>,
    } else {
    }
    %c0_i32_3 = arith.constant 0 : i32
    %9 = arith.cmpi eq, %arg2, %c0_i32_3 : i32
    %10 = arith.extui %9 : i1 to i32
    %c0_i32_4 = arith.constant 0 : i32
    %11 = arith.cmpi ne, %10, %c0_i32_4 : i32
    scf.if %11 {
      %c0 = arith.constant 0 : index
      %c0_5 = arith.constant 0 : index
      %12 = vector.load %arg9[%c0, %c0_5] : memref<16x16xf32, #tpu.memory_space<vmem>>, vector<16x16xf32>
      %c0_6 = arith.constant 0 : index
      %c0_7 = arith.constant 0 : index
      %13 = vector.load %arg8[%c0_6, %c0_7] : memref<16x1xf32, #tpu.memory_space<vmem>>, vector<16x1xf32>
      %14 = tpu.reciprocal %13 {approx = true} : vector<16x1xf32> -> vector<16x1xf32>
      %15 = vector.broadcast %14 : vector<16x1xf32> to vector<16x16xf32>
      %16 = arith.mulf %12, %15 : vector<16x16xf32>
      %17 = arith.truncf %16 : vector<16x16xf32> to vector<16x16xbf16>
      %c0_8 = arith.constant 0 : index
      %c0_9 = arith.constant 0 : index
      %c0_10 = arith.constant 0 : index
      %18 = vector.load %arg6[%c0_8, %c0_9, %c0_10] : memref<1x16x16xbf16, #tpu.memory_space<vmem>>, vector<1x16x16xbf16>
      %19 = vector.shape_cast %18 : vector<1x16x16xbf16> to vector<16x16xbf16>
      %20 = vector.shape_cast %17 : vector<16x16xbf16> to vector<1x16x16xbf16>
      tpu.vector_store %arg6[%c0_8, %c0_9, %c0_10], %20 {strides = array<i32>} : memref<1x16x16xbf16, #tpu.memory_space<vmem>>, vector<1x16x16xbf16>,
    } else {
    }
    return
  }
  func.func @transform_0(%arg0: i32, %arg1: i32, %arg2: i32) -> (i32, i32, i32) {
    %c0_i32 = arith.constant 0 : i32
    %c0_i32_0 = arith.constant 0 : i32
    return %arg0, %arg1, %c0_i32 : i32, i32, i32
  }
  func.func @transform_1(%arg0: i32, %arg1: i32, %arg2: i32) -> (i32, i32, i32) {
    %c0_i32 = arith.constant 0 : i32
    %c0_i32_0 = arith.constant 0 : i32
    return %arg0, %arg2, %c0_i32 : i32, i32, i32
  }
  func.func @transform_2(%arg0: i32, %arg1: i32, %arg2: i32) -> (i32, i32, i32) {
    %c0_i32 = arith.constant 0 : i32
    %c0_i32_0 = arith.constant 0 : i32
    return %arg0, %arg2, %c0_i32 : i32, i32, i32
  }
  func.func @transform_3(%arg0: i32, %arg1: i32, %arg2: i32) -> (i32, i32, i32) {
    %c0_i32 = arith.constant 0 : i32
    %c0_i32_0 = arith.constant 0 : i32
    return %arg0, %arg1, %c0_i32 : i32, i32, i32
  }
}

module attributes {stable_mosaic.version = 11 : i64} {
  func.func @_rmsnorm_kernel(%arg0: i32, %arg1: memref<32x64xf32, #tpu.memory_space<vmem>>, %arg2: memref<1x64xf32, #tpu.memory_space<vmem>>, %arg3: memref<32x64xf32, #tpu.memory_space<vmem>>) attributes {dimension_semantics = [#tpu.dimension_semantics<parallel>], iteration_bounds = array<i64: 1>, scalar_prefetch = 0 : i64, scratch_operands = 0 : i64, tpu.core_type = #tpu.core_type<tc>, window_params = [{transform_indices = @transform_0, window_bounds = array<i64: 32, 64>}, {pipeline_mode = #tpu.pipeline_mode<synchronous>, transform_indices = @transform_1, window_bounds = array<i64: 1, 64>}, {transform_indices = @transform_2, window_bounds = array<i64: 32, 64>}]} {
    %c0 = arith.constant 0 : index
    %c0_0 = arith.constant 0 : index
    %0 = vector.load %arg1[%c0, %c0_0] : memref<32x64xf32, #tpu.memory_space<vmem>>, vector<32x64xf32>
    %1 = arith.mulf %0, %0 : vector<32x64xf32>
    %cst = arith.constant dense<0.000000e+00> : vector<32xf32>
    %2 = vector.multi_reduction <add>, %1, %cst [1] : vector<32x64xf32> to vector<32xf32>
    %3 = vector.shape_cast %2 : vector<32xf32> to vector<32x1xf32>
    %cst_1 = arith.constant 6.400000e+01 : f32
    %4 = vector.broadcast %cst_1 : f32 to vector<32x1xf32>
    %5 = arith.divf %3, %4 : vector<32x1xf32>
    %cst_2 = arith.constant 9.99999974E-6 : f32
    %6 = vector.broadcast %cst_2 : f32 to vector<32x1xf32>
    %7 = arith.addf %5, %6 : vector<32x1xf32>
    %8 = math.rsqrt %7 : vector<32x1xf32>
    %9 = vector.broadcast %8 : vector<32x1xf32> to vector<32x64xf32>
    %10 = arith.mulf %0, %9 : vector<32x64xf32>
    %c0_3 = arith.constant 0 : index
    %c0_4 = arith.constant 0 : index
    %11 = vector.load %arg2[%c0_3, %c0_4] : memref<1x64xf32, #tpu.memory_space<vmem>>, vector<1x64xf32>
    %12 = vector.broadcast %11 : vector<1x64xf32> to vector<32x64xf32>
    %13 = arith.mulf %10, %12 : vector<32x64xf32>
    %c0_5 = arith.constant 0 : index
    %c0_6 = arith.constant 0 : index
    %14 = vector.load %arg3[%c0_5, %c0_6] : memref<32x64xf32, #tpu.memory_space<vmem>>, vector<32x64xf32>
    tpu.vector_store %arg3[%c0_5, %c0_6], %13 {strides = array<i32>} : memref<32x64xf32, #tpu.memory_space<vmem>>, vector<32x64xf32>,
    return
  }
  func.func @transform_0(%arg0: i32) -> (i32, i32) {
    %c0_i32 = arith.constant 0 : i32
    %c0_i32_0 = arith.constant 0 : i32
    return %arg0, %c0_i32 : i32, i32
  }
  func.func @transform_1(%arg0: i32) -> (i32, i32) {
    %c0_i32 = arith.constant 0 : i32
    %c0_i32_0 = arith.constant 0 : i32
    %c0_i32_1 = arith.constant 0 : i32
    return %c0_i32, %c0_i32_0 : i32, i32
  }
  func.func @transform_2(%arg0: i32) -> (i32, i32) {
    %c0_i32 = arith.constant 0 : i32
    %c0_i32_0 = arith.constant 0 : i32
    return %arg0, %c0_i32 : i32, i32
  }
}

module attributes {stable_mosaic.version = 11 : i64} {
  func.func @_linear_kernel(%arg0: i32, %arg1: i32, %arg2: i32, %arg3: memref<32x64xbf16, #tpu.memory_space<vmem>>, %arg4: memref<64x64xbf16, #tpu.memory_space<vmem>>, %arg5: memref<1x64xf32, #tpu.memory_space<vmem>>, %arg6: memref<32x64xf32, #tpu.memory_space<vmem>>, %arg7: memref<32x64xf32, #tpu.memory_space<vmem>>) attributes {dimension_semantics = [#tpu.dimension_semantics<parallel>, #tpu.dimension_semantics<parallel>, #tpu.dimension_semantics<arbitrary>], iteration_bounds = array<i64: 1, 1, 1>, scalar_prefetch = 0 : i64, scratch_operands = 1 : i64, tpu.core_type = #tpu.core_type<tc>, window_params = [{transform_indices = @transform_0, window_bounds = array<i64: 32, 64>}, {transform_indices = @transform_1, window_bounds = array<i64: 64, 64>}, {transform_indices = @transform_2, window_bounds = array<i64: 1, 64>}, {transform_indices = @transform_3, window_bounds = array<i64: 32, 64>}]} {
    %c0_i32 = arith.constant 0 : i32
    %0 = arith.cmpi eq, %arg2, %c0_i32 : i32
    %1 = arith.extui %0 : i1 to i32
    %c0_i32_0 = arith.constant 0 : i32
    %2 = arith.cmpi ne, %1, %c0_i32_0 : i32
    scf.if %2 {
      %cst_10 = arith.constant 0.000000e+00 : f32
      %12 = vector.broadcast %cst_10 : f32 to vector<32x64xf32>
      %c0_11 = arith.constant 0 : index
      %c0_12 = arith.constant 0 : index
      %13 = vector.load %arg7[%c0_11, %c0_12] : memref<32x64xf32, #tpu.memory_space<vmem>>, vector<32x64xf32>
      tpu.vector_store %arg7[%c0_11, %c0_12], %12 {strides = array<i32>} : memref<32x64xf32, #tpu.memory_space<vmem>>, vector<32x64xf32>,
    } else {
    }
    %c0 = arith.constant 0 : index
    %c0_1 = arith.constant 0 : index
    %3 = vector.load %arg7[%c0, %c0_1] : memref<32x64xf32, #tpu.memory_space<vmem>>, vector<32x64xf32>
    %c0_2 = arith.constant 0 : index
    %c0_3 = arith.constant 0 : index
    %4 = vector.load %arg3[%c0_2, %c0_3] : memref<32x64xbf16, #tpu.memory_space<vmem>>, vector<32x64xbf16>
    %c0_4 = arith.constant 0 : index
    %c0_5 = arith.constant 0 : index
    %5 = vector.load %arg4[%c0_4, %c0_5] : memref<64x64xbf16, #tpu.memory_space<vmem>>, vector<64x64xbf16>
    %cst = arith.constant dense<0.000000e+00> : vector<32x64xf32>
    %6 = tpu.matmul %4, %5, %cst {dimension_numbers = #tpu.dot_dimension_numbers<[1], [0], [0], [1], [0, 0, 1, 1], [], []>} : vector<32x64xbf16>, vector<64x64xbf16>, vector<32x64xf32> -> vector<32x64xf32>
    %7 = arith.addf %3, %6 : vector<32x64xf32>
    %c0_6 = arith.constant 0 : index
    %c0_7 = arith.constant 0 : index
    %8 = vector.load %arg7[%c0_6, %c0_7] : memref<32x64xf32, #tpu.memory_space<vmem>>, vector<32x64xf32>
    tpu.vector_store %arg7[%c0_6, %c0_7], %7 {strides = array<i32>} : memref<32x64xf32, #tpu.memory_space<vmem>>, vector<32x64xf32>,
    %c0_i32_8 = arith.constant 0 : i32
    %9 = arith.cmpi eq, %arg2, %c0_i32_8 : i32
    %10 = arith.extui %9 : i1 to i32
    %c0_i32_9 = arith.constant 0 : i32
    %11 = arith.cmpi ne, %10, %c0_i32_9 : i32
    scf.if %11 {
      %c0_10 = arith.constant 0 : index
      %c0_11 = arith.constant 0 : index
      %12 = vector.load %arg7[%c0_10, %c0_11] : memref<32x64xf32, #tpu.memory_space<vmem>>, vector<32x64xf32>
      %c0_12 = arith.constant 0 : index
      %c0_13 = arith.constant 0 : index
      %13 = vector.load %arg5[%c0_12, %c0_13] : memref<1x64xf32, #tpu.memory_space<vmem>>, vector<1x64xf32>
      %14 = vector.broadcast %13 : vector<1x64xf32> to vector<32x64xf32>
      %15 = arith.addf %12, %14 : vector<32x64xf32>
      %c0_14 = arith.constant 0 : index
      %c0_15 = arith.constant 0 : index
      %16 = vector.load %arg6[%c0_14, %c0_15] : memref<32x64xf32, #tpu.memory_space<vmem>>, vector<32x64xf32>
      tpu.vector_store %arg6[%c0_14, %c0_15], %15 {strides = array<i32>} : memref<32x64xf32, #tpu.memory_space<vmem>>, vector<32x64xf32>,
    } else {
    }
    return
  }
  func.func @transform_0(%arg0: i32, %arg1: i32, %arg2: i32) -> (i32, i32) {
    %c0_i32 = arith.constant 0 : i32
    return %arg0, %arg2 : i32, i32
  }
  func.func @transform_1(%arg0: i32, %arg1: i32, %arg2: i32) -> (i32, i32) {
    %c0_i32 = arith.constant 0 : i32
    return %arg2, %arg1 : i32, i32
  }
  func.func @transform_2(%arg0: i32, %arg1: i32, %arg2: i32) -> (i32, i32) {
    %c0_i32 = arith.constant 0 : i32
    %c0_i32_0 = arith.constant 0 : i32
    return %c0_i32, %arg1 : i32, i32
  }
  func.func @transform_3(%arg0: i32, %arg1: i32, %arg2: i32) -> (i32, i32) {
    %c0_i32 = arith.constant 0 : i32
    return %arg0, %arg1 : i32, i32
  }
}

module attributes {stable_mosaic.version = 11 : i64} {
  func.func @_swiglu_kernel(%arg0: i32, %arg1: i32, %arg2: memref<32x64xf32, #tpu.memory_space<vmem>>, %arg3: memref<1x64xf32, #tpu.memory_space<vmem>>, %arg4: memref<64x128xbf16, #tpu.memory_space<vmem>>, %arg5: memref<64x128xbf16, #tpu.memory_space<vmem>>, %arg6: memref<128x64xbf16, #tpu.memory_space<vmem>>, %arg7: memref<32x64xf32, #tpu.memory_space<vmem>>, %arg8: memref<32x64xf32, #tpu.memory_space<vmem>>) attributes {dimension_semantics = [#tpu.dimension_semantics<parallel>, #tpu.dimension_semantics<arbitrary>], iteration_bounds = array<i64: 1, 1>, scalar_prefetch = 0 : i64, scratch_operands = 1 : i64, tpu.core_type = #tpu.core_type<tc>, window_params = [{transform_indices = @transform_0, window_bounds = array<i64: 32, 64>}, {pipeline_mode = #tpu.pipeline_mode<synchronous>, transform_indices = @transform_1, window_bounds = array<i64: 1, 64>}, {transform_indices = @transform_2, window_bounds = array<i64: 64, 128>}, {transform_indices = @transform_3, window_bounds = array<i64: 64, 128>}, {transform_indices = @transform_4, window_bounds = array<i64: 128, 64>}, {transform_indices = @transform_5, window_bounds = array<i64: 32, 64>}]} {
    %c0_i32 = arith.constant 0 : i32
    %0 = arith.cmpi eq, %arg1, %c0_i32 : i32
    %1 = arith.extui %0 : i1 to i32
    %c0_i32_0 = arith.constant 0 : i32
    %2 = arith.cmpi ne, %1, %c0_i32_0 : i32
    scf.if %2 {
      %cst_24 = arith.constant 0.000000e+00 : f32
      %40 = vector.broadcast %cst_24 : f32 to vector<32x64xf32>
      %c0_25 = arith.constant 0 : index
      %c0_26 = arith.constant 0 : index
      %41 = vector.load %arg8[%c0_25, %c0_26] : memref<32x64xf32, #tpu.memory_space<vmem>>, vector<32x64xf32>
      tpu.vector_store %arg8[%c0_25, %c0_26], %40 {strides = array<i32>} : memref<32x64xf32, #tpu.memory_space<vmem>>, vector<32x64xf32>,
    } else {
    }
    %c0 = arith.constant 0 : index
    %c0_1 = arith.constant 0 : index
    %3 = vector.load %arg2[%c0, %c0_1] : memref<32x64xf32, #tpu.memory_space<vmem>>, vector<32x64xf32>
    %4 = arith.mulf %3, %3 : vector<32x64xf32>
    %cst = arith.constant dense<0.000000e+00> : vector<32xf32>
    %5 = vector.multi_reduction <add>, %4, %cst [1] : vector<32x64xf32> to vector<32xf32>
    %6 = vector.shape_cast %5 : vector<32xf32> to vector<32x1xf32>
    %cst_2 = arith.constant 6.400000e+01 : f32
    %7 = vector.broadcast %cst_2 : f32 to vector<32x1xf32>
    %8 = arith.divf %6, %7 : vector<32x1xf32>
    %cst_3 = arith.constant 9.99999974E-6 : f32
    %9 = vector.broadcast %cst_3 : f32 to vector<32x1xf32>
    %10 = arith.addf %8, %9 : vector<32x1xf32>
    %11 = math.rsqrt %10 : vector<32x1xf32>
    %12 = vector.broadcast %11 : vector<32x1xf32> to vector<32x64xf32>
    %13 = arith.mulf %3, %12 : vector<32x64xf32>
    %c0_4 = arith.constant 0 : index
    %c0_5 = arith.constant 0 : index
    %14 = vector.load %arg3[%c0_4, %c0_5] : memref<1x64xf32, #tpu.memory_space<vmem>>, vector<1x64xf32>
    %15 = vector.broadcast %14 : vector<1x64xf32> to vector<32x64xf32>
    %16 = arith.mulf %13, %15 : vector<32x64xf32>
    %17 = arith.truncf %16 : vector<32x64xf32> to vector<32x64xbf16>
    %c0_6 = arith.constant 0 : index
    %c0_7 = arith.constant 0 : index
    %18 = vector.load %arg4[%c0_6, %c0_7] : memref<64x128xbf16, #tpu.memory_space<vmem>>, vector<64x128xbf16>
    %cst_8 = arith.constant dense<0.000000e+00> : vector<32x128xf32>
    %19 = tpu.matmul %17, %18, %cst_8 {dimension_numbers = #tpu.dot_dimension_numbers<[1], [0], [0], [1], [0, 0, 1, 1], [], []>} : vector<32x64xbf16>, vector<64x128xbf16>, vector<32x128xf32> -> vector<32x128xf32>
    %c0_9 = arith.constant 0 : index
    %c0_10 = arith.constant 0 : index
    %20 = vector.load %arg5[%c0_9, %c0_10] : memref<64x128xbf16, #tpu.memory_space<vmem>>, vector<64x128xbf16>
    %cst_11 = arith.constant dense<0.000000e+00> : vector<32x128xf32>
    %21 = tpu.matmul %17, %20, %cst_11 {dimension_numbers = #tpu.dot_dimension_numbers<[1], [0], [0], [1], [0, 0, 1, 1], [], []>} : vector<32x64xbf16>, vector<64x128xbf16>, vector<32x128xf32> -> vector<32x128xf32>
    %cst_12 = arith.constant 0.000000e+00 : f32
    %22 = vector.broadcast %cst_12 : f32 to vector<32x128xf32>
    %23 = arith.subf %22, %19 : vector<32x128xf32>
    %24 = math.exp %23 : vector<32x128xf32>
    %cst_13 = arith.constant 1.000000e+00 : f32
    %25 = vector.broadcast %cst_13 : f32 to vector<32x128xf32>
    %26 = arith.addf %25, %24 : vector<32x128xf32>
    %cst_14 = arith.constant 1.000000e+00 : f32
    %27 = vector.broadcast %cst_14 : f32 to vector<32x128xf32>
    %28 = arith.divf %27, %26 : vector<32x128xf32>
    %29 = arith.mulf %19, %28 : vector<32x128xf32>
    %30 = arith.mulf %29, %21 : vector<32x128xf32>
    %31 = arith.truncf %30 : vector<32x128xf32> to vector<32x128xbf16>
    %c0_15 = arith.constant 0 : index
    %c0_16 = arith.constant 0 : index
    %32 = vector.load %arg8[%c0_15, %c0_16] : memref<32x64xf32, #tpu.memory_space<vmem>>, vector<32x64xf32>
    %c0_17 = arith.constant 0 : index
    %c0_18 = arith.constant 0 : index
    %33 = vector.load %arg6[%c0_17, %c0_18] : memref<128x64xbf16, #tpu.memory_space<vmem>>, vector<128x64xbf16>
    %cst_19 = arith.constant dense<0.000000e+00> : vector<32x64xf32>
    %34 = tpu.matmul %31, %33, %cst_19 {dimension_numbers = #tpu.dot_dimension_numbers<[1], [0], [0], [1], [0, 0, 1, 1], [], []>} : vector<32x128xbf16>, vector<128x64xbf16>, vector<32x64xf32> -> vector<32x64xf32>
    %35 = arith.addf %32, %34 : vector<32x64xf32>
    %c0_20 = arith.constant 0 : index
    %c0_21 = arith.constant 0 : index
    %36 = vector.load %arg8[%c0_20, %c0_21] : memref<32x64xf32, #tpu.memory_space<vmem>>, vector<32x64xf32>
    tpu.vector_store %arg8[%c0_20, %c0_21], %35 {strides = array<i32>} : memref<32x64xf32, #tpu.memory_space<vmem>>, vector<32x64xf32>,
    %c0_i32_22 = arith.constant 0 : i32
    %37 = arith.cmpi eq, %arg1, %c0_i32_22 : i32
    %38 = arith.extui %37 : i1 to i32
    %c0_i32_23 = arith.constant 0 : i32
    %39 = arith.cmpi ne, %38, %c0_i32_23 : i32
    scf.if %39 {
      %c0_24 = arith.constant 0 : index
      %c0_25 = arith.constant 0 : index
      %40 = vector.load %arg8[%c0_24, %c0_25] : memref<32x64xf32, #tpu.memory_space<vmem>>, vector<32x64xf32>
      %c0_26 = arith.constant 0 : index
      %c0_27 = arith.constant 0 : index
      %41 = vector.load %arg7[%c0_26, %c0_27] : memref<32x64xf32, #tpu.memory_space<vmem>>, vector<32x64xf32>
      tpu.vector_store %arg7[%c0_26, %c0_27], %40 {strides = array<i32>} : memref<32x64xf32, #tpu.memory_space<vmem>>, vector<32x64xf32>,
    } else {
    }
    return
  }
  func.func @transform_0(%arg0: i32, %arg1: i32) -> (i32, i32) {
    %c0_i32 = arith.constant 0 : i32
    %c0_i32_0 = arith.constant 0 : i32
    return %arg0, %c0_i32 : i32, i32
  }
  func.func @transform_1(%arg0: i32, %arg1: i32) -> (i32, i32) {
    %c0_i32 = arith.constant 0 : i32
    %c0_i32_0 = arith.constant 0 : i32
    %c0_i32_1 = arith.constant 0 : i32
    return %c0_i32, %c0_i32_0 : i32, i32
  }
  func.func @transform_2(%arg0: i32, %arg1: i32) -> (i32, i32) {
    %c0_i32 = arith.constant 0 : i32
    %c0_i32_0 = arith.constant 0 : i32
    return %c0_i32, %arg1 : i32, i32
  }
  func.func @transform_3(%arg0: i32, %arg1: i32) -> (i32, i32) {
    %c0_i32 = arith.constant 0 : i32
    %c0_i32_0 = arith.constant 0 : i32
    return %c0_i32, %arg1 : i32, i32
  }
  func.func @transform_4(%arg0: i32, %arg1: i32) -> (i32, i32) {
    %c0_i32 = arith.constant 0 : i32
    %c0_i32_0 = arith.constant 0 : i32
    return %arg1, %c0_i32 : i32, i32
  }
  func.func @transform_5(%arg0: i32, %arg1: i32) -> (i32, i32) {
    %c0_i32 = arith.constant 0 : i32
    %c0_i32_0 = arith.constant 0 : i32
    return %arg0, %c0_i32 : i32, i32
  }
}

module attributes {stable_mosaic.version = 11 : i64} {
  func.func @_head_kernel(%arg0: i32, %arg1: memref<2x64xf32, #tpu.memory_space<vmem>>, %arg2: memref<64x32xbf16, #tpu.memory_space<vmem>>, %arg3: memref<1x32xf32, #tpu.memory_space<vmem>>, %arg4: memref<32x1xbf16, #tpu.memory_space<vmem>>, %arg5: memref<1x1xf32, #tpu.memory_space<vmem>>, %arg6: memref<2x1xf32, #tpu.memory_space<vmem>>) attributes {dimension_semantics = [#tpu.dimension_semantics<arbitrary>], iteration_bounds = array<i64: 1>, scalar_prefetch = 0 : i64, scratch_operands = 0 : i64, tpu.core_type = #tpu.core_type<tc>, window_params = [{pipeline_mode = #tpu.pipeline_mode<synchronous>, transform_indices = @transform_0, window_bounds = array<i64: 2, 64>}, {pipeline_mode = #tpu.pipeline_mode<synchronous>, transform_indices = @transform_1, window_bounds = array<i64: 64, 32>}, {pipeline_mode = #tpu.pipeline_mode<synchronous>, transform_indices = @transform_2, window_bounds = array<i64: 1, 32>}, {pipeline_mode = #tpu.pipeline_mode<synchronous>, transform_indices = @transform_3, window_bounds = array<i64: 32, 1>}, {pipeline_mode = #tpu.pipeline_mode<synchronous>, transform_indices = @transform_4, window_bounds = array<i64: 1, 1>}, {pipeline_mode = #tpu.pipeline_mode<synchronous>, transform_indices = @transform_5, window_bounds = array<i64: 2, 1>}]} {
    %c0 = arith.constant 0 : index
    %c0_0 = arith.constant 0 : index
    %0 = vector.load %arg1[%c0, %c0_0] : memref<2x64xf32, #tpu.memory_space<vmem>>, vector<2x64xf32>
    %1 = arith.truncf %0 : vector<2x64xf32> to vector<2x64xbf16>
    %c0_1 = arith.constant 0 : index
    %c0_2 = arith.constant 0 : index
    %2 = vector.load %arg2[%c0_1, %c0_2] : memref<64x32xbf16, #tpu.memory_space<vmem>>, vector<64x32xbf16>
    %cst = arith.constant dense<0.000000e+00> : vector<2x32xf32>
    %3 = tpu.matmul %1, %2, %cst {dimension_numbers = #tpu.dot_dimension_numbers<[1], [0], [0], [1], [0, 0, 1, 1], [], []>} : vector<2x64xbf16>, vector<64x32xbf16>, vector<2x32xf32> -> vector<2x32xf32>
    %c0_3 = arith.constant 0 : index
    %c0_4 = arith.constant 0 : index
    %4 = vector.load %arg3[%c0_3, %c0_4] : memref<1x32xf32, #tpu.memory_space<vmem>>, vector<1x32xf32>
    %5 = vector.broadcast %4 : vector<1x32xf32> to vector<2x32xf32>
    %6 = arith.addf %3, %5 : vector<2x32xf32>
    %7 = arith.truncf %6 : vector<2x32xf32> to vector<2x32xbf16>
    %c0_5 = arith.constant 0 : index
    %c0_6 = arith.constant 0 : index
    %8 = vector.load %arg4[%c0_5, %c0_6] : memref<32x1xbf16, #tpu.memory_space<vmem>>, vector<32x1xbf16>
    %cst_7 = arith.constant dense<0.000000e+00> : vector<2x1xf32>
    %9 = tpu.matmul %7, %8, %cst_7 {dimension_numbers = #tpu.dot_dimension_numbers<[1], [0], [0], [1], [0, 0, 1, 1], [], []>} : vector<2x32xbf16>, vector<32x1xbf16>, vector<2x1xf32> -> vector<2x1xf32>
    %c0_8 = arith.constant 0 : index
    %c0_9 = arith.constant 0 : index
    %10 = vector.load %arg5[%c0_8, %c0_9] : memref<1x1xf32, #tpu.memory_space<vmem>>, vector<1x1xf32>
    %11 = vector.broadcast %10 : vector<1x1xf32> to vector<2x1xf32>
    %12 = arith.addf %9, %11 : vector<2x1xf32>
    %c0_10 = arith.constant 0 : index
    %c0_11 = arith.constant 0 : index
    %13 = vector.load %arg6[%c0_10, %c0_11] : memref<2x1xf32, #tpu.memory_space<vmem>>, vector<2x1xf32>
    tpu.vector_store %arg6[%c0_10, %c0_11], %12 {strides = array<i32>} : memref<2x1xf32, #tpu.memory_space<vmem>>, vector<2x1xf32>,
    return
  }
  func.func @transform_0(%arg0: i32) -> (i32, i32) {
    %c0_i32 = arith.constant 0 : i32
    %c0_i32_0 = arith.constant 0 : i32
    %c0_i32_1 = arith.constant 0 : i32
    return %c0_i32, %c0_i32_0 : i32, i32
  }
  func.func @transform_1(%arg0: i32) -> (i32, i32) {
    %c0_i32 = arith.constant 0 : i32
    %c0_i32_0 = arith.constant 0 : i32
    %c0_i32_1 = arith.constant 0 : i32
    return %c0_i32, %c0_i32_0 : i32, i32
  }
  func.func @transform_2(%arg0: i32) -> (i32, i32) {
    %c0_i32 = arith.constant 0 : i32
    %c0_i32_0 = arith.constant 0 : i32
    %c0_i32_1 = arith.constant 0 : i32
    return %c0_i32, %c0_i32_0 : i32, i32
  }
  func.func @transform_3(%arg0: i32) -> (i32, i32) {
    %c0_i32 = arith.constant 0 : i32
    %c0_i32_0 = arith.constant 0 : i32
    %c0_i32_1 = arith.constant 0 : i32
    return %c0_i32, %c0_i32_0 : i32, i32
  }
  func.func @transform_4(%arg0: i32) -> (i32, i32) {
    %c0_i32 = arith.constant 0 : i32
    %c0_i32_0 = arith.constant 0 : i32
    %c0_i32_1 = arith.constant 0 : i32
    return %c0_i32, %c0_i32_0 : i32, i32
  }
  func.func @transform_5(%arg0: i32) -> (i32, i32) {
    %c0_i32 = arith.constant 0 : i32
    %c0_i32_0 = arith.constant 0 : i32
    %c0_i32_1 = arith.constant 0 : i32
    return %c0_i32, %c0_i32_0 : i32, i32
  }
}

module attributes {stable_mosaic.version = 11 : i64} {
  func.func @_stats_kernel(%arg0: i32, %arg1: memref<2x8xf32, #tpu.memory_space<vmem>>, %arg2: memref<2x4xf32, #tpu.memory_space<vmem>>) attributes {dimension_semantics = [#tpu.dimension_semantics<arbitrary>], iteration_bounds = array<i64: 1>, scalar_prefetch = 0 : i64, scratch_operands = 0 : i64, tpu.core_type = #tpu.core_type<tc>, window_params = [{pipeline_mode = #tpu.pipeline_mode<synchronous>, transform_indices = @transform_0, window_bounds = array<i64: 2, 8>}, {pipeline_mode = #tpu.pipeline_mode<synchronous>, transform_indices = @transform_1, window_bounds = array<i64: 2, 4>}]} {
    %c0 = arith.constant 0 : index
    %c0_0 = arith.constant 0 : index
    %0 = vector.load %arg1[%c0, %c0_0] : memref<2x8xf32, #tpu.memory_space<vmem>>, vector<2x8xf32>
    %cst = arith.constant -1.100000e+01 : f32
    %1 = vector.broadcast %cst : f32 to vector<2x8xf32>
    %2 = arith.cmpf one, %0, %1 : vector<2x8xf32>
    %3 = tpu.iota {dimensions = array<i32: 1>} : vector<2x8xi32>
    %4 = arith.extui %2 : vector<2x8xi1> to vector<2x8xi32>
    %5 = arith.sitofp %4 : vector<2x8xi32> to vector<2x8xf32>
    %cst_1 = arith.constant dense<0.000000e+00> : vector<2xf32>
    %6 = vector.multi_reduction <add>, %5, %cst_1 [1] : vector<2x8xf32> to vector<2xf32>
    %7 = vector.shape_cast %6 : vector<2xf32> to vector<2x1xf32>
    %cst_2 = arith.constant 0x7F800000 : f32
    %8 = vector.broadcast %cst_2 : f32 to vector<2x8xf32>
    %9 = arith.select %2, %0, %8 : vector<2x8xi1>, vector<2x8xf32>
    %cst_3 = arith.constant dense<0x7F800000> : vector<2xf32>
    %10 = vector.multi_reduction <minimumf>, %9, %cst_3 [1] : vector<2x8xf32> to vector<2xf32>
    %11 = vector.shape_cast %10 : vector<2xf32> to vector<2x1xf32>
    %cst_4 = arith.constant 0xFF800000 : f32
    %12 = vector.broadcast %cst_4 : f32 to vector<2x8xf32>
    %13 = arith.select %2, %0, %12 : vector<2x8xi1>, vector<2x8xf32>
    %cst_5 = arith.constant dense<0xFF800000> : vector<2xf32>
    %14 = vector.multi_reduction <maximumf>, %13, %cst_5 [1] : vector<2x8xf32> to vector<2xf32>
    %15 = vector.shape_cast %14 : vector<2xf32> to vector<2x1xf32>
    %cst_6 = arith.constant 0.000000e+00 : f32
    %16 = vector.broadcast %cst_6 : f32 to vector<2x8xf32>
    %17 = vector.extract_strided_slice %0 {offsets = [0, 0], sizes = [2, 1], strides = [1, 1]} : vector<2x8xf32> to vector<2x1xf32>
    %18 = vector.extract_strided_slice %2 {offsets = [0, 0], sizes = [2, 1], strides = [1, 1]} : vector<2x8xi1> to vector<2x1xi1>
    %19 = vector.broadcast %17 : vector<2x1xf32> to vector<2x8xf32>
    %20 = arith.cmpf olt, %19, %0 : vector<2x8xf32>
    %21 = vector.broadcast %17 : vector<2x1xf32> to vector<2x8xf32>
    %22 = arith.cmpf oeq, %21, %0 : vector<2x8xf32>
    %c0_i32 = arith.constant 0 : i32
    %23 = vector.broadcast %c0_i32 : i32 to vector<2x8xi32>
    %24 = arith.cmpi sgt, %3, %23 : vector<2x8xi32>
    %25 = arith.andi %22, %24 : vector<2x8xi1>
    %26 = arith.ori %20, %25 : vector<2x8xi1>
    %27 = vector.broadcast %18 : vector<2x1xi1> to vector<2x8xi1>
    %28 = arith.andi %27, %26 : vector<2x8xi1>
    %cst_7 = arith.constant 1.000000e+00 : f32
    %cst_8 = arith.constant 0.000000e+00 : f32
    %29 = vector.broadcast %cst_7 : f32 to vector<2x8xf32>
    %30 = vector.broadcast %cst_8 : f32 to vector<2x8xf32>
    %31 = arith.select %28, %29, %30 : vector<2x8xi1>, vector<2x8xf32>
    %32 = arith.addf %16, %31 : vector<2x8xf32>
    %33 = vector.extract_strided_slice %0 {offsets = [0, 1], sizes = [2, 1], strides = [1, 1]} : vector<2x8xf32> to vector<2x1xf32>
    %34 = vector.extract_strided_slice %2 {offsets = [0, 1], sizes = [2, 1], strides = [1, 1]} : vector<2x8xi1> to vector<2x1xi1>
    %35 = vector.broadcast %33 : vector<2x1xf32> to vector<2x8xf32>
    %36 = arith.cmpf olt, %35, %0 : vector<2x8xf32>
    %37 = vector.broadcast %33 : vector<2x1xf32> to vector<2x8xf32>
    %38 = arith.cmpf oeq, %37, %0 : vector<2x8xf32>
    %c1_i32 = arith.constant 1 : i32
    %39 = vector.broadcast %c1_i32 : i32 to vector<2x8xi32>
    %40 = arith.cmpi sgt, %3, %39 : vector<2x8xi32>
    %41 = arith.andi %38, %40 : vector<2x8xi1>
    %42 = arith.ori %36, %41 : vector<2x8xi1>
    %43 = vector.broadcast %34 : vector<2x1xi1> to vector<2x8xi1>
    %44 = arith.andi %43, %42 : vector<2x8xi1>
    %cst_9 = arith.constant 1.000000e+00 : f32
    %cst_10 = arith.constant 0.000000e+00 : f32
    %45 = vector.broadcast %cst_9 : f32 to vector<2x8xf32>
    %46 = vector.broadcast %cst_10 : f32 to vector<2x8xf32>
    %47 = arith.select %44, %45, %46 : vector<2x8xi1>, vector<2x8xf32>
    %48 = arith.addf %32, %47 : vector<2x8xf32>
    %49 = vector.extract_strided_slice %0 {offsets = [0, 2], sizes = [2, 1], strides = [1, 1]} : vector<2x8xf32> to vector<2x1xf32>
    %50 = vector.extract_strided_slice %2 {offsets = [0, 2], sizes = [2, 1], strides = [1, 1]} : vector<2x8xi1> to vector<2x1xi1>
    %51 = vector.broadcast %49 : vector<2x1xf32> to vector<2x8xf32>
    %52 = arith.cmpf olt, %51, %0 : vector<2x8xf32>
    %53 = vector.broadcast %49 : vector<2x1xf32> to vector<2x8xf32>
    %54 = arith.cmpf oeq, %53, %0 : vector<2x8xf32>
    %c2_i32 = arith.constant 2 : i32
    %55 = vector.broadcast %c2_i32 : i32 to vector<2x8xi32>
    %56 = arith.cmpi sgt, %3, %55 : vector<2x8xi32>
    %57 = arith.andi %54, %56 : vector<2x8xi1>
    %58 = arith.ori %52, %57 : vector<2x8xi1>
    %59 = vector.broadcast %50 : vector<2x1xi1> to vector<2x8xi1>
    %60 = arith.andi %59, %58 : vector<2x8xi1>
    %cst_11 = arith.constant 1.000000e+00 : f32
    %cst_12 = arith.constant 0.000000e+00 : f32
    %61 = vector.broadcast %cst_11 : f32 to vector<2x8xf32>
    %62 = vector.broadcast %cst_12 : f32 to vector<2x8xf32>
    %63 = arith.select %60, %61, %62 : vector<2x8xi1>, vector<2x8xf32>
    %64 = arith.addf %48, %63 : vector<2x8xf32>
    %65 = vector.extract_strided_slice %0 {offsets = [0, 3], sizes = [2, 1], strides = [1, 1]} : vector<2x8xf32> to vector<2x1xf32>
    %66 = vector.extract_strided_slice %2 {offsets = [0, 3], sizes = [2, 1], strides = [1, 1]} : vector<2x8xi1> to vector<2x1xi1>
    %67 = vector.broadcast %65 : vector<2x1xf32> to vector<2x8xf32>
    %68 = arith.cmpf olt, %67, %0 : vector<2x8xf32>
    %69 = vector.broadcast %65 : vector<2x1xf32> to vector<2x8xf32>
    %70 = arith.cmpf oeq, %69, %0 : vector<2x8xf32>
    %c3_i32 = arith.constant 3 : i32
    %71 = vector.broadcast %c3_i32 : i32 to vector<2x8xi32>
    %72 = arith.cmpi sgt, %3, %71 : vector<2x8xi32>
    %73 = arith.andi %70, %72 : vector<2x8xi1>
    %74 = arith.ori %68, %73 : vector<2x8xi1>
    %75 = vector.broadcast %66 : vector<2x1xi1> to vector<2x8xi1>
    %76 = arith.andi %75, %74 : vector<2x8xi1>
    %cst_13 = arith.constant 1.000000e+00 : f32
    %cst_14 = arith.constant 0.000000e+00 : f32
    %77 = vector.broadcast %cst_13 : f32 to vector<2x8xf32>
    %78 = vector.broadcast %cst_14 : f32 to vector<2x8xf32>
    %79 = arith.select %76, %77, %78 : vector<2x8xi1>, vector<2x8xf32>
    %80 = arith.addf %64, %79 : vector<2x8xf32>
    %81 = vector.extract_strided_slice %0 {offsets = [0, 4], sizes = [2, 1], strides = [1, 1]} : vector<2x8xf32> to vector<2x1xf32>
    %82 = vector.extract_strided_slice %2 {offsets = [0, 4], sizes = [2, 1], strides = [1, 1]} : vector<2x8xi1> to vector<2x1xi1>
    %83 = vector.broadcast %81 : vector<2x1xf32> to vector<2x8xf32>
    %84 = arith.cmpf olt, %83, %0 : vector<2x8xf32>
    %85 = vector.broadcast %81 : vector<2x1xf32> to vector<2x8xf32>
    %86 = arith.cmpf oeq, %85, %0 : vector<2x8xf32>
    %c4_i32 = arith.constant 4 : i32
    %87 = vector.broadcast %c4_i32 : i32 to vector<2x8xi32>
    %88 = arith.cmpi sgt, %3, %87 : vector<2x8xi32>
    %89 = arith.andi %86, %88 : vector<2x8xi1>
    %90 = arith.ori %84, %89 : vector<2x8xi1>
    %91 = vector.broadcast %82 : vector<2x1xi1> to vector<2x8xi1>
    %92 = arith.andi %91, %90 : vector<2x8xi1>
    %cst_15 = arith.constant 1.000000e+00 : f32
    %cst_16 = arith.constant 0.000000e+00 : f32
    %93 = vector.broadcast %cst_15 : f32 to vector<2x8xf32>
    %94 = vector.broadcast %cst_16 : f32 to vector<2x8xf32>
    %95 = arith.select %92, %93, %94 : vector<2x8xi1>, vector<2x8xf32>
    %96 = arith.addf %80, %95 : vector<2x8xf32>
    %97 = vector.extract_strided_slice %0 {offsets = [0, 5], sizes = [2, 1], strides = [1, 1]} : vector<2x8xf32> to vector<2x1xf32>
    %98 = vector.extract_strided_slice %2 {offsets = [0, 5], sizes = [2, 1], strides = [1, 1]} : vector<2x8xi1> to vector<2x1xi1>
    %99 = vector.broadcast %97 : vector<2x1xf32> to vector<2x8xf32>
    %100 = arith.cmpf olt, %99, %0 : vector<2x8xf32>
    %101 = vector.broadcast %97 : vector<2x1xf32> to vector<2x8xf32>
    %102 = arith.cmpf oeq, %101, %0 : vector<2x8xf32>
    %c5_i32 = arith.constant 5 : i32
    %103 = vector.broadcast %c5_i32 : i32 to vector<2x8xi32>
    %104 = arith.cmpi sgt, %3, %103 : vector<2x8xi32>
    %105 = arith.andi %102, %104 : vector<2x8xi1>
    %106 = arith.ori %100, %105 : vector<2x8xi1>
    %107 = vector.broadcast %98 : vector<2x1xi1> to vector<2x8xi1>
    %108 = arith.andi %107, %106 : vector<2x8xi1>
    %cst_17 = arith.constant 1.000000e+00 : f32
    %cst_18 = arith.constant 0.000000e+00 : f32
    %109 = vector.broadcast %cst_17 : f32 to vector<2x8xf32>
    %110 = vector.broadcast %cst_18 : f32 to vector<2x8xf32>
    %111 = arith.select %108, %109, %110 : vector<2x8xi1>, vector<2x8xf32>
    %112 = arith.addf %96, %111 : vector<2x8xf32>
    %113 = vector.extract_strided_slice %0 {offsets = [0, 6], sizes = [2, 1], strides = [1, 1]} : vector<2x8xf32> to vector<2x1xf32>
    %114 = vector.extract_strided_slice %2 {offsets = [0, 6], sizes = [2, 1], strides = [1, 1]} : vector<2x8xi1> to vector<2x1xi1>
    %115 = vector.broadcast %113 : vector<2x1xf32> to vector<2x8xf32>
    %116 = arith.cmpf olt, %115, %0 : vector<2x8xf32>
    %117 = vector.broadcast %113 : vector<2x1xf32> to vector<2x8xf32>
    %118 = arith.cmpf oeq, %117, %0 : vector<2x8xf32>
    %c6_i32 = arith.constant 6 : i32
    %119 = vector.broadcast %c6_i32 : i32 to vector<2x8xi32>
    %120 = arith.cmpi sgt, %3, %119 : vector<2x8xi32>
    %121 = arith.andi %118, %120 : vector<2x8xi1>
    %122 = arith.ori %116, %121 : vector<2x8xi1>
    %123 = vector.broadcast %114 : vector<2x1xi1> to vector<2x8xi1>
    %124 = arith.andi %123, %122 : vector<2x8xi1>
    %cst_19 = arith.constant 1.000000e+00 : f32
    %cst_20 = arith.constant 0.000000e+00 : f32
    %125 = vector.broadcast %cst_19 : f32 to vector<2x8xf32>
    %126 = vector.broadcast %cst_20 : f32 to vector<2x8xf32>
    %127 = arith.select %124, %125, %126 : vector<2x8xi1>, vector<2x8xf32>
    %128 = arith.addf %112, %127 : vector<2x8xf32>
    %129 = vector.extract_strided_slice %0 {offsets = [0, 7], sizes = [2, 1], strides = [1, 1]} : vector<2x8xf32> to vector<2x1xf32>
    %130 = vector.extract_strided_slice %2 {offsets = [0, 7], sizes = [2, 1], strides = [1, 1]} : vector<2x8xi1> to vector<2x1xi1>
    %131 = vector.broadcast %129 : vector<2x1xf32> to vector<2x8xf32>
    %132 = arith.cmpf olt, %131, %0 : vector<2x8xf32>
    %133 = vector.broadcast %129 : vector<2x1xf32> to vector<2x8xf32>
    %134 = arith.cmpf oeq, %133, %0 : vector<2x8xf32>
    %c7_i32 = arith.constant 7 : i32
    %135 = vector.broadcast %c7_i32 : i32 to vector<2x8xi32>
    %136 = arith.cmpi sgt, %3, %135 : vector<2x8xi32>
    %137 = arith.andi %134, %136 : vector<2x8xi1>
    %138 = arith.ori %132, %137 : vector<2x8xi1>
    %139 = vector.broadcast %130 : vector<2x1xi1> to vector<2x8xi1>
    %140 = arith.andi %139, %138 : vector<2x8xi1>
    %cst_21 = arith.constant 1.000000e+00 : f32
    %cst_22 = arith.constant 0.000000e+00 : f32
    %141 = vector.broadcast %cst_21 : f32 to vector<2x8xf32>
    %142 = vector.broadcast %cst_22 : f32 to vector<2x8xf32>
    %143 = arith.select %140, %141, %142 : vector<2x8xi1>, vector<2x8xf32>
    %144 = arith.addf %128, %143 : vector<2x8xf32>
    %cst_23 = arith.constant 1.000000e+00 : f32
    %145 = vector.broadcast %cst_23 : f32 to vector<2x1xf32>
    %146 = arith.subf %7, %145 : vector<2x1xf32>
    %cst_24 = arith.constant 5.000000e-01 : f32
    %147 = vector.broadcast %cst_24 : f32 to vector<2x1xf32>
    %148 = arith.mulf %146, %147 : vector<2x1xf32>
    %149 = math.floor %148 : vector<2x1xf32>
    %150 = vector.broadcast %149 : vector<2x1xf32> to vector<2x8xf32>
    %151 = arith.cmpf oeq, %144, %150 : vector<2x8xf32>
    %152 = arith.andi %2, %151 : vector<2x8xi1>
    %cst_25 = arith.constant 0.000000e+00 : f32
    %153 = vector.broadcast %cst_25 : f32 to vector<2x8xf32>
    %154 = arith.select %152, %0, %153 : vector<2x8xi1>, vector<2x8xf32>
    %cst_26 = arith.constant dense<0.000000e+00> : vector<2xf32>
    %155 = vector.multi_reduction <add>, %154, %cst_26 [1] : vector<2x8xf32> to vector<2xf32>
    %156 = vector.shape_cast %155 : vector<2xf32> to vector<2x1xf32>
    %157 = arith.sitofp %3 : vector<2x8xi32> to vector<2x8xf32>
    %cst_27 = arith.constant 8.000000e+00 : f32
    %158 = vector.broadcast %cst_27 : f32 to vector<2x8xf32>
    %159 = arith.select %2, %157, %158 : vector<2x8xi1>, vector<2x8xf32>
    %cst_28 = arith.constant dense<0x7F800000> : vector<2xf32>
    %160 = vector.multi_reduction <minimumf>, %159, %cst_28 [1] : vector<2x8xf32> to vector<2xf32>
    %161 = vector.shape_cast %160 : vector<2xf32> to vector<2x1xf32>
    %cst_29 = arith.constant -1.000000e+00 : f32
    %162 = vector.broadcast %cst_29 : f32 to vector<2x8xf32>
    %163 = arith.select %2, %157, %162 : vector<2x8xi1>, vector<2x8xf32>
    %cst_30 = arith.constant dense<0xFF800000> : vector<2xf32>
    %164 = vector.multi_reduction <maximumf>, %163, %cst_30 [1] : vector<2x8xf32> to vector<2xf32>
    %165 = vector.shape_cast %164 : vector<2xf32> to vector<2x1xf32>
    %166 = vector.broadcast %161 : vector<2x1xf32> to vector<2x8xf32>
    %167 = arith.cmpf oeq, %157, %166 : vector<2x8xf32>
    %cst_31 = arith.constant 0.000000e+00 : f32
    %168 = vector.broadcast %cst_31 : f32 to vector<2x8xf32>
    %169 = arith.select %167, %0, %168 : vector<2x8xi1>, vector<2x8xf32>
    %cst_32 = arith.constant dense<0.000000e+00> : vector<2xf32>
    %170 = vector.multi_reduction <add>, %169, %cst_32 [1] : vector<2x8xf32> to vector<2xf32>
    %171 = vector.shape_cast %170 : vector<2xf32> to vector<2x1xf32>
    %172 = vector.broadcast %165 : vector<2x1xf32> to vector<2x8xf32>
    %173 = arith.cmpf oeq, %157, %172 : vector<2x8xf32>
    %cst_33 = arith.constant 0.000000e+00 : f32
    %174 = vector.broadcast %cst_33 : f32 to vector<2x8xf32>
    %175 = arith.select %173, %0, %174 : vector<2x8xi1>, vector<2x8xf32>
    %cst_34 = arith.constant dense<0.000000e+00> : vector<2xf32>
    %176 = vector.multi_reduction <add>, %175, %cst_34 [1] : vector<2x8xf32> to vector<2xf32>
    %177 = vector.shape_cast %176 : vector<2xf32> to vector<2x1xf32>
    %cst_35 = arith.constant 1.000000e+00 : f32
    %178 = vector.broadcast %cst_35 : f32 to vector<2x1xf32>
    %179 = arith.cmpf ogt, %7, %178 : vector<2x1xf32>
    %180 = arith.subf %177, %171 : vector<2x1xf32>
    %cst_36 = arith.constant 0.000000e+00 : f32
    %181 = vector.broadcast %cst_36 : f32 to vector<2x1xf32>
    %182 = arith.select %179, %180, %181 : vector<2x1xi1>, vector<2x1xf32>
    %cst_37 = arith.constant 0.000000e+00 : f32
    %183 = vector.broadcast %cst_37 : f32 to vector<2x1xf32>
    %184 = arith.cmpf ogt, %7, %183 : vector<2x1xf32>
    %cst_38 = arith.constant 0x7FC00000 : f32
    %185 = vector.broadcast %cst_38 : f32 to vector<2x1xf32>
    %186 = arith.select %184, %11, %185 : vector<2x1xi1>, vector<2x1xf32>
    %cst_39 = arith.constant 0.000000e+00 : f32
    %187 = vector.broadcast %cst_39 : f32 to vector<2x1xf32>
    %188 = arith.cmpf ogt, %7, %187 : vector<2x1xf32>
    %cst_40 = arith.constant 0x7FC00000 : f32
    %189 = vector.broadcast %cst_40 : f32 to vector<2x1xf32>
    %190 = arith.select %188, %15, %189 : vector<2x1xi1>, vector<2x1xf32>
    %cst_41 = arith.constant 0.000000e+00 : f32
    %191 = vector.broadcast %cst_41 : f32 to vector<2x1xf32>
    %192 = arith.cmpf ogt, %7, %191 : vector<2x1xf32>
    %cst_42 = arith.constant 0x7FC00000 : f32
    %193 = vector.broadcast %cst_42 : f32 to vector<2x1xf32>
    %194 = arith.select %192, %156, %193 : vector<2x1xi1>, vector<2x1xf32>
    %195 = tpu.iota {dimensions = array<i32: 1>} : vector<2x4xi32>
    %c0_i32_43 = arith.constant 0 : i32
    %196 = vector.broadcast %c0_i32_43 : i32 to vector<2x4xi32>
    %197 = arith.cmpi eq, %195, %196 : vector<2x4xi32>
    %c1_i32_44 = arith.constant 1 : i32
    %198 = vector.broadcast %c1_i32_44 : i32 to vector<2x4xi32>
    %199 = arith.cmpi eq, %195, %198 : vector<2x4xi32>
    %c2_i32_45 = arith.constant 2 : i32
    %200 = vector.broadcast %c2_i32_45 : i32 to vector<2x4xi32>
    %201 = arith.cmpi eq, %195, %200 : vector<2x4xi32>
    %202 = vector.shape_cast %194 : vector<2x1xf32> to vector<2x1xf32>
    %203 = vector.broadcast %202 : vector<2x1xf32> to vector<2x4xf32>
    %204 = vector.shape_cast %182 : vector<2x1xf32> to vector<2x1xf32>
    %205 = vector.broadcast %204 : vector<2x1xf32> to vector<2x4xf32>
    %206 = arith.select %201, %203, %205 : vector<2x4xi1>, vector<2x4xf32>
    %207 = vector.shape_cast %190 : vector<2x1xf32> to vector<2x1xf32>
    %208 = vector.broadcast %207 : vector<2x1xf32> to vector<2x4xf32>
    %209 = arith.select %199, %208, %206 : vector<2x4xi1>, vector<2x4xf32>
    %210 = vector.shape_cast %186 : vector<2x1xf32> to vector<2x1xf32>
    %211 = vector.broadcast %210 : vector<2x1xf32> to vector<2x4xf32>
    %212 = arith.select %197, %211, %209 : vector<2x4xi1>, vector<2x4xf32>
    %c0_46 = arith.constant 0 : index
    %c0_47 = arith.constant 0 : index
    %213 = vector.load %arg2[%c0_46, %c0_47] : memref<2x4xf32, #tpu.memory_space<vmem>>, vector<2x4xf32>
    tpu.vector_store %arg2[%c0_46, %c0_47], %212 {strides = array<i32>} : memref<2x4xf32, #tpu.memory_space<vmem>>, vector<2x4xf32>,
    return
  }
  func.func @transform_0(%arg0: i32) -> (i32, i32) {
    %c0_i32 = arith.constant 0 : i32
    %c0_i32_0 = arith.constant 0 : i32
    %c0_i32_1 = arith.constant 0 : i32
    return %c0_i32, %c0_i32_0 : i32, i32
  }
  func.func @transform_1(%arg0: i32) -> (i32, i32) {
    %c0_i32 = arith.constant 0 : i32
    %c0_i32_0 = arith.constant 0 : i32
    %c0_i32_1 = arith.constant 0 : i32
    return %c0_i32, %c0_i32_0 : i32, i32
  }
}

</mosaic_0001>

<llo_original>
// kernel: llm_decoder_forward.17
$region0: #{llm_decoder_forward.17}
  #allocation0 [shape = 'u32[]', space=smem, size = 0x4, offset = 0x4, fixed_abs, tag = 'smem constant byte address 0x4 - core index']
  #allocation1 [shape = 'u32[144,128]{1,0:T(1,128)}', space=vmem, size = 0x12000, scoped, tag = 'internal scratch']
  #allocation2 [shape = 'f32[8,64]{1,0:T(8,128)}', space=vmem, size = 0x1000, scoped, tag = 'scratch operand']
  %s0 = inlined_call_operand.vmem [shape: f32[8,32], index: 0, kind: input, shape index: {}]
  %s1 = inlined_call_operand.vmem [shape: bf16[32,64], index: 1, kind: input, shape index: {}]
  %s2 = inlined_call_operand.vmem [shape: f32[1,64], index: 2, kind: input, shape index: {}]
  %s3 = inlined_call_operand.vmem [shape: f32[8,64], index: 3, kind: output, shape index: {}]
  %s4 = sld [smem:[#allocation0]]
  $region30: #{llm_decoder_forward.17} parent=0
    _
  %s6 = ssub.s32 1, %s4
  %s7 = scalar_select 0, %s6, %s4
  // Predicated region
  $region2: #{llm_decoder_forward.17} parent=0 // pred_check
    _
  $region3: #{llm_decoder_forward.17} parent=0 // pred_check_branch
    %9 = sbr.rel (0) target = $region5
  $region4: #{llm_decoder_forward.17} parent=0 // pred_region
    _
  $region5: #{llm_decoder_forward.17} parent=0 // pred_fallthru
    _
  // Predicated region
  $region6: #{llm_decoder_forward.17} parent=0 // pred_check
    _
  $region7: #{llm_decoder_forward.17} parent=0 // pred_check_branch
    %11 = sbr.rel (0) target = $region9
  $region8: #{llm_decoder_forward.17} parent=0 // pred_region
    _
  $region9: #{llm_decoder_forward.17} parent=0 // pred_fallthru
    _
  // Predicated region
  $region10: #{llm_decoder_forward.17} parent=0 // pred_check
    _
  $region11: #{llm_decoder_forward.17} parent=0 // pred_check_branch
    %13 = sbr.rel (0) target = $region13
  $region12: #{llm_decoder_forward.17} parent=0 // pred_region
    _
  $region13: #{llm_decoder_forward.17} parent=0 // pred_fallthru
    _
  %p15 = scmp.eq.s32.totalorder 0, 0
  // Predicated region
  $region14: #{llm_decoder_forward.17} parent=0 // pred_check
    %p16 = pneg %p15
  $region15: #{llm_decoder_forward.17} parent=0 // pred_check_branch
    %18 = sbr.rel (%p16) target = $region17
  $region16: #{llm_decoder_forward.17} parent=0 // pred_region
    %vm19 = vcmask 523264
    %20 = vst.msk [vmem:[#allocation2] sm:$0xff] %vm19, 0.0
  $region17: #{llm_decoder_forward.17} parent=0 // pred_fallthru
    _
  %v21 = vld [vmem:[#allocation2] sm:$0xff]
  %v22 = vld [vmem:[%s0] sm:$0xff]
  %v23 = vpack.c.bf16 %v22, %v22
  %v24 = vld [vmem:[%s1] sm:$0xf]
  %v25 = vld [vmem:[%s1 + $0x4] sm:$0xf]
  %v26 = vld [vmem:[%s1 + $0x8] sm:$0xf]
  %v27 = vld [vmem:[%s1 + $0xc] sm:$0xf]
  %v32 = vunpack.c.l.b16 %v24
  %v33 = vunpack.c.l.b16 %v25
  %v34 = vunpack.c.l.b16 %v26
  %v35 = vunpack.c.l.b16 %v27
  %v36 = vpack.c.b16 %v33, %v32
  %v37 = vpack.c.b16 %v35, %v34
  %vm40 = vcmask 261120
  %v42 = vsel %vm40, %v23, 0
  %44 = vmatprep.subr.bf16.mxu0 0
  %45 = vmatpush1.bf16.msra.mxu0 %v36
  %46 = vmatprep.subr.bf16.mxu0 0
  %47 = vmatpush1.bf16.msra.mxu0 %v37
  %48 = vmatprep.subr.bf16.mxu0 0
  %49 = vmatpush1.bf16.msra.mxu0 0
  %50 = vmatprep.subr.bf16.mxu0 0
  %51 = vmatpush1.bf16.msra.mxu0 0
  %52 = vmatprep.subr.bf16.mxu0 0
  %53 = vmatpush1.bf16.msra.mxu0 0
  %54 = vmatprep.subr.bf16.mxu0 0
  %55 = vmatpush1.bf16.msra.mxu0 0
  %56 = vmatprep.subr.bf16.mxu0 0
  %57 = vmatpush1.bf16.msra.mxu0 0
  %58 = vmatprep.subr.bf16.mxu0 0
  %59 = vmatpush1.bf16.msra.mxu0 0
  %60 = vmatprep.subr.bf16.mxu0 0
  %61 = vmatpush1.bf16.msra.mxu0 0
  %62 = vmatprep.subr.bf16.mxu0 0
  %63 = vmatpush1.bf16.msra.mxu0 0
  %64 = vmatprep.subr.bf16.mxu0 0
  %65 = vmatpush1.bf16.msra.mxu0 0
  %66 = vmatprep.subr.bf16.mxu0 0
  %67 = vmatpush1.bf16.msra.mxu0 0
  %68 = vmatprep.subr.bf16.mxu0 0
  %69 = vmatpush1.bf16.msra.mxu0 0
  %70 = vmatprep.subr.bf16.mxu0 0
  %71 = vmatpush1.bf16.msra.mxu0 0
  %72 = vmatprep.subr.bf16.mxu0 0
  %73 = vmatpush1.bf16.msra.mxu0 0
  %74 = vmatprep.subr.bf16.mxu0 0
  %75 = vmatpush1.bf16.msra.mxu0 0
  %76 = vmatprep.mubr.bf16.mxu0 0
  %77 = vmatmul.mubr.bf16.gmra.mrb[0].mxu0 %v42
  %v78 = vpop.f32.mrb[0].mxu0
  %v79 = vadd.f32 0.0, %v78
  %v80 = vpop.f32.mrb[0].mxu0
  %v81 = vpop.f32.mrb[0].mxu0
  %v82 = vpop.f32.mrb[0].mxu0
  %83 = vdwg.mxu0
  %v84 = vadd.f32 %v21, %v79
  %vm85 = vcmask 523264
  %86 = vst.msk [vmem:[#allocation2] sm:$0xff] %vm85, %v84
  // Predicated region
  $region18: #{llm_decoder_forward.17} parent=0 // pred_check
    %p87 = pneg %p15
  $region19: #{llm_decoder_forward.17} parent=0 // pred_check_branch
    %89 = sbr.rel (%p87) target = $region21
  $region20: #{llm_decoder_forward.17} parent=0 // pred_region
    %v90 = vld [vmem:[#allocation2] sm:$0xff]
    %v91 = vld [vmem:[%s2] sm:$0x1]
    %v93 = vlaneseq
    %v94 = vshrl.u32 %v93, 7
    %v95 = vsub.s32 0, %v94
    %v96 = vrot.slane %v91, %v95
    %v98 = vadd.f32 %v90, %v96
    %99 = vst.msk [vmem:[%s3] sm:$0xff] %vm85, %v98
  $region21: #{llm_decoder_forward.17} parent=0 // pred_fallthru
    _
  // Predicated region
  $region22: #{llm_decoder_forward.17} parent=0 // pred_check
    _
  $region23: #{llm_decoder_forward.17} parent=0 // pred_check_branch
    %101 = sbr.rel (0) target = $region25
  $region24: #{llm_decoder_forward.17} parent=0 // pred_region
    _
  $region25: #{llm_decoder_forward.17} parent=0 // pred_fallthru
    _
  // Predicated region
  $region26: #{llm_decoder_forward.17} parent=0 // pred_check
    _
  $region27: #{llm_decoder_forward.17} parent=0 // pred_check_branch
    %103 = sbr.rel (0) target = $region29
  $region28: #{llm_decoder_forward.17} parent=0 // pred_region
    _
  $region29: #{llm_decoder_forward.17} parent=0 // pred_fallthru
    _

// kernel: llm_decoder_forward.20
$region0: #{llm_decoder_forward.20}
  #allocation0 [shape = 'u32[]', space=smem, size = 0x4, offset = 0x4, fixed_abs, tag = 'smem constant byte address 0x4 - core index']
  #allocation1 [shape = 'u32[144,128]{1,0:T(1,128)}', space=vmem, size = 0x12000, scoped, tag = 'internal scratch']
  %s0 = inlined_call_operand.vmem [shape: f32[32,64], index: 0, kind: input, shape index: {}]
  %s1 = inlined_call_operand.vmem [shape: f32[1,64], index: 1, kind: input, shape index: {}]
  %s2 = inlined_call_operand.vmem [shape: bf16[64,192], index: 2, kind: input, shape index: {}]
  %s3 = inlined_call_operand.vmem [shape: bf16[32,192], index: 3, kind: output, shape index: {}]
  %s4 = sld [smem:[#allocation0]]
  $region22: #{llm_decoder_forward.20} parent=0
    _
  %s6 = ssub.s32 1, %s4
  %s7 = scalar_select 0, %s6, %s4
  // Predicated region
  $region2: #{llm_decoder_forward.20} parent=0 // pred_check
    _
  $region3: #{llm_decoder_forward.20} parent=0 // pred_check_branch
    %9 = sbr.rel (0) target = $region5
  $region4: #{llm_decoder_forward.20} parent=0 // pred_region
    _
  $region5: #{llm_decoder_forward.20} parent=0 // pred_fallthru
    _
  // Predicated region
  $region6: #{llm_decoder_forward.20} parent=0 // pred_check
    _
  $region7: #{llm_decoder_forward.20} parent=0 // pred_check_branch
    %11 = sbr.rel (0) target = $region9
  $region8: #{llm_decoder_forward.20} parent=0 // pred_region
    _
  $region9: #{llm_decoder_forward.20} parent=0 // pred_fallthru
    _
  // Predicated region
  $region10: #{llm_decoder_forward.20} parent=0 // pred_check
    _
  $region11: #{llm_decoder_forward.20} parent=0 // pred_check_branch
    %13 = sbr.rel (0) target = $region13
  $region12: #{llm_decoder_forward.20} parent=0 // pred_region
    _
  $region13: #{llm_decoder_forward.20} parent=0 // pred_fallthru
    _
  %v15 = vld [vmem:[%s0] sm:$0xff]
  %v16 = vld [vmem:[%s0 + $0x8] sm:$0xff]
  %v17 = vld [vmem:[%s0 + $0x10] sm:$0xff]
  %v18 = vld [vmem:[%s0 + $0x18] sm:$0xff]
  %v19 = vmul.f32 %v15, %v15
  %v20 = vmul.f32 %v16, %v16
  %v21 = vmul.f32 %v17, %v17
  %v22 = vmul.f32 %v18, %v18
  %vm23 = vcmask 523264
  %v24 = vsel %vm23, %v19, 0.0
  %25 = vadd.xlane.f32.xlu0 %v24
  %v26 = vpop.xlane.xlu0 %25
  %v27 = vsel %vm23, %v20, 0.0
  %28 = vadd.xlane.f32.xlu0 %v27
  %v29 = vpop.xlane.xlu0 %28
  %v30 = vsel %vm23, %v21, 0.0
  %31 = vadd.xlane.f32.xlu0 %v30
  %v32 = vpop.xlane.xlu0 %31
  %v33 = vsel %vm23, %v22, 0.0
  %34 = vadd.xlane.f32.xlu0 %v33
  %v35 = vpop.xlane.xlu0 %34
  %v36 = vrcp.pop 64.0
  %v37 = vmul.f32 %v26, %v36
  %v38 = vmul.f32 %v29, %v36
  %v39 = vmul.f32 %v32, %v36
  %v40 = vmul.f32 %v35, %v36
  %v41 = vadd.f32 %v37, 1e-05
  %v42 = vadd.f32 %v38, 1e-05
  %v43 = vadd.f32 %v39, 1e-05
  %v44 = vadd.f32 %v40, 1e-05
  %v45 = vrsqrt.pop %v41
  %v46 = vrsqrt.pop %v42
  %v47 = vrsqrt.pop %v43
  %v48 = vrsqrt.pop %v44
  %v49 = vmul.f32 %v15, %v45
  %v50 = vmul.f32 %v16, %v46
  %v51 = vmul.f32 %v17, %v47
  %v52 = vmul.f32 %v18, %v48
  %v53 = vld [vmem:[%s1] sm:$0x1]
  %v55 = vlaneseq
  %v56 = vshrl.u32 %v55, 7
  %v57 = vsub.s32 0, %v56
  %v58 = vrot.slane %v53, %v57
  %v60 = vmul.f32 %v49, %v58
  %v61 = vmul.f32 %v50, %v58
  %v62 = vmul.f32 %v51, %v58
  %v63 = vmul.f32 %v52, %v58
  %v64 = vpack.c.bf16 %v61, %v60
  %v65 = vpack.c.bf16 %v63, %v62
  %v66 = vld [vmem:[%s2] sm:$0xff]
  %v67 = vld [vmem:[%s2 + $0x8] sm:$0xff]
  %v68 = vld [vmem:[%s2 + $0x10] sm:$0xff]
  %v69 = vld [vmem:[%s2 + $0x18] sm:$0xff]
  %v70 = vld [vmem:[%s2 + $0x20] sm:$0xff]
  %v71 = vld [vmem:[%s2 + $0x28] sm:$0xff]
  %v72 = vld [vmem:[%s2 + $0x30] sm:$0xff]
  %v73 = vld [vmem:[%s2 + $0x38] sm:$0xff]
  %v82 = vunpack.c.l.b16 %v66
  %v83 = vunpack.c.h.b16 %v66
  %v84 = vunpack.c.l.b16 %v67
  %v85 = vunpack.c.h.b16 %v67
  %v86 = vunpack.c.l.b16 %v68
  %v87 = vunpack.c.h.b16 %v68
  %v88 = vunpack.c.l.b16 %v69
  %v89 = vunpack.c.h.b16 %v69
  %v90 = vunpack.c.l.b16 %v70
  %v91 = vunpack.c.h.b16 %v70
  %v92 = vunpack.c.l.b16 %v71
  %v93 = vunpack.c.h.b16 %v71
  %v94 = vunpack.c.l.b16 %v72
  %v95 = vunpack.c.h.b16 %v72
  %v96 = vunpack.c.l.b16 %v73
  %v97 = vunpack.c.h.b16 %v73
  %v98 = vpack.c.b16 %v84, %v82
  %v99 = vpack.c.b16 %v85, %v83
  %v100 = vpack.c.b16 %v88, %v86
  %v101 = vpack.c.b16 %v89, %v87
  %v102 = vpack.c.b16 %v92, %v90
  %v103 = vpack.c.b16 %v93, %v91
  %v104 = vpack.c.b16 %v96, %v94
  %v105 = vpack.c.b16 %v97, %v95
  %v115 = vsel %vm23, %v64, 0
  %v118 = vsel %vm23, %v65, 0
  %120 = vmatprep.subr.bf16.mxu0 %v99
  %121 = vmatpush1.bf16.msra.mxu0 %v98
  %122 = vmatprep.subr.bf16.mxu0 %v101
  %123 = vmatpush1.bf16.msra.mxu0 %v100
  %124 = vmatprep.subr.bf16.mxu0 %v103
  %125 = vmatpush1.bf16.msra.mxu0 %v102
  %126 = vmatprep.subr.bf16.mxu0 %v105
  %127 = vmatpush1.bf16.msra.mxu0 %v104
  %128 = vmatprep.subr.bf16.mxu0 0
  %129 = vmatpush1.bf16.msra.mxu0 0
  %130 = vmatprep.subr.bf16.mxu0 0
  %131 = vmatpush1.bf16.msra.mxu0 0
  %132 = vmatprep.subr.bf16.mxu0 0
  %133 = vmatpush1.bf16.msra.mxu0 0
  %134 = vmatprep.subr.bf16.mxu0 0
  %135 = vmatpush1.bf16.msra.mxu0 0
  %136 = vmatprep.subr.bf16.mxu0 0
  %137 = vmatpush1.bf16.msra.mxu0 0
  %138 = vmatprep.subr.bf16.mxu0 0
  %139 = vmatpush1.bf16.msra.mxu0 0
  %140 = vmatprep.subr.bf16.mxu0 0
  %141 = vmatpush1.bf16.msra.mxu0 0
  %142 = vmatprep.subr.bf16.mxu0 0
  %143 = vmatpush1.bf16.msra.mxu0 0
  %144 = vmatprep.subr.bf16.mxu0 0
  %145 = vmatpush1.bf16.msra.mxu0 0
  %146 = vmatprep.subr.bf16.mxu0 0
  %147 = vmatpush1.bf16.msra.mxu0 0
  %148 = vmatprep.subr.bf16.mxu0 0
  %149 = vmatpush1.bf16.msra.mxu0 0
  %150 = vmatprep.subr.bf16.mxu0 0
  %151 = vmatpush1.bf16.msra.mxu0 0
  %152 = vmatprep.mubr.bf16.mxu0 0
  %153 = vmatmul.mubr.bf16.gmra.mrb[0].mxu0 %v115
  %v154 = vpop.f32.mrb[0].mxu0
  %v155 = vadd.f32 0.0, %v154
  %v156 = vpop.f32.mrb[0].mxu0
  %v157 = vadd.f32 0.0, %v156
  %v158 = vpop.f32.mrb[0].mxu0
  %v159 = vadd.f32 0.0, %v158
  %v160 = vpop.f32.mrb[0].mxu0
  %v161 = vadd.f32 0.0, %v160
  %162 = vmatprep.mubr.bf16.mxu0 0
  %163 = vmatmul.mubr.bf16.gmra.mrb[0].mxu0 %v118
  %v164 = vpop.f32.mrb[0].mxu0
  %v165 = vadd.f32 0.0, %v164
  %v166 = vpop.f32.mrb[0].mxu0
  %v167 = vadd.f32 0.0, %v166
  %v168 = vpop.f32.mrb[0].mxu0
  %v169 = vadd.f32 0.0, %v168
  %v170 = vpop.f32.mrb[0].mxu0
  %v171 = vadd.f32 0.0, %v170
  %172 = vdwg.mxu0
  %v173 = vpack.c.bf16 %v159, %v155
  %v174 = vpack.c.bf16 %v161, %v157
  %v175 = vpack.c.bf16 %v169, %v165
  %v176 = vpack.c.bf16 %v171, %v167
  %v181 = vunpack.c.l.b16 %v173
  %v182 = vunpack.c.l.b16 %v174
  %v183 = vunpack.c.h.b16 %v173
  %v184 = vunpack.c.h.b16 %v174
  %v185 = vunpack.c.l.b16 %v175
  %v186 = vunpack.c.l.b16 %v176
  %v187 = vunpack.c.h.b16 %v175
  %v188 = vunpack.c.h.b16 %v176
  %v189 = vpack.c.b16 %v182, %v181
  %v190 = vpack.c.b16 %v184, %v183
  %v191 = vpack.c.b16 %v186, %v185
  %v192 = vpack.c.b16 %v188, %v187
  %vm197 = vcmask 1043456
  %vm198 = vcmask 523268
  %vm199 = vmor %vm198, %vm197
  %200 = vst.msk [vmem:[%s3] sm:$0xff] %vm199, %v189
  %201 = vst.msk [vmem:[%s3 + $0x8] sm:$0xff] %vm199, %v190
  %202 = vst.msk [vmem:[%s3 + $0x10] sm:$0xff] %vm199, %v191
  %203 = vst.msk [vmem:[%s3 + $0x18] sm:$0xff] %vm199, %v192
  // Predicated region
  $region14: #{llm_decoder_forward.20} parent=0 // pred_check
    _
  $region15: #{llm_decoder_forward.20} parent=0 // pred_check_branch
    %205 = sbr.rel (0) target = $region17
  $region16: #{llm_decoder_forward.20} parent=0 // pred_region
    _
  $region17: #{llm_decoder_forward.20} parent=0 // pred_fallthru
    _
  // Predicated region
  $region18: #{llm_decoder_forward.20} parent=0 // pred_check
    _
  $region19: #{llm_decoder_forward.20} parent=0 // pred_check_branch
    %207 = sbr.rel (0) target = $region21
  $region20: #{llm_decoder_forward.20} parent=0 // pred_region
    _
  $region21: #{llm_decoder_forward.20} parent=0 // pred_fallthru
    _

// kernel: llm_decoder_forward.22
$region0: #{llm_decoder_forward.22}
  #allocation0 [shape = 'u32[]', space=smem, size = 0x4, offset = 0x4, fixed_abs, tag = 'smem constant byte address 0x4 - core index']
  #allocation1 [shape = 'u32[144,128]{1,0:T(1,128)}', space=vmem, size = 0x12000, scoped, tag = 'internal scratch']
  %s0 = inlined_call_operand.vmem [shape: f32[16,16], index: 0, kind: input, shape index: {}]
  %s1 = inlined_call_operand.vmem [shape: f32[16,16], index: 1, kind: input, shape index: {}]
  %s2 = inlined_call_operand.vmem [shape: bf16[16,16], index: 2, kind: input, shape index: {}]
  %s3 = inlined_call_operand.vmem [shape: bf16[8,16,16], index: 3, kind: input, shape index: {}]
  %s4 = inlined_call_operand.vmem [shape: bf16[8,16,16], index: 4, kind: output, shape index: {}]
  %s5 = sld [smem:[#allocation0]]
  $region49: #{llm_decoder_forward.22} parent=0
    _
  %s7 = ssub.s32 1, %s5
  %s8 = scalar_select 0, %s7, %s5
  loop: start=0, step=1, limit=10
  $region2: #{llm_decoder_forward.22} parent=0 // loop_pre_header
    _
  $region3: #{llm_decoder_forward.22} parent=0 // loop_header
    %s10 = sphi 0, %s14
    %p11 = scmp.ge.s32.totalorder %s10, 10
    %s17 = sphi 0, %s29
    %s18 = sphi 0, %s25
    %s19 = sphi 0, %s17
    %s20 = sphi 0, %s18
    %s21 = sphi 0, %s19
    %s22 = sphi 0, %s20
    %s32 = sphi 0, %s34
    %s35 = sphi 0, %s32
    %s36 = sphi 0, %s35
    %s52 = sphi 0, %s36
    %s58 = sphi 0, %s60
    %s61 = sphi 0, %s58
    %s62 = sphi 0, %s61
    %s78 = sphi 0, %s62
    %s82 = sphi 0, %s82
    %s84 = sphi 0, %s82
    %s85 = sphi 0, %s84
    %s99 = sphi 0, %s85
    %s107 = sphi 0, %s109
    %s110 = sphi 0, %s107
    %s111 = sphi 0, %s110
    %s127 = sphi 0, %s111
    %s135 = sphi 0, %s137
    %s138 = sphi 0, %s135
    %s139 = sphi 0, %s138
    %s155 = sphi 0, %s139
  $region4: #{llm_decoder_forward.22} parent=0 // loop_header_branch
    %13 = sbr.rel (%p11) target = $region8
  $region5: #{llm_decoder_forward.22} parent=0 // loop_body
    %s15 = ssub.s32 %s10, 1
    %s16 = ssub.s32 %s10, 2
    %s23 = sadd.s32 1, %s18
    %p24 = scmp.ge.s32.totalorder %s23, 1
    %s25 = scalar_select %p24, 0, %s23
    %s26 = sadd.s32 1, %s17
    %s27 = scalar_select %p24, %s26, %s17
    %p28 = scmp.ge.s32.totalorder %s27, 8
    %s29 = scalar_select %p28, 0, %s27
    %s30 = ssub.s32 %s18, %s25
    %p31 = scmp.eq.s32.totalorder %s30, 0
    %s33 = sadd.s32 %s32, 1
    %s34 = scalar_select %p31, %s32, %s33
    %p37 = pneg %p31
    %p38 = scmp.eq.s32.totalorder %s10, 7
    %p39 = por %p37, %p38
    %p40 = scmp.ne.s32.totalorder %s32, %s35
    %p41 = scmp.eq.s32.totalorder %s10, 0
    %p42 = por %p40, %p41
    %p43 = scmp.ne.s32.totalorder %s32, %s35
    %p44 = scmp.eq.s32.totalorder %s15, 7
    %p45 = por %p43, %p44
    %p46 = scmp.ne.s32.totalorder %s35, %s36
    %p47 = scmp.eq.s32.totalorder %s15, 0
    %p48 = por %p46, %p47
    %p49 = scmp.ne.s32.totalorder %s35, %s36
    %p50 = scmp.eq.s32.totalorder %s16, 7
    %p51 = por %p49, %p50
    %p53 = scmp.ne.s32.totalorder %s36, %s52
    %p54 = scmp.eq.s32.totalorder %s16, 0
    %p55 = por %p53, %p54
    %s56 = ssub.s32 %s18, %s25
    %p57 = scmp.eq.s32.totalorder %s56, 0
    %s59 = sadd.s32 %s58, 1
    %s60 = scalar_select %p57, %s58, %s59
    %p63 = pneg %p57
    %p64 = scmp.eq.s32.totalorder %s10, 7
    %p65 = por %p63, %p64
    %p66 = scmp.ne.s32.totalorder %s58, %s61
    %p67 = scmp.eq.s32.totalorder %s10, 0
    %p68 = por %p66, %p67
    %p69 = scmp.ne.s32.totalorder %s58, %s61
    %p70 = scmp.eq.s32.totalorder %s15, 7
    %p71 = por %p69, %p70
    %p72 = scmp.ne.s32.totalorder %s61, %s62
    %p73 = scmp.eq.s32.totalorder %s15, 0
    %p74 = por %p72, %p73
    %p75 = scmp.ne.s32.totalorder %s61, %s62
    %p76 = scmp.eq.s32.totalorder %s16, 7
    %p77 = por %p75, %p76
    %p79 = scmp.ne.s32.totalorder %s62, %s78
    %p80 = scmp.eq.s32.totalorder %s16, 0
    %p81 = por %p79, %p80
    %s83 = sadd.s32 %s82, 1
    %p86 = scmp.eq.s32.totalorder %s10, 7
    %p87 = scmp.ne.s32.totalorder %s82, %s84
    %p88 = scmp.eq.s32.totalorder %s10, 0
    %p89 = por %p87, %p88
    %p90 = scmp.ne.s32.totalorder %s82, %s84
    %p91 = scmp.eq.s32.totalorder %s15, 7
    %p92 = por %p90, %p91
    %p93 = scmp.ne.s32.totalorder %s84, %s85
    %p94 = scmp.eq.s32.totalorder %s15, 0
    %p95 = por %p93, %p94
    %p96 = scmp.ne.s32.totalorder %s84, %s85
    %p97 = scmp.eq.s32.totalorder %s16, 7
    %p98 = por %p96, %p97
    %p100 = scmp.ne.s32.totalorder %s85, %s99
    %p101 = scmp.eq.s32.totalorder %s16, 0
    %p102 = por %p100, %p101
    %s103 = ssub.s32 %s17, %s29
    %s104 = ssub.s32 %s18, %s25
    %s105 = sor.u32 %s103, %s104
    %p106 = scmp.eq.s32.totalorder %s105, 0
    %s108 = sadd.s32 %s107, 1
    %s109 = scalar_select %p106, %s107, %s108
    %p112 = pneg %p106
    %p113 = scmp.eq.s32.totalorder %s10, 7
    %p114 = por %p112, %p113
    %p115 = scmp.ne.s32.totalorder %s107, %s110
    %p116 = scmp.eq.s32.totalorder %s10, 0
    %p117 = por %p115, %p116
    %p118 = scmp.ne.s32.totalorder %s107, %s110
    %p119 = scmp.eq.s32.totalorder %s15, 7
    %p120 = por %p118, %p119
    %p121 = scmp.ne.s32.totalorder %s110, %s111
    %p122 = scmp.eq.s32.totalorder %s15, 0
    %p123 = por %p121, %p122
    %p124 = scmp.ne.s32.totalorder %s110, %s111
    %p125 = scmp.eq.s32.totalorder %s16, 7
    %p126 = por %p124, %p125
    %p128 = scmp.ne.s32.totalorder %s111, %s127
    %p129 = scmp.eq.s32.totalorder %s16, 0
    %p130 = por %p128, %p129
    %s131 = ssub.s32 %s17, %s29
    %s132 = ssub.s32 %s18, %s25
    %s133 = sor.u32 %s131, %s132
    %p134 = scmp.eq.s32.totalorder %s133, 0
    %s136 = sadd.s32 %s135, 1
    %s137 = scalar_select %p134, %s135, %s136
    %p140 = pneg %p134
    %p141 = scmp.eq.s32.totalorder %s10, 7
    %p142 = por %p140, %p141
    %p143 = scmp.ne.s32.totalorder %s135, %s138
    %p144 = scmp.eq.s32.totalorder %s10, 0
    %p145 = por %p143, %p144
    %p146 = scmp.ne.s32.totalorder %s135, %s138
    %p147 = scmp.eq.s32.totalorder %s15, 7
    %p148 = por %p146, %p147
    %p149 = scmp.ne.s32.totalorder %s138, %s139
    %p150 = scmp.eq.s32.totalorder %s15, 0
    %p151 = por %p149, %p150
    %p152 = scmp.ne.s32.totalorder %s138, %s139
    %p153 = scmp.eq.s32.totalorder %s16, 7
    %p154 = por %p152, %p153
    %p156 = scmp.ne.s32.totalorder %s139, %s155
    %p157 = scmp.eq.s32.totalorder %s16, 0
    %p158 = por %p156, %p157
    %p159 = scmp.le.s32.totalorder 1, %s10
    %p160 = scmp.lt.s32.totalorder %s10, 9
    %p161 = pnand %p159, %p160
    %p162 = pneg %p161
    // Predicated region
    $region9: #{llm_decoder_forward.22} parent=5 // pred_check
      _
    $region10: #{llm_decoder_forward.22} parent=5 // pred_check_branch
      %164 = sbr.rel (%p161) target = $region12
    $region11: #{llm_decoder_forward.22} parent=5 // pred_region
      %s165 = ssub.s32 %s10, 1
      // Predicated region
      $region13: #{llm_decoder_forward.22} parent=11 // pred_check
        %p166 = pneg %p48
      $region14: #{llm_decoder_forward.22} parent=11 // pred_check_branch
        %168 = sbr.rel (%p166) target = $region16
      $region15: #{llm_decoder_forward.22} parent=11 // pred_region
        %s169 = smul.u32 2, %s20
        %p170 = scmp.lt.s32.totalorder %s169, 1
        %s171 = scalar_select %p170, %s169, 1
        %s172 = smul.addr %s171, 8
        %s173 = scalar_lea.vmem %s0, %s172
        %s174 = smul.u32 2, %s20
      $region16: #{llm_decoder_forward.22} parent=11 // pred_fallthru
        _
      // Predicated region
      $region17: #{llm_decoder_forward.22} parent=11 // pred_check
        %p175 = pneg %p74
      $region18: #{llm_decoder_forward.22} parent=11 // pred_check_branch
        %177 = sbr.rel (%p175) target = $region20
      $region19: #{llm_decoder_forward.22} parent=11 // pred_region
        %s178 = smul.u32 2, %s20
        %p179 = scmp.lt.s32.totalorder %s178, 1
        %s180 = scalar_select %p179, %s178, 1
        %s181 = smul.addr %s180, 8
        %s182 = scalar_lea.vmem %s1, %s181
        %s183 = smul.u32 2, %s20
      $region20: #{llm_decoder_forward.22} parent=11 // pred_fallthru
        _
      // Predicated region
      $region21: #{llm_decoder_forward.22} parent=11 // pred_check
        %p184 = pneg %p95
      $region22: #{llm_decoder_forward.22} parent=11 // pred_check_branch
        %186 = sbr.rel (%p184) target = $region24
      $region23: #{llm_decoder_forward.22} parent=11 // pred_region
        _
      $region24: #{llm_decoder_forward.22} parent=11 // pred_fallthru
        _
    $region12: #{llm_decoder_forward.22} parent=5 // pred_fallthru
      _
    %p187 = scmp.lt.s32.totalorder %s10, 8
    // Predicated region
    $region25: #{llm_decoder_forward.22} parent=5 // pred_check
      %p188 = pneg %p187
    $region26: #{llm_decoder_forward.22} parent=5 // pred_check_branch
      %190 = sbr.rel (%p188) target = $region28
    $region27: #{llm_decoder_forward.22} parent=5 // pred_region
      // Predicated region
      $region29: #{llm_decoder_forward.22} parent=27 // pred_check
        %p191 = pneg %p117
      $region30: #{llm_decoder_forward.22} parent=27 // pred_check_branch
        %193 = sbr.rel (%p191) target = $region32
      $region31: #{llm_decoder_forward.22} parent=27 // pred_region
        %s194 = smul.u32 2, %s18
        %p195 = scmp.lt.s32.totalorder %s17, 7
        %s196 = scalar_select %p195, %s17, 7
        %p197 = scmp.lt.s32.totalorder %s194, 1
        %s198 = scalar_select %p197, %s194, 1
        %s199 = smul.addr %s196, 2
        %s200 = sadd.s32 %s198, %s199
        %s201 = smul.addr %s200, 4
        %s202 = scalar_lea.vmem %s3, %s201
        %s203 = smul.u32 2, %s18
      $region32: #{llm_decoder_forward.22} parent=27 // pred_fallthru
        _
    $region28: #{llm_decoder_forward.22} parent=5 // pred_fallthru
      _
    %p204 = scmp.le.s32.totalorder 1, %s10
    %p205 = scmp.lt.s32.totalorder %s10, 9
    %p206 = pnand %p204, %p205
    %p207 = pneg %p206
    // Predicated region
    $region33: #{llm_decoder_forward.22} parent=5 // pred_check
      _
    $region34: #{llm_decoder_forward.22} parent=5 // pred_check_branch
      %209 = sbr.rel (%p206) target = $region36
    $region35: #{llm_decoder_forward.22} parent=5 // pred_region
      %s210 = ssub.s32 %s10, 1
      %s211 = smul.u32 2, %s20
      %p212 = scmp.lt.s32.totalorder %s211, 1
      %s213 = scalar_select %p212, %s211, 1
      %s214 = smul.addr %s213, 8
      %s215 = scalar_lea.vmem %s0, %s214
      %p216 = pneg %p48
      %p217 = pneg %p45
      %s218 = smul.u32 2, %s20
      %p219 = scmp.lt.s32.totalorder %s218, 1
      %s220 = scalar_select %p219, %s218, 1
      %s221 = smul.addr %s220, 8
      %s222 = scalar_lea.vmem %s1, %s221
      %p223 = pneg %p74
      %p224 = pneg %p71
      %p225 = pneg %p95
      %p226 = pneg %p92
      %s227 = smul.u32 2, %s20
      %p228 = scmp.lt.s32.totalorder %s19, 7
      %s229 = scalar_select %p228, %s19, 7
      %p230 = scmp.lt.s32.totalorder %s227, 1
      %s231 = scalar_select %p230, %s227, 1
      %s232 = smul.addr %s229, 2
      %s233 = sadd.s32 %s231, %s232
      %s234 = smul.addr %s233, 4
      %s235 = scalar_lea.vmem %s3, %s234
      %p236 = pneg %p123
      %p237 = pneg %p120
      %p238 = pneg %p151
      %p239 = pneg %p148
      %s240 = smul.u32 2, %s20
      %p241 = scmp.lt.s32.totalorder %s19, 7
      %s242 = scalar_select %p241, %s19, 7
      %p243 = scmp.lt.s32.totalorder %s240, 1
      %s244 = scalar_select %p243, %s240, 1
      %s245 = smul.addr %s242, 2
      %s246 = sadd.s32 %s244, %s245
      %s247 = smul.addr %s246, 4
      %s248 = scalar_lea.vmem %s4, %s247
      %s249 = smul.u32 2, %s20
      %p250 = scmp.lt.s32.totalorder %s249, 1
      %s251 = scalar_select %p250, %s249, 1
      %s252 = smul.addr %s251, 8
      %s253 = scalar_lea.vmem %s0, %s252
      %s254 = smul.u32 2, %s20
      %s255 = smul.u32 2, %s20
      %p256 = scmp.lt.s32.totalorder %s255, 1
      %s257 = scalar_select %p256, %s255, 1
      %s258 = smul.addr %s257, 8
      %s259 = scalar_lea.vmem %s1, %s258
      %s260 = smul.u32 2, %s20
      %s261 = smul.u32 2, %s20
      %p262 = scmp.lt.s32.totalorder %s19, 7
      %s263 = scalar_select %p262, %s19, 7
      %p264 = scmp.lt.s32.totalorder %s261, 1
      %s265 = scalar_select %p264, %s261, 1
      %s266 = smul.addr %s263, 2
      %s267 = sadd.s32 %s265, %s266
      %s268 = smul.addr %s267, 4
      %s269 = scalar_lea.vmem %s3, %s268
      %s270 = smul.u32 2, %s20
      %s271 = smul.u32 2, %s20
      %p272 = scmp.lt.s32.totalorder %s19, 7
      %s273 = scalar_select %p272, %s19, 7
      %p274 = scmp.lt.s32.totalorder %s271, 1
      %s275 = scalar_select %p274, %s271, 1
      %s276 = smul.addr %s273, 2
      %s277 = sadd.s32 %s275, %s276
      %s278 = smul.addr %s277, 4
      %s279 = scalar_lea.vmem %s4, %s278
      %s280 = smul.u32 2, %s20
      %v282 = vld [vmem:[%s269] sm:$0xf]
      %v283 = vld [vmem:[%s269 + $0x4] sm:$0xf]
      %v284 = vld [vmem:[%s2] sm:$0xf]
      %v285 = vld [vmem:[%s2 + $0x4] sm:$0xf]
      %v288 = vunpack.c.l.b16 %v282
      %v289 = vunpack.c.l.b16 %v283
      %v290 = vpack.c.b16 %v289, %v288
      %v293 = vunpack.c.l.b16 %v284
      %v294 = vunpack.c.l.b16 %v285
      %v295 = vpack.c.b16 %v294, %v293
      %vm297 = vcmask 130048
      %v299 = vsel %vm297, %v290, 0
      %301 = vmatprep.subr.bf16.mxu0 0
      %302 = vmatpush1.bf16.msra.mxu0 %v295
      %303 = vmatprep.subr.bf16.mxu0 0
      %304 = vmatpush1.bf16.msra.mxu0 0
      %305 = vmatprep.subr.bf16.mxu0 0
      %306 = vmatpush1.bf16.msra.mxu0 0
      %307 = vmatprep.subr.bf16.mxu0 0
      %308 = vmatpush1.bf16.msra.mxu0 0
      %309 = vmatprep.subr.bf16.mxu0 0
      %310 = vmatpush1.bf16.msra.mxu0 0
      %311 = vmatprep.subr.bf16.mxu0 0
      %312 = vmatpush1.bf16.msra.mxu0 0
      %313 = vmatprep.subr.bf16.mxu0 0
      %314 = vmatpush1.bf16.msra.mxu0 0
      %315 = vmatprep.subr.bf16.mxu0 0
      %316 = vmatpush1.bf16.msra.mxu0 0
      %317 = vmatprep.subr.bf16.mxu0 0
      %318 = vmatpush1.bf16.msra.mxu0 0
      %319 = vmatprep.subr.bf16.mxu0 0
      %320 = vmatpush1.bf16.msra.mxu0 0
      %321 = vmatprep.subr.bf16.mxu0 0
      %322 = vmatpush1.bf16.msra.mxu0 0
      %323 = vmatprep.subr.bf16.mxu0 0
      %324 = vmatpush1.bf16.msra.mxu0 0
      %325 = vmatprep.subr.bf16.mxu0 0
      %326 = vmatpush1.bf16.msra.mxu0 0
      %327 = vmatprep.subr.bf16.mxu0 0
      %328 = vmatpush1.bf16.msra.mxu0 0
      %329 = vmatprep.subr.bf16.mxu0 0
      %330 = vmatpush1.bf16.msra.mxu0 0
      %331 = vmatprep.subr.bf16.mxu0 0
      %332 = vmatpush1.bf16.msra.mxu0 0
      %333 = vmatprep.mubr.bf16.mxu0 0
      %334 = vmatmul.mubr.bf16.gmra.mrb[0].mxu0 %v299
      %v335 = vpop.f32.mrb[0].mxu0
      %v336 = vadd.f32 0.0, %v335
      %v337 = vpop.f32.mrb[0].mxu0
      %v338 = vpop.f32.mrb[0].mxu0
      %v339 = vadd.f32 0.0, %v338
      %v340 = vpop.f32.mrb[0].mxu0
      %341 = vdwg.mxu0
      %v342 = vunpack.c.l.bf16 %v282
      %v343 = vunpack.c.l.bf16 %v283
      %v344 = vld [vmem:[%s253] sm:$0xff]
      %v345 = vld [vmem:[%s253 + $0x8] sm:$0xff]
      %v346 = vmul.f32 %v342, %v344
      %v347 = vmul.f32 %v343, %v345
      %v348 = vld [vmem:[%s259] sm:$0xff]
      %v349 = vld [vmem:[%s259 + $0x8] sm:$0xff]
      %v350 = vmul.f32 %v336, %v348
      %v351 = vmul.f32 %v339, %v349
      %v352 = vadd.f32 %v346, %v350
      %v353 = vadd.f32 %v347, %v351
      %v354 = vpack.c.bf16 %v353, %v352
      %v356 = vunpack.c.l.b16 %v354
      %v357 = vunpack.c.h.b16 %v354
      %v358 = vpack.c.b16 %v356, %v356
      %v359 = vpack.c.b16 %v357, %v357
      %vm362 = vcmask 125952
      %363 = vst.msk [vmem:[%s279] sm:$0xf] %vm362, %v358
      %364 = vst.msk [vmem:[%s279 + $0x4] sm:$0xf] %vm362, %v359
      %s365 = smul.u32 2, %s20
      %p366 = scmp.lt.s32.totalorder %s19, 7
      %s367 = scalar_select %p366, %s19, 7
      %p368 = scmp.lt.s32.totalorder %s365, 1
      %s369 = scalar_select %p368, %s365, 1
      %s370 = smul.addr %s367, 2
      %s371 = sadd.s32 %s369, %s370
      %s372 = smul.addr %s371, 4
      %s373 = scalar_lea.vmem %s4, %s372
      // Predicated region
      $region37: #{llm_decoder_forward.22} parent=35 // pred_check
        %p374 = pneg %p148
      $region38: #{llm_decoder_forward.22} parent=35 // pred_check_branch
        %376 = sbr.rel (%p374) target = $region40
      $region39: #{llm_decoder_forward.22} parent=35 // pred_region
        %s377 = smul.u32 2, %s20
      $region40: #{llm_decoder_forward.22} parent=35 // pred_fallthru
        _
    $region36: #{llm_decoder_forward.22} parent=5 // pred_fallthru
      _
    %p378 = scmp.le.s32.totalorder 2, %s10
    // Predicated region
    $region41: #{llm_decoder_forward.22} parent=5 // pred_check
      %p379 = pneg %p378
    $region42: #{llm_decoder_forward.22} parent=5 // pred_check_branch
      %381 = sbr.rel (%p379) target = $region44
    $region43: #{llm_decoder_forward.22} parent=5 // pred_region
      %s382 = ssub.s32 %s10, 2
      // Predicated region
      $region45: #{llm_decoder_forward.22} parent=43 // pred_check
        %p383 = pneg %p154
      $region46: #{llm_decoder_forward.22} parent=43 // pred_check_branch
        %385 = sbr.rel (%p383) target = $region48
      $region47: #{llm_decoder_forward.22} parent=43 // pred_region
        %s386 = smul.u32 2, %s22
        %p387 = scmp.lt.s32.totalorder %s21, 7
        %s388 = scalar_select %p387, %s21, 7
        %p389 = scmp.lt.s32.totalorder %s386, 1
        %s390 = scalar_select %p389, %s386, 1
        %s391 = smul.addr %s388, 2
        %s392 = sadd.s32 %s390, %s391
        %s393 = smul.addr %s392, 4
        %s394 = scalar_lea.vmem %s4, %s393
      $region48: #{llm_decoder_forward.22} parent=43 // pred_fallthru
        _
    $region44: #{llm_decoder_forward.22} parent=5 // pred_fallthru
      _
  $region6: #{llm_decoder_forward.22} parent=0 // loop_footer
    %s14 = sadd.s32 1, %s10
  $region7: #{llm_decoder_forward.22} parent=0 // loop_footer_branch
    %9 = sbr.rel target = $region3
  $region8: #{llm_decoder_forward.22} parent=0 // loop_exit
    _

// kernel: llm_decoder_forward.21
$region0: #{llm_decoder_forward.21}
  #allocation0 [shape = 'u32[]', space=smem, size = 0x4, offset = 0x4, fixed_abs, tag = 'smem constant byte address 0x4 - core index']
  #allocation1 [shape = 'u32[144,128]{1,0:T(1,128)}', space=vmem, size = 0x12000, scoped, tag = 'internal scratch']
  %s0 = inlined_call_operand.vmem [shape: f32[16,16], index: 0, kind: input, shape index: {}]
  %s1 = inlined_call_operand.vmem [shape: f32[16,16], index: 1, kind: input, shape index: {}]
  %s2 = inlined_call_operand.vmem [shape: bf16[16,16], index: 2, kind: input, shape index: {}]
  %s3 = inlined_call_operand.vmem [shape: bf16[8,16,16], index: 3, kind: input, shape index: {}]
  %s4 = inlined_call_operand.vmem [shape: bf16[8,16,16], index: 4, kind: output, shape index: {}]
  %s5 = sld [smem:[#allocation0]]
  $region49: #{llm_decoder_forward.21} parent=0
    _
  %s7 = ssub.s32 1, %s5
  %s8 = scalar_select 0, %s7, %s5
  loop: start=0, step=1, limit=10
  $region2: #{llm_decoder_forward.21} parent=0 // loop_pre_header
    _
  $region3: #{llm_decoder_forward.21} parent=0 // loop_header
    %s10 = sphi 0, %s14
    %p11 = scmp.ge.s32.totalorder %s10, 10
    %s17 = sphi 0, %s29
    %s18 = sphi 0, %s25
    %s19 = sphi 0, %s17
    %s20 = sphi 0, %s18
    %s21 = sphi 0, %s19
    %s22 = sphi 0, %s20
    %s32 = sphi 0, %s34
    %s35 = sphi 0, %s32
    %s36 = sphi 0, %s35
    %s52 = sphi 0, %s36
    %s58 = sphi 0, %s60
    %s61 = sphi 0, %s58
    %s62 = sphi 0, %s61
    %s78 = sphi 0, %s62
    %s82 = sphi 0, %s82
    %s84 = sphi 0, %s82
    %s85 = sphi 0, %s84
    %s99 = sphi 0, %s85
    %s107 = sphi 0, %s109
    %s110 = sphi 0, %s107
    %s111 = sphi 0, %s110
    %s127 = sphi 0, %s111
    %s135 = sphi 0, %s137
    %s138 = sphi 0, %s135
    %s139 = sphi 0, %s138
    %s155 = sphi 0, %s139
  $region4: #{llm_decoder_forward.21} parent=0 // loop_header_branch
    %13 = sbr.rel (%p11) target = $region8
  $region5: #{llm_decoder_forward.21} parent=0 // loop_body
    %s15 = ssub.s32 %s10, 1
    %s16 = ssub.s32 %s10, 2
    %s23 = sadd.s32 1, %s18
    %p24 = scmp.ge.s32.totalorder %s23, 1
    %s25 = scalar_select %p24, 0, %s23
    %s26 = sadd.s32 1, %s17
    %s27 = scalar_select %p24, %s26, %s17
    %p28 = scmp.ge.s32.totalorder %s27, 8
    %s29 = scalar_select %p28, 0, %s27
    %s30 = ssub.s32 %s18, %s25
    %p31 = scmp.eq.s32.totalorder %s30, 0
    %s33 = sadd.s32 %s32, 1
    %s34 = scalar_select %p31, %s32, %s33
    %p37 = pneg %p31
    %p38 = scmp.eq.s32.totalorder %s10, 7
    %p39 = por %p37, %p38
    %p40 = scmp.ne.s32.totalorder %s32, %s35
    %p41 = scmp.eq.s32.totalorder %s10, 0
    %p42 = por %p40, %p41
    %p43 = scmp.ne.s32.totalorder %s32, %s35
    %p44 = scmp.eq.s32.totalorder %s15, 7
    %p45 = por %p43, %p44
    %p46 = scmp.ne.s32.totalorder %s35, %s36
    %p47 = scmp.eq.s32.totalorder %s15, 0
    %p48 = por %p46, %p47
    %p49 = scmp.ne.s32.totalorder %s35, %s36
    %p50 = scmp.eq.s32.totalorder %s16, 7
    %p51 = por %p49, %p50
    %p53 = scmp.ne.s32.totalorder %s36, %s52
    %p54 = scmp.eq.s32.totalorder %s16, 0
    %p55 = por %p53, %p54
    %s56 = ssub.s32 %s18, %s25
    %p57 = scmp.eq.s32.totalorder %s56, 0
    %s59 = sadd.s32 %s58, 1
    %s60 = scalar_select %p57, %s58, %s59
    %p63 = pneg %p57
    %p64 = scmp.eq.s32.totalorder %s10, 7
    %p65 = por %p63, %p64
    %p66 = scmp.ne.s32.totalorder %s58, %s61
    %p67 = scmp.eq.s32.totalorder %s10, 0
    %p68 = por %p66, %p67
    %p69 = scmp.ne.s32.totalorder %s58, %s61
    %p70 = scmp.eq.s32.totalorder %s15, 7
    %p71 = por %p69, %p70
    %p72 = scmp.ne.s32.totalorder %s61, %s62
    %p73 = scmp.eq.s32.totalorder %s15, 0
    %p74 = por %p72, %p73
    %p75 = scmp.ne.s32.totalorder %s61, %s62
    %p76 = scmp.eq.s32.totalorder %s16, 7
    %p77 = por %p75, %p76
    %p79 = scmp.ne.s32.totalorder %s62, %s78
    %p80 = scmp.eq.s32.totalorder %s16, 0
    %p81 = por %p79, %p80
    %s83 = sadd.s32 %s82, 1
    %p86 = scmp.eq.s32.totalorder %s10, 7
    %p87 = scmp.ne.s32.totalorder %s82, %s84
    %p88 = scmp.eq.s32.totalorder %s10, 0
    %p89 = por %p87, %p88
    %p90 = scmp.ne.s32.totalorder %s82, %s84
    %p91 = scmp.eq.s32.totalorder %s15, 7
    %p92 = por %p90, %p91
    %p93 = scmp.ne.s32.totalorder %s84, %s85
    %p94 = scmp.eq.s32.totalorder %s15, 0
    %p95 = por %p93, %p94
    %p96 = scmp.ne.s32.totalorder %s84, %s85
    %p97 = scmp.eq.s32.totalorder %s16, 7
    %p98 = por %p96, %p97
    %p100 = scmp.ne.s32.totalorder %s85, %s99
    %p101 = scmp.eq.s32.totalorder %s16, 0
    %p102 = por %p100, %p101
    %s103 = ssub.s32 %s17, %s29
    %s104 = ssub.s32 %s18, %s25
    %s105 = sor.u32 %s103, %s104
    %p106 = scmp.eq.s32.totalorder %s105, 0
    %s108 = sadd.s32 %s107, 1
    %s109 = scalar_select %p106, %s107, %s108
    %p112 = pneg %p106
    %p113 = scmp.eq.s32.totalorder %s10, 7
    %p114 = por %p112, %p113
    %p115 = scmp.ne.s32.totalorder %s107, %s110
    %p116 = scmp.eq.s32.totalorder %s10, 0
    %p117 = por %p115, %p116
    %p118 = scmp.ne.s32.totalorder %s107, %s110
    %p119 = scmp.eq.s32.totalorder %s15, 7
    %p120 = por %p118, %p119
    %p121 = scmp.ne.s32.totalorder %s110, %s111
    %p122 = scmp.eq.s32.totalorder %s15, 0
    %p123 = por %p121, %p122
    %p124 = scmp.ne.s32.totalorder %s110, %s111
    %p125 = scmp.eq.s32.totalorder %s16, 7
    %p126 = por %p124, %p125
    %p128 = scmp.ne.s32.totalorder %s111, %s127
    %p129 = scmp.eq.s32.totalorder %s16, 0
    %p130 = por %p128, %p129
    %s131 = ssub.s32 %s17, %s29
    %s132 = ssub.s32 %s18, %s25
    %s133 = sor.u32 %s131, %s132
    %p134 = scmp.eq.s32.totalorder %s133, 0
    %s136 = sadd.s32 %s135, 1
    %s137 = scalar_select %p134, %s135, %s136
    %p140 = pneg %p134
    %p141 = scmp.eq.s32.totalorder %s10, 7
    %p142 = por %p140, %p141
    %p143 = scmp.ne.s32.totalorder %s135, %s138
    %p144 = scmp.eq.s32.totalorder %s10, 0
    %p145 = por %p143, %p144
    %p146 = scmp.ne.s32.totalorder %s135, %s138
    %p147 = scmp.eq.s32.totalorder %s15, 7
    %p148 = por %p146, %p147
    %p149 = scmp.ne.s32.totalorder %s138, %s139
    %p150 = scmp.eq.s32.totalorder %s15, 0
    %p151 = por %p149, %p150
    %p152 = scmp.ne.s32.totalorder %s138, %s139
    %p153 = scmp.eq.s32.totalorder %s16, 7
    %p154 = por %p152, %p153
    %p156 = scmp.ne.s32.totalorder %s139, %s155
    %p157 = scmp.eq.s32.totalorder %s16, 0
    %p158 = por %p156, %p157
    %p159 = scmp.le.s32.totalorder 1, %s10
    %p160 = scmp.lt.s32.totalorder %s10, 9
    %p161 = pnand %p159, %p160
    %p162 = pneg %p161
    // Predicated region
    $region9: #{llm_decoder_forward.21} parent=5 // pred_check
      _
    $region10: #{llm_decoder_forward.21} parent=5 // pred_check_branch
      %164 = sbr.rel (%p161) target = $region12
    $region11: #{llm_decoder_forward.21} parent=5 // pred_region
      %s165 = ssub.s32 %s10, 1
      // Predicated region
      $region13: #{llm_decoder_forward.21} parent=11 // pred_check
        %p166 = pneg %p48
      $region14: #{llm_decoder_forward.21} parent=11 // pred_check_branch
        %168 = sbr.rel (%p166) target = $region16
      $region15: #{llm_decoder_forward.21} parent=11 // pred_region
        %s169 = smul.u32 2, %s20
        %p170 = scmp.lt.s32.totalorder %s169, 1
        %s171 = scalar_select %p170, %s169, 1
        %s172 = smul.addr %s171, 8
        %s173 = scalar_lea.vmem %s0, %s172
        %s174 = smul.u32 2, %s20
      $region16: #{llm_decoder_forward.21} parent=11 // pred_fallthru
        _
      // Predicated region
      $region17: #{llm_decoder_forward.21} parent=11 // pred_check
        %p175 = pneg %p74
      $region18: #{llm_decoder_forward.21} parent=11 // pred_check_branch
        %177 = sbr.rel (%p175) target = $region20
      $region19: #{llm_decoder_forward.21} parent=11 // pred_region
        %s178 = smul.u32 2, %s20
        %p179 = scmp.lt.s32.totalorder %s178, 1
        %s180 = scalar_select %p179, %s178, 1
        %s181 = smul.addr %s180, 8
        %s182 = scalar_lea.vmem %s1, %s181
        %s183 = smul.u32 2, %s20
      $region20: #{llm_decoder_forward.21} parent=11 // pred_fallthru
        _
      // Predicated region
      $region21: #{llm_decoder_forward.21} parent=11 // pred_check
        %p184 = pneg %p95
      $region22: #{llm_decoder_forward.21} parent=11 // pred_check_branch
        %186 = sbr.rel (%p184) target = $region24
      $region23: #{llm_decoder_forward.21} parent=11 // pred_region
        _
      $region24: #{llm_decoder_forward.21} parent=11 // pred_fallthru
        _
    $region12: #{llm_decoder_forward.21} parent=5 // pred_fallthru
      _
    %p187 = scmp.lt.s32.totalorder %s10, 8
    // Predicated region
    $region25: #{llm_decoder_forward.21} parent=5 // pred_check
      %p188 = pneg %p187
    $region26: #{llm_decoder_forward.21} parent=5 // pred_check_branch
      %190 = sbr.rel (%p188) target = $region28
    $region27: #{llm_decoder_forward.21} parent=5 // pred_region
      // Predicated region
      $region29: #{llm_decoder_forward.21} parent=27 // pred_check
        %p191 = pneg %p117
      $region30: #{llm_decoder_forward.21} parent=27 // pred_check_branch
        %193 = sbr.rel (%p191) target = $region32
      $region31: #{llm_decoder_forward.21} parent=27 // pred_region
        %s194 = smul.u32 2, %s18
        %p195 = scmp.lt.s32.totalorder %s17, 7
        %s196 = scalar_select %p195, %s17, 7
        %p197 = scmp.lt.s32.totalorder %s194, 1
        %s198 = scalar_select %p197, %s194, 1
        %s199 = smul.addr %s196, 2
        %s200 = sadd.s32 %s198, %s199
        %s201 = smul.addr %s200, 4
        %s202 = scalar_lea.vmem %s3, %s201
        %s203 = smul.u32 2, %s18
      $region32: #{llm_decoder_forward.21} parent=27 // pred_fallthru
        _
    $region28: #{llm_decoder_forward.21} parent=5 // pred_fallthru
      _
    %p204 = scmp.le.s32.totalorder 1, %s10
    %p205 = scmp.lt.s32.totalorder %s10, 9
    %p206 = pnand %p204, %p205
    %p207 = pneg %p206
    // Predicated region
    $region33: #{llm_decoder_forward.21} parent=5 // pred_check
      _
    $region34: #{llm_decoder_forward.21} parent=5 // pred_check_branch
      %209 = sbr.rel (%p206) target = $region36
    $region35: #{llm_decoder_forward.21} parent=5 // pred_region
      %s210 = ssub.s32 %s10, 1
      %s211 = smul.u32 2, %s20
      %p212 = scmp.lt.s32.totalorder %s211, 1
      %s213 = scalar_select %p212, %s211, 1
      %s214 = smul.addr %s213, 8
      %s215 = scalar_lea.vmem %s0, %s214
      %p216 = pneg %p48
      %p217 = pneg %p45
      %s218 = smul.u32 2, %s20
      %p219 = scmp.lt.s32.totalorder %s218, 1
      %s220 = scalar_select %p219, %s218, 1
      %s221 = smul.addr %s220, 8
      %s222 = scalar_lea.vmem %s1, %s221
      %p223 = pneg %p74
      %p224 = pneg %p71
      %p225 = pneg %p95
      %p226 = pneg %p92
      %s227 = smul.u32 2, %s20
      %p228 = scmp.lt.s32.totalorder %s19, 7
      %s229 = scalar_select %p228, %s19, 7
      %p230 = scmp.lt.s32.totalorder %s227, 1
      %s231 = scalar_select %p230, %s227, 1
      %s232 = smul.addr %s229, 2
      %s233 = sadd.s32 %s231, %s232
      %s234 = smul.addr %s233, 4
      %s235 = scalar_lea.vmem %s3, %s234
      %p236 = pneg %p123
      %p237 = pneg %p120
      %p238 = pneg %p151
      %p239 = pneg %p148
      %s240 = smul.u32 2, %s20
      %p241 = scmp.lt.s32.totalorder %s19, 7
      %s242 = scalar_select %p241, %s19, 7
      %p243 = scmp.lt.s32.totalorder %s240, 1
      %s244 = scalar_select %p243, %s240, 1
      %s245 = smul.addr %s242, 2
      %s246 = sadd.s32 %s244, %s245
      %s247 = smul.addr %s246, 4
      %s248 = scalar_lea.vmem %s4, %s247
      %s249 = smul.u32 2, %s20
      %p250 = scmp.lt.s32.totalorder %s249, 1
      %s251 = scalar_select %p250, %s249, 1
      %s252 = smul.addr %s251, 8
      %s253 = scalar_lea.vmem %s0, %s252
      %s254 = smul.u32 2, %s20
      %s255 = smul.u32 2, %s20
      %p256 = scmp.lt.s32.totalorder %s255, 1
      %s257 = scalar_select %p256, %s255, 1
      %s258 = smul.addr %s257, 8
      %s259 = scalar_lea.vmem %s1, %s258
      %s260 = smul.u32 2, %s20
      %s261 = smul.u32 2, %s20
      %p262 = scmp.lt.s32.totalorder %s19, 7
      %s263 = scalar_select %p262, %s19, 7
      %p264 = scmp.lt.s32.totalorder %s261, 1
      %s265 = scalar_select %p264, %s261, 1
      %s266 = smul.addr %s263, 2
      %s267 = sadd.s32 %s265, %s266
      %s268 = smul.addr %s267, 4
      %s269 = scalar_lea.vmem %s3, %s268
      %s270 = smul.u32 2, %s20
      %s271 = smul.u32 2, %s20
      %p272 = scmp.lt.s32.totalorder %s19, 7
      %s273 = scalar_select %p272, %s19, 7
      %p274 = scmp.lt.s32.totalorder %s271, 1
      %s275 = scalar_select %p274, %s271, 1
      %s276 = smul.addr %s273, 2
      %s277 = sadd.s32 %s275, %s276
      %s278 = smul.addr %s277, 4
      %s279 = scalar_lea.vmem %s4, %s278
      %s280 = smul.u32 2, %s20
      %v282 = vld [vmem:[%s269] sm:$0xf]
      %v283 = vld [vmem:[%s269 + $0x4] sm:$0xf]
      %v284 = vld [vmem:[%s2] sm:$0xf]
      %v285 = vld [vmem:[%s2 + $0x4] sm:$0xf]
      %v288 = vunpack.c.l.b16 %v282
      %v289 = vunpack.c.l.b16 %v283
      %v290 = vpack.c.b16 %v289, %v288
      %v293 = vunpack.c.l.b16 %v284
      %v294 = vunpack.c.l.b16 %v285
      %v295 = vpack.c.b16 %v294, %v293
      %vm297 = vcmask 130048
      %v299 = vsel %vm297, %v290, 0
      %301 = vmatprep.subr.bf16.mxu0 0
      %302 = vmatpush1.bf16.msra.mxu0 %v295
      %303 = vmatprep.subr.bf16.mxu0 0
      %304 = vmatpush1.bf16.msra.mxu0 0
      %305 = vmatprep.subr.bf16.mxu0 0
      %306 = vmatpush1.bf16.msra.mxu0 0
      %307 = vmatprep.subr.bf16.mxu0 0
      %308 = vmatpush1.bf16.msra.mxu0 0
      %309 = vmatprep.subr.bf16.mxu0 0
      %310 = vmatpush1.bf16.msra.mxu0 0
      %311 = vmatprep.subr.bf16.mxu0 0
      %312 = vmatpush1.bf16.msra.mxu0 0
      %313 = vmatprep.subr.bf16.mxu0 0
      %314 = vmatpush1.bf16.msra.mxu0 0
      %315 = vmatprep.subr.bf16.mxu0 0
      %316 = vmatpush1.bf16.msra.mxu0 0
      %317 = vmatprep.subr.bf16.mxu0 0
      %318 = vmatpush1.bf16.msra.mxu0 0
      %319 = vmatprep.subr.bf16.mxu0 0
      %320 = vmatpush1.bf16.msra.mxu0 0
      %321 = vmatprep.subr.bf16.mxu0 0
      %322 = vmatpush1.bf16.msra.mxu0 0
      %323 = vmatprep.subr.bf16.mxu0 0
      %324 = vmatpush1.bf16.msra.mxu0 0
      %325 = vmatprep.subr.bf16.mxu0 0
      %326 = vmatpush1.bf16.msra.mxu0 0
      %327 = vmatprep.subr.bf16.mxu0 0
      %328 = vmatpush1.bf16.msra.mxu0 0
      %329 = vmatprep.subr.bf16.mxu0 0
      %330 = vmatpush1.bf16.msra.mxu0 0
      %331 = vmatprep.subr.bf16.mxu0 0
      %332 = vmatpush1.bf16.msra.mxu0 0
      %333 = vmatprep.mubr.bf16.mxu0 0
      %334 = vmatmul.mubr.bf16.gmra.mrb[0].mxu0 %v299
      %v335 = vpop.f32.mrb[0].mxu0
      %v336 = vadd.f32 0.0, %v335
      %v337 = vpop.f32.mrb[0].mxu0
      %v338 = vpop.f32.mrb[0].mxu0
      %v339 = vadd.f32 0.0, %v338
      %v340 = vpop.f32.mrb[0].mxu0
      %341 = vdwg.mxu0
      %v342 = vunpack.c.l.bf16 %v282
      %v343 = vunpack.c.l.bf16 %v283
      %v344 = vld [vmem:[%s253] sm:$0xff]
      %v345 = vld [vmem:[%s253 + $0x8] sm:$0xff]
      %v346 = vmul.f32 %v342, %v344
      %v347 = vmul.f32 %v343, %v345
      %v348 = vld [vmem:[%s259] sm:$0xff]
      %v349 = vld [vmem:[%s259 + $0x8] sm:$0xff]
      %v350 = vmul.f32 %v336, %v348
      %v351 = vmul.f32 %v339, %v349
      %v352 = vadd.f32 %v346, %v350
      %v353 = vadd.f32 %v347, %v351
      %v354 = vmul.f32 %v352, 0.25
      %v355 = vmul.f32 %v353, 0.25
      %v356 = vpack.c.bf16 %v355, %v354
      %v358 = vunpack.c.l.b16 %v356
      %v359 = vunpack.c.h.b16 %v356
      %v360 = vpack.c.b16 %v358, %v358
      %v361 = vpack.c.b16 %v359, %v359
      %vm364 = vcmask 125952
      %365 = vst.msk [vmem:[%s279] sm:$0xf] %vm364, %v360
      %366 = vst.msk [vmem:[%s279 + $0x4] sm:$0xf] %vm364, %v361
      %s367 = smul.u32 2, %s20
      %p368 = scmp.lt.s32.totalorder %s19, 7
      %s369 = scalar_select %p368, %s19, 7
      %p370 = scmp.lt.s32.totalorder %s367, 1
      %s371 = scalar_select %p370, %s367, 1
      %s372 = smul.addr %s369, 2
      %s373 = sadd.s32 %s371, %s372
      %s374 = smul.addr %s373, 4
      %s375 = scalar_lea.vmem %s4, %s374
      // Predicated region
      $region37: #{llm_decoder_forward.21} parent=35 // pred_check
        %p376 = pneg %p148
      $region38: #{llm_decoder_forward.21} parent=35 // pred_check_branch
        %378 = sbr.rel (%p376) target = $region40
      $region39: #{llm_decoder_forward.21} parent=35 // pred_region
        %s379 = smul.u32 2, %s20
      $region40: #{llm_decoder_forward.21} parent=35 // pred_fallthru
        _
    $region36: #{llm_decoder_forward.21} parent=5 // pred_fallthru
      _
    %p380 = scmp.le.s32.totalorder 2, %s10
    // Predicated region
    $region41: #{llm_decoder_forward.21} parent=5 // pred_check
      %p381 = pneg %p380
    $region42: #{llm_decoder_forward.21} parent=5 // pred_check_branch
      %383 = sbr.rel (%p381) target = $region44
    $region43: #{llm_decoder_forward.21} parent=5 // pred_region
      %s384 = ssub.s32 %s10, 2
      // Predicated region
      $region45: #{llm_decoder_forward.21} parent=43 // pred_check
        %p385 = pneg %p154
      $region46: #{llm_decoder_forward.21} parent=43 // pred_check_branch
        %387 = sbr.rel (%p385) target = $region48
      $region47: #{llm_decoder_forward.21} parent=43 // pred_region
        %s388 = smul.u32 2, %s22
        %p389 = scmp.lt.s32.totalorder %s21, 7
        %s390 = scalar_select %p389, %s21, 7
        %p391 = scmp.lt.s32.totalorder %s388, 1
        %s392 = scalar_select %p391, %s388, 1
        %s393 = smul.addr %s390, 2
        %s394 = sadd.s32 %s392, %s393
        %s395 = smul.addr %s394, 4
        %s396 = scalar_lea.vmem %s4, %s395
      $region48: #{llm_decoder_forward.21} parent=43 // pred_fallthru
        _
    $region44: #{llm_decoder_forward.21} parent=5 // pred_fallthru
      _
  $region6: #{llm_decoder_forward.21} parent=0 // loop_footer
    %s14 = sadd.s32 1, %s10
  $region7: #{llm_decoder_forward.21} parent=0 // loop_footer_branch
    %9 = sbr.rel target = $region3
  $region8: #{llm_decoder_forward.21} parent=0 // loop_exit
    _

// kernel: llm_decoder_forward.23
$region0: #{llm_decoder_forward.23}
  #allocation0 [shape = 'u32[]', space=smem, size = 0x4, offset = 0x4, fixed_abs, tag = 'smem constant byte address 0x4 - core index']
  #allocation1 [shape = 'u32[144,128]{1,0:T(1,128)}', space=vmem, size = 0x12000, scoped, tag = 'internal scratch']
  #allocation2 [shape = 'f32[16,1]{1,0:T(8,128)}', space=vmem, size = 0x2000, scoped, tag = 'scratch operand']
  #allocation3 [shape = 'f32[16,1]{1,0:T(8,128)}', space=vmem, size = 0x2000, scoped, tag = 'scratch operand']
  #allocation4 [shape = 'f32[16,16]{1,0:T(8,128)}', space=vmem, size = 0x2000, scoped, tag = 'scratch operand']
  %s0 = inlined_call_operand.vmem [shape: bf16[8,16,16], index: 0, kind: input, shape index: {}]
  %s1 = inlined_call_operand.vmem [shape: bf16[8,16,16], index: 1, kind: input, shape index: {}]
  %s2 = inlined_call_operand.vmem [shape: bf16[8,16,16], index: 2, kind: input, shape index: {}]
  %s3 = inlined_call_operand.vmem [shape: bf16[8,16,16], index: 3, kind: output, shape index: {}]
  %s4 = sld [smem:[#allocation0]]
  $region57: #{llm_decoder_forward.23} parent=0
    _
  %s6 = ssub.s32 1, %s4
  %s7 = scalar_select 0, %s6, %s4
  loop: start=0, step=1, limit=10
  $region2: #{llm_decoder_forward.23} parent=0 // loop_pre_header
    _
  $region3: #{llm_decoder_forward.23} parent=0 // loop_header
    %s9 = sphi 0, %s13
    %p10 = scmp.ge.s32.totalorder %s9, 10
    %s16 = sphi 0, %s35
    %s17 = sphi 0, %s31
    %s18 = sphi 0, %s27
    %s19 = sphi 0, %s16
    %s20 = sphi 0, %s17
    %s21 = sphi 0, %s18
    %s22 = sphi 0, %s19
    %s23 = sphi 0, %s20
    %s24 = sphi 0, %s21
    %s40 = sphi 0, %s42
    %s43 = sphi 0, %s40
    %s44 = sphi 0, %s43
    %s60 = sphi 0, %s44
    %s68 = sphi 0, %s70
    %s71 = sphi 0, %s68
    %s72 = sphi 0, %s71
    %s88 = sphi 0, %s72
    %s96 = sphi 0, %s98
    %s99 = sphi 0, %s96
    %s100 = sphi 0, %s99
    %s116 = sphi 0, %s100
    %s124 = sphi 0, %s126
    %s127 = sphi 0, %s124
    %s128 = sphi 0, %s127
    %s144 = sphi 0, %s128
  $region4: #{llm_decoder_forward.23} parent=0 // loop_header_branch
    %12 = sbr.rel (%p10) target = $region8
  $region5: #{llm_decoder_forward.23} parent=0 // loop_body
    %s14 = ssub.s32 %s9, 1
    %s15 = ssub.s32 %s9, 2
    %s25 = sadd.s32 1, %s18
    %p26 = scmp.ge.s32.totalorder %s25, 1
    %s27 = scalar_select %p26, 0, %s25
    %s28 = sadd.s32 1, %s17
    %s29 = scalar_select %p26, %s28, %s17
    %p30 = scmp.ge.s32.totalorder %s29, 1
    %s31 = scalar_select %p30, 0, %s29
    %s32 = sadd.s32 1, %s16
    %s33 = scalar_select %p30, %s32, %s16
    %p34 = scmp.ge.s32.totalorder %s33, 8
    %s35 = scalar_select %p34, 0, %s33
    %s36 = ssub.s32 %s16, %s35
    %s37 = ssub.s32 %s17, %s31
    %s38 = sor.u32 %s36, %s37
    %p39 = scmp.eq.s32.totalorder %s38, 0
    %s41 = sadd.s32 %s40, 1
    %s42 = scalar_select %p39, %s40, %s41
    %p45 = pneg %p39
    %p46 = scmp.eq.s32.totalorder %s9, 7
    %p47 = por %p45, %p46
    %p48 = scmp.ne.s32.totalorder %s40, %s43
    %p49 = scmp.eq.s32.totalorder %s9, 0
    %p50 = por %p48, %p49
    %p51 = scmp.ne.s32.totalorder %s40, %s43
    %p52 = scmp.eq.s32.totalorder %s14, 7
    %p53 = por %p51, %p52
    %p54 = scmp.ne.s32.totalorder %s43, %s44
    %p55 = scmp.eq.s32.totalorder %s14, 0
    %p56 = por %p54, %p55
    %p57 = scmp.ne.s32.totalorder %s43, %s44
    %p58 = scmp.eq.s32.totalorder %s15, 7
    %p59 = por %p57, %p58
    %p61 = scmp.ne.s32.totalorder %s44, %s60
    %p62 = scmp.eq.s32.totalorder %s15, 0
    %p63 = por %p61, %p62
    %s64 = ssub.s32 %s16, %s35
    %s65 = ssub.s32 %s18, %s27
    %s66 = sor.u32 %s64, %s65
    %p67 = scmp.eq.s32.totalorder %s66, 0
    %s69 = sadd.s32 %s68, 1
    %s70 = scalar_select %p67, %s68, %s69
    %p73 = pneg %p67
    %p74 = scmp.eq.s32.totalorder %s9, 7
    %p75 = por %p73, %p74
    %p76 = scmp.ne.s32.totalorder %s68, %s71
    %p77 = scmp.eq.s32.totalorder %s9, 0
    %p78 = por %p76, %p77
    %p79 = scmp.ne.s32.totalorder %s68, %s71
    %p80 = scmp.eq.s32.totalorder %s14, 7
    %p81 = por %p79, %p80
    %p82 = scmp.ne.s32.totalorder %s71, %s72
    %p83 = scmp.eq.s32.totalorder %s14, 0
    %p84 = por %p82, %p83
    %p85 = scmp.ne.s32.totalorder %s71, %s72
    %p86 = scmp.eq.s32.totalorder %s15, 7
    %p87 = por %p85, %p86
    %p89 = scmp.ne.s32.totalorder %s72, %s88
    %p90 = scmp.eq.s32.totalorder %s15, 0
    %p91 = por %p89, %p90
    %s92 = ssub.s32 %s16, %s35
    %s93 = ssub.s32 %s18, %s27
    %s94 = sor.u32 %s92, %s93
    %p95 = scmp.eq.s32.totalorder %s94, 0
    %s97 = sadd.s32 %s96, 1
    %s98 = scalar_select %p95, %s96, %s97
    %p101 = pneg %p95
    %p102 = scmp.eq.s32.totalorder %s9, 7
    %p103 = por %p101, %p102
    %p104 = scmp.ne.s32.totalorder %s96, %s99
    %p105 = scmp.eq.s32.totalorder %s9, 0
    %p106 = por %p104, %p105
    %p107 = scmp.ne.s32.totalorder %s96, %s99
    %p108 = scmp.eq.s32.totalorder %s14, 7
    %p109 = por %p107, %p108
    %p110 = scmp.ne.s32.totalorder %s99, %s100
    %p111 = scmp.eq.s32.totalorder %s14, 0
    %p112 = por %p110, %p111
    %p113 = scmp.ne.s32.totalorder %s99, %s100
    %p114 = scmp.eq.s32.totalorder %s15, 7
    %p115 = por %p113, %p114
    %p117 = scmp.ne.s32.totalorder %s100, %s116
    %p118 = scmp.eq.s32.totalorder %s15, 0
    %p119 = por %p117, %p118
    %s120 = ssub.s32 %s16, %s35
    %s121 = ssub.s32 %s17, %s31
    %s122 = sor.u32 %s120, %s121
    %p123 = scmp.eq.s32.totalorder %s122, 0
    %s125 = sadd.s32 %s124, 1
    %s126 = scalar_select %p123, %s124, %s125
    %p129 = pneg %p123
    %p130 = scmp.eq.s32.totalorder %s9, 7
    %p131 = por %p129, %p130
    %p132 = scmp.ne.s32.totalorder %s124, %s127
    %p133 = scmp.eq.s32.totalorder %s9, 0
    %p134 = por %p132, %p133
    %p135 = scmp.ne.s32.totalorder %s124, %s127
    %p136 = scmp.eq.s32.totalorder %s14, 7
    %p137 = por %p135, %p136
    %p138 = scmp.ne.s32.totalorder %s127, %s128
    %p139 = scmp.eq.s32.totalorder %s14, 0
    %p140 = por %p138, %p139
    %p141 = scmp.ne.s32.totalorder %s127, %s128
    %p142 = scmp.eq.s32.totalorder %s15, 7
    %p143 = por %p141, %p142
    %p145 = scmp.ne.s32.totalorder %s128, %s144
    %p146 = scmp.eq.s32.totalorder %s15, 0
    %p147 = por %p145, %p146
    %p148 = scmp.le.s32.totalorder 1, %s9
    %p149 = scmp.lt.s32.totalorder %s9, 9
    %p150 = pnand %p148, %p149
    %p151 = pneg %p150
    // Predicated region
    $region9: #{llm_decoder_forward.23} parent=5 // pred_check
      _
    $region10: #{llm_decoder_forward.23} parent=5 // pred_check_branch
      %153 = sbr.rel (%p150) target = $region12
    $region11: #{llm_decoder_forward.23} parent=5 // pred_region
      %s154 = ssub.s32 %s9, 1
    $region12: #{llm_decoder_forward.23} parent=5 // pred_fallthru
      _
    %p155 = scmp.lt.s32.totalorder %s9, 8
    // Predicated region
    $region13: #{llm_decoder_forward.23} parent=5 // pred_check
      %p156 = pneg %p155
    $region14: #{llm_decoder_forward.23} parent=5 // pred_check_branch
      %158 = sbr.rel (%p156) target = $region16
    $region15: #{llm_decoder_forward.23} parent=5 // pred_region
      // Predicated region
      $region17: #{llm_decoder_forward.23} parent=15 // pred_check
        %p159 = pneg %p50
      $region18: #{llm_decoder_forward.23} parent=15 // pred_check_branch
        %161 = sbr.rel (%p159) target = $region20
      $region19: #{llm_decoder_forward.23} parent=15 // pred_region
        %s162 = smul.u32 2, %s17
        %p163 = scmp.lt.s32.totalorder %s16, 7
        %s164 = scalar_select %p163, %s16, 7
        %p165 = scmp.lt.s32.totalorder %s162, 1
        %s166 = scalar_select %p165, %s162, 1
        %s167 = smul.addr %s164, 2
        %s168 = sadd.s32 %s166, %s167
        %s169 = smul.addr %s168, 4
        %s170 = scalar_lea.vmem %s0, %s169
        %s171 = smul.u32 2, %s17
      $region20: #{llm_decoder_forward.23} parent=15 // pred_fallthru
        _
      // Predicated region
      $region21: #{llm_decoder_forward.23} parent=15 // pred_check
        %p172 = pneg %p78
      $region22: #{llm_decoder_forward.23} parent=15 // pred_check_branch
        %174 = sbr.rel (%p172) target = $region24
      $region23: #{llm_decoder_forward.23} parent=15 // pred_region
        %s175 = smul.u32 2, %s18
        %p176 = scmp.lt.s32.totalorder %s16, 7
        %s177 = scalar_select %p176, %s16, 7
        %p178 = scmp.lt.s32.totalorder %s175, 1
        %s179 = scalar_select %p178, %s175, 1
        %s180 = smul.addr %s177, 2
        %s181 = sadd.s32 %s179, %s180
        %s182 = smul.addr %s181, 4
        %s183 = scalar_lea.vmem %s1, %s182
        %s184 = smul.u32 2, %s18
      $region24: #{llm_decoder_forward.23} parent=15 // pred_fallthru
        _
      // Predicated region
      $region25: #{llm_decoder_forward.23} parent=15 // pred_check
        %p185 = pneg %p106
      $region26: #{llm_decoder_forward.23} parent=15 // pred_check_branch
        %187 = sbr.rel (%p185) target = $region28
      $region27: #{llm_decoder_forward.23} parent=15 // pred_region
        %s188 = smul.u32 2, %s18
        %p189 = scmp.lt.s32.totalorder %s16, 7
        %s190 = scalar_select %p189, %s16, 7
        %p191 = scmp.lt.s32.totalorder %s188, 1
        %s192 = scalar_select %p191, %s188, 1
        %s193 = smul.addr %s190, 2
        %s194 = sadd.s32 %s192, %s193
        %s195 = smul.addr %s194, 4
        %s196 = scalar_lea.vmem %s2, %s195
        %s197 = smul.u32 2, %s18
      $region28: #{llm_decoder_forward.23} parent=15 // pred_fallthru
        _
    $region16: #{llm_decoder_forward.23} parent=5 // pred_fallthru
      _
    %p198 = scmp.le.s32.totalorder 1, %s9
    %p199 = scmp.lt.s32.totalorder %s9, 9
    %p200 = pnand %p198, %p199
    %p201 = pneg %p200
    // Predicated region
    $region29: #{llm_decoder_forward.23} parent=5 // pred_check
      _
    $region30: #{llm_decoder_forward.23} parent=5 // pred_check_branch
      %203 = sbr.rel (%p200) target = $region32
    $region31: #{llm_decoder_forward.23} parent=5 // pred_region
      %s204 = ssub.s32 %s9, 1
      %s205 = smul.u32 2, %s20
      %p206 = scmp.lt.s32.totalorder %s19, 7
      %s207 = scalar_select %p206, %s19, 7
      %p208 = scmp.lt.s32.totalorder %s205, 1
      %s209 = scalar_select %p208, %s205, 1
      %s210 = smul.addr %s207, 2
      %s211 = sadd.s32 %s209, %s210
      %s212 = smul.addr %s211, 4
      %s213 = scalar_lea.vmem %s0, %s212
      %p214 = pneg %p56
      %p215 = pneg %p53
      %s216 = smul.u32 2, %s21
      %p217 = scmp.lt.s32.totalorder %s19, 7
      %s218 = scalar_select %p217, %s19, 7
      %p219 = scmp.lt.s32.totalorder %s216, 1
      %s220 = scalar_select %p219, %s216, 1
      %s221 = smul.addr %s218, 2
      %s222 = sadd.s32 %s220, %s221
      %s223 = smul.addr %s222, 4
      %s224 = scalar_lea.vmem %s1, %s223
      %p225 = pneg %p84
      %p226 = pneg %p81
      %s227 = smul.u32 2, %s21
      %p228 = scmp.lt.s32.totalorder %s19, 7
      %s229 = scalar_select %p228, %s19, 7
      %p230 = scmp.lt.s32.totalorder %s227, 1
      %s231 = scalar_select %p230, %s227, 1
      %s232 = smul.addr %s229, 2
      %s233 = sadd.s32 %s231, %s232
      %s234 = smul.addr %s233, 4
      %s235 = scalar_lea.vmem %s2, %s234
      %p236 = pneg %p112
      %p237 = pneg %p109
      %p238 = pneg %p140
      %p239 = pneg %p137
      %s240 = smul.u32 2, %s20
      %p241 = scmp.lt.s32.totalorder %s19, 7
      %s242 = scalar_select %p241, %s19, 7
      %p243 = scmp.lt.s32.totalorder %s240, 1
      %s244 = scalar_select %p243, %s240, 1
      %s245 = smul.addr %s242, 2
      %s246 = sadd.s32 %s244, %s245
      %s247 = smul.addr %s246, 4
      %s248 = scalar_lea.vmem %s3, %s247
      %s249 = smul.u32 2, %s20
      %p250 = scmp.lt.s32.totalorder %s19, 7
      %s251 = scalar_select %p250, %s19, 7
      %p252 = scmp.lt.s32.totalorder %s249, 1
      %s253 = scalar_select %p252, %s249, 1
      %s254 = smul.addr %s251, 2
      %s255 = sadd.s32 %s253, %s254
      %s256 = smul.addr %s255, 4
      %s257 = scalar_lea.vmem %s0, %s256
      %s258 = smul.u32 2, %s20
      %s259 = smul.u32 2, %s21
      %p260 = scmp.lt.s32.totalorder %s19, 7
      %s261 = scalar_select %p260, %s19, 7
      %p262 = scmp.lt.s32.totalorder %s259, 1
      %s263 = scalar_select %p262, %s259, 1
      %s264 = smul.addr %s261, 2
      %s265 = sadd.s32 %s263, %s264
      %s266 = smul.addr %s265, 4
      %s267 = scalar_lea.vmem %s1, %s266
      %s268 = smul.u32 2, %s21
      %s269 = smul.u32 2, %s21
      %p270 = scmp.lt.s32.totalorder %s19, 7
      %s271 = scalar_select %p270, %s19, 7
      %p272 = scmp.lt.s32.totalorder %s269, 1
      %s273 = scalar_select %p272, %s269, 1
      %s274 = smul.addr %s271, 2
      %s275 = sadd.s32 %s273, %s274
      %s276 = smul.addr %s275, 4
      %s277 = scalar_lea.vmem %s2, %s276
      %s278 = smul.u32 2, %s21
      %s279 = smul.u32 2, %s20
      %p280 = scmp.lt.s32.totalorder %s19, 7
      %s281 = scalar_select %p280, %s19, 7
      %p282 = scmp.lt.s32.totalorder %s279, 1
      %s283 = scalar_select %p282, %s279, 1
      %s284 = smul.addr %s281, 2
      %s285 = sadd.s32 %s283, %s284
      %s286 = smul.addr %s285, 4
      %s287 = scalar_lea.vmem %s3, %s286
      %s288 = smul.u32 2, %s20
      %p290 = scmp.eq.s32.totalorder %s21, 0
      // Predicated region
      $region33: #{llm_decoder_forward.23} parent=31 // pred_check
        %p291 = pneg %p290
      $region34: #{llm_decoder_forward.23} parent=31 // pred_check_branch
        %293 = sbr.rel (%p291) target = $region36
      $region35: #{llm_decoder_forward.23} parent=31 // pred_region
        %vm294 = vcmask 7168
        %295 = vst.msk [vmem:[#allocation2] sm:$0xff] %vm294, -inf
        %296 = vst.msk [vmem:[#allocation2 + $0x8] sm:$0xff] %vm294, -inf
        %297 = vst.msk [vmem:[#allocation3] sm:$0xff] %vm294, 0.0
        %298 = vst.msk [vmem:[#allocation3 + $0x8] sm:$0xff] %vm294, 0.0
        %vm299 = vcmask 130048
        %300 = vst.msk [vmem:[#allocation4] sm:$0xff] %vm299, 0.0
        %301 = vst.msk [vmem:[#allocation4 + $0x8] sm:$0xff] %vm299, 0.0
      $region36: #{llm_decoder_forward.23} parent=31 // pred_fallthru
        _
      %s302 = smul.u32 %s21, 16
      %s303 = sadd.s32 %s20, 1
      %s304 = smul.u32 %s303, 16
      %p305 = scmp.lt.s32.totalorder %s302, %s304
      // Predicated region
      $region37: #{llm_decoder_forward.23} parent=31 // pred_check
        %p306 = pneg %p305
      $region38: #{llm_decoder_forward.23} parent=31 // pred_check_branch
        %308 = sbr.rel (%p306) target = $region40
      $region39: #{llm_decoder_forward.23} parent=31 // pred_region
        %v309 = vld [vmem:[%s257] sm:$0xf]
        %v310 = vld [vmem:[%s257 + $0x4] sm:$0xf]
        %v311 = vld [vmem:[%s267] sm:$0xf]
        %v312 = vld [vmem:[%s267 + $0x4] sm:$0xf]
        %v315 = vunpack.c.l.b16 %v309
        %v316 = vunpack.c.l.b16 %v310
        %v317 = vpack.c.b16 %v316, %v315
        %v320 = vunpack.c.l.b16 %v311
        %v321 = vunpack.c.l.b16 %v312
        %v322 = vpack.c.b16 %v321, %v320
        %vm323 = vcmask 130048
        %v325 = vsel %vm323, %v317, 0
        %v328 = vsel %vm323, %v322, 0
        %330 = vmatprep.subr.bf16.mxu0 0
        %331 = vmatpush1.bf16.xpose.msra.mxu0 %v328
        %332 = vmatprep.subr.bf16.mxu0 0
        %333 = vmatpush1.bf16.xpose.msra.mxu0 0
        %334 = vmatprep.subr.bf16.mxu0 0
        %335 = vmatpush1.bf16.xpose.msra.mxu0 0
        %336 = vmatprep.subr.bf16.mxu0 0
        %337 = vmatpush1.bf16.xpose.msra.mxu0 0
        %338 = vmatprep.subr.bf16.mxu0 0
        %339 = vmatpush1.bf16.xpose.msra.mxu0 0
        %340 = vmatprep.subr.bf16.mxu0 0
        %341 = vmatpush1.bf16.xpose.msra.mxu0 0
        %342 = vmatprep.subr.bf16.mxu0 0
        %343 = vmatpush1.bf16.xpose.msra.mxu0 0
        %344 = vmatprep.subr.bf16.mxu0 0
        %345 = vmatpush1.bf16.xpose.msra.mxu0 0
        %346 = vmatprep.subr.bf16.mxu0 0
        %347 = vmatpush1.bf16.xpose.msra.mxu0 0
        %348 = vmatprep.subr.bf16.mxu0 0
        %349 = vmatpush1.bf16.xpose.msra.mxu0 0
        %350 = vmatprep.subr.bf16.mxu0 0
        %351 = vmatpush1.bf16.xpose.msra.mxu0 0
        %352 = vmatprep.subr.bf16.mxu0 0
        %353 = vmatpush1.bf16.xpose.msra.mxu0 0
        %354 = vmatprep.subr.bf16.mxu0 0
        %355 = vmatpush1.bf16.xpose.msra.mxu0 0
        %356 = vmatprep.subr.bf16.mxu0 0
        %357 = vmatpush1.bf16.xpose.msra.mxu0 0
        %358 = vmatprep.subr.bf16.mxu0 0
        %359 = vmatpush1.bf16.xpose.msra.mxu0 0
        %360 = vmatprep.subr.bf16.mxu0 0
        %361 = vmatpush1.bf16.xpose.msra.mxu0 0
        %362 = vmatprep.mubr.bf16.mxu0 0
        %363 = vmatmul.mubr.bf16.gmra.mrb[0].mxu0 %v325
        %v364 = vpop.f32.mrb[0].mxu0
        %v365 = vadd.f32 0.0, %v364
        %v366 = vpop.f32.mrb[0].mxu0
        %v367 = vpop.f32.mrb[0].mxu0
        %v368 = vadd.f32 0.0, %v367
        %v369 = vpop.f32.mrb[0].mxu0
        %370 = vdwg.mxu0
        %s371 = smul.u32 %s20, 16
        %v372 = vlaneseq
        %v373 = vshrl.u32 %v372, 7
        %v374 = vadd.s32 %v373, 8
        %v375 = vstv %s371
        %v376 = vadd.s32 %v375, %v373
        %v377 = vadd.s32 %v375, %v374
        %v378 = vlaneseq
        %v379 = vand.u32 %v378, 127
        %v380 = vstv %s302
        %v381 = vadd.s32 %v380, %v379
        %vm382 = vcmp.le.s32.totalorder %v381, %v376
        %vm383 = vcmp.le.s32.totalorder %v381, %v377
        %v384 = vsel %vm382, %v365, -1e+30
        %v385 = vsel %vm383, %v368, -1e+30
        %v386 = vsel %vm323, %v384, -inf
        %387 = vmax.xlane.f32.xlu0 %v386
        %v388 = vpop.xlane.xlu0 %387
        %v389 = vsel %vm323, %v385, -inf
        %390 = vmax.xlane.f32.xlu0 %v389
        %v391 = vpop.xlane.xlu0 %390
        %v392 = vld [vmem:[#allocation2] sm:$0xff]
        %v393 = vld [vmem:[#allocation2 + $0x8] sm:$0xff]
        %v394 = vmax.f32 %v392, %v388
        %v395 = vmax.f32 %v393, %v391
        %v396 = vsub.f32 %v392, %v394
        %v397 = vsub.f32 %v393, %v395
        %v398 = vmul.f32 %v396, 1.442695
        %v399 = vpow.pop %v398
        %v400 = vmul.f32 %v397, 1.442695
        %v401 = vpow.pop %v400
        %403 = vset.pattern.permute.xlu0 0
        %404 = vperm.xlu0 %403, %v394
        %v405 = vpop.permute.xlu0 %404
        %408 = vset.pattern.permute.xlu0 0
        %409 = vperm.xlu0 %408, %v395
        %v410 = vpop.permute.xlu0 %409
        %v412 = vsub.f32 %v384, %v405
        %v413 = vsub.f32 %v385, %v410
        %v414 = vmul.f32 %v412, 1.442695
        %v415 = vpow.pop %v414
        %v416 = vmul.f32 %v413, 1.442695
        %v417 = vpow.pop %v416
        %v418 = vld [vmem:[#allocation3] sm:$0xff]
        %v419 = vld [vmem:[#allocation3 + $0x8] sm:$0xff]
        %v420 = vmul.f32 %v399, %v418
        %v421 = vmul.f32 %v401, %v419
        %v422 = vsel %vm323, %v415, 0.0
        %423 = vadd.xlane.f32.xlu0 %v422
        %v424 = vpop.xlane.xlu0 %423
        %v425 = vsel %vm323, %v417, 0.0
        %426 = vadd.xlane.f32.xlu0 %v425
        %v427 = vpop.xlane.xlu0 %426
        %v428 = vadd.f32 %v420, %v424
        %v429 = vadd.f32 %v421, %v427
        %vm430 = vcmask 7168
        %431 = vst.msk [vmem:[#allocation3] sm:$0xff] %vm430, %v428
        %432 = vst.msk [vmem:[#allocation3 + $0x8] sm:$0xff] %vm430, %v429
        %v433 = vld [vmem:[#allocation4] sm:$0xff]
        %v434 = vld [vmem:[#allocation4 + $0x8] sm:$0xff]
        %436 = vset.pattern.permute.xlu0 0
        %437 = vperm.xlu0 %436, %v399
        %v438 = vpop.permute.xlu0 %437
        %441 = vset.pattern.permute.xlu0 0
        %442 = vperm.xlu0 %441, %v401
        %v443 = vpop.permute.xlu0 %442
        %v445 = vmul.f32 %v438, %v433
        %v446 = vmul.f32 %v443, %v434
        %v447 = vpack.c.bf16 %v417, %v415
        %v448 = vld [vmem:[%s277] sm:$0xf]
        %v449 = vld [vmem:[%s277 + $0x4] sm:$0xf]
        %v452 = vunpack.c.l.b16 %v448
        %v453 = vunpack.c.l.b16 %v449
        %v454 = vpack.c.b16 %v453, %v452
        %v457 = vsel %vm323, %v447, 0
        %459 = vmatprep.subr.bf16.mxu0 0
        %460 = vmatpush1.bf16.msra.mxu0 %v454
        %461 = vmatprep.subr.bf16.mxu0 0
        %462 = vmatpush1.bf16.msra.mxu0 0
        %463 = vmatprep.subr.bf16.mxu0 0
        %464 = vmatpush1.bf16.msra.mxu0 0
        %465 = vmatprep.subr.bf16.mxu0 0
        %466 = vmatpush1.bf16.msra.mxu0 0
        %467 = vmatprep.subr.bf16.mxu0 0
        %468 = vmatpush1.bf16.msra.mxu0 0
        %469 = vmatprep.subr.bf16.mxu0 0
        %470 = vmatpush1.bf16.msra.mxu0 0
        %471 = vmatprep.subr.bf16.mxu0 0
        %472 = vmatpush1.bf16.msra.mxu0 0
        %473 = vmatprep.subr.bf16.mxu0 0
        %474 = vmatpush1.bf16.msra.mxu0 0
        %475 = vmatprep.subr.bf16.mxu0 0
        %476 = vmatpush1.bf16.msra.mxu0 0
        %477 = vmatprep.subr.bf16.mxu0 0
        %478 = vmatpush1.bf16.msra.mxu0 0
        %479 = vmatprep.subr.bf16.mxu0 0
        %480 = vmatpush1.bf16.msra.mxu0 0
        %481 = vmatprep.subr.bf16.mxu0 0
        %482 = vmatpush1.bf16.msra.mxu0 0
        %483 = vmatprep.subr.bf16.mxu0 0
        %484 = vmatpush1.bf16.msra.mxu0 0
        %485 = vmatprep.subr.bf16.mxu0 0
        %486 = vmatpush1.bf16.msra.mxu0 0
        %487 = vmatprep.subr.bf16.mxu0 0
        %488 = vmatpush1.bf16.msra.mxu0 0
        %489 = vmatprep.subr.bf16.mxu0 0
        %490 = vmatpush1.bf16.msra.mxu0 0
        %491 = vmatprep.mubr.bf16.mxu0 0
        %492 = vmatmul.mubr.bf16.gmra.mrb[0].mxu0 %v457
        %v493 = vpop.f32.mrb[0].mxu0
        %v494 = vadd.f32 0.0, %v493
        %v495 = vpop.f32.mrb[0].mxu0
        %v496 = vpop.f32.mrb[0].mxu0
        %v497 = vadd.f32 0.0, %v496
        %v498 = vpop.f32.mrb[0].mxu0
        %499 = vdwg.mxu0
        %v500 = vadd.f32 %v445, %v494
        %v501 = vadd.f32 %v446, %v497
        %502 = vst.msk [vmem:[#allocation4] sm:$0xff] %vm323, %v500
        %503 = vst.msk [vmem:[#allocation4 + $0x8] sm:$0xff] %vm323, %v501
        %504 = vst.msk [vmem:[#allocation2] sm:$0xff] %vm430, %v394
        %505 = vst.msk [vmem:[#allocation2 + $0x8] sm:$0xff] %vm430, %v395
      $region40: #{llm_decoder_forward.23} parent=31 // pred_fallthru
        _
      // Predicated region
      $region41: #{llm_decoder_forward.23} parent=31 // pred_check
        %p506 = pneg %p290
      $region42: #{llm_decoder_forward.23} parent=31 // pred_check_branch
        %508 = sbr.rel (%p506) target = $region44
      $region43: #{llm_decoder_forward.23} parent=31 // pred_region
        %v509 = vld [vmem:[#allocation4] sm:$0xff]
        %v510 = vld [vmem:[#allocation4 + $0x8] sm:$0xff]
        %v511 = vld [vmem:[#allocation3] sm:$0xff]
        %v512 = vld [vmem:[#allocation3 + $0x8] sm:$0xff]
        %v513 = vrcp.pop %v511
        %v514 = vrcp.pop %v512
        %516 = vset.pattern.permute.xlu0 0
        %517 = vperm.xlu0 %516, %v513
        %v518 = vpop.permute.xlu0 %517
        %521 = vset.pattern.permute.xlu0 0
        %522 = vperm.xlu0 %521, %v514
        %v523 = vpop.permute.xlu0 %522
        %v525 = vmul.f32 %v509, %v518
        %v526 = vmul.f32 %v510, %v523
        %v527 = vpack.c.bf16 %v526, %v525
        %v529 = vunpack.c.l.b16 %v527
        %v530 = vunpack.c.h.b16 %v527
        %v531 = vpack.c.b16 %v529, %v529
        %v532 = vpack.c.b16 %v530, %v530
        %vm535 = vcmask 125952
        %536 = vst.msk [vmem:[%s287] sm:$0xf] %vm535, %v531
        %537 = vst.msk [vmem:[%s287 + $0x4] sm:$0xf] %vm535, %v532
      $region44: #{llm_decoder_forward.23} parent=31 // pred_fallthru
        _
      %s538 = smul.u32 2, %s20
      %p539 = scmp.lt.s32.totalorder %s19, 7
      %s540 = scalar_select %p539, %s19, 7
      %p541 = scmp.lt.s32.totalorder %s538, 1
      %s542 = scalar_select %p541, %s538, 1
      %s543 = smul.addr %s540, 2
      %s544 = sadd.s32 %s542, %s543
      %s545 = smul.addr %s544, 4
      %s546 = scalar_lea.vmem %s3, %s545
      // Predicated region
      $region45: #{llm_decoder_forward.23} parent=31 // pred_check
        %p547 = pneg %p137
      $region46: #{llm_decoder_forward.23} parent=31 // pred_check_branch
        %549 = sbr.rel (%p547) target = $region48
      $region47: #{llm_decoder_forward.23} parent=31 // pred_region
        %s550 = smul.u32 2, %s20
      $region48: #{llm_decoder_forward.23} parent=31 // pred_fallthru
        _
    $region32: #{llm_decoder_forward.23} parent=5 // pred_fallthru
      _
    %p551 = scmp.le.s32.totalorder 2, %s9
    // Predicated region
    $region49: #{llm_decoder_forward.23} parent=5 // pred_check
      %p552 = pneg %p551
    $region50: #{llm_decoder_forward.23} parent=5 // pred_check_branch
      %554 = sbr.rel (%p552) target = $region52
    $region51: #{llm_decoder_forward.23} parent=5 // pred_region
      %s555 = ssub.s32 %s9, 2
      // Predicated region
      $region53: #{llm_decoder_forward.23} parent=51 // pred_check
        %p556 = pneg %p143
      $region54: #{llm_decoder_forward.23} parent=51 // pred_check_branch
        %558 = sbr.rel (%p556) target = $region56
      $region55: #{llm_decoder_forward.23} parent=51 // pred_region
        %s559 = smul.u32 2, %s23
        %p560 = scmp.lt.s32.totalorder %s22, 7
        %s561 = scalar_select %p560, %s22, 7
        %p562 = scmp.lt.s32.totalorder %s559, 1
        %s563 = scalar_select %p562, %s559, 1
        %s564 = smul.addr %s561, 2
        %s565 = sadd.s32 %s563, %s564
        %s566 = smul.addr %s565, 4
        %s567 = scalar_lea.vmem %s3, %s566
      $region56: #{llm_decoder_forward.23} parent=51 // pred_fallthru
        _
    $region52: #{llm_decoder_forward.23} parent=5 // pred_fallthru
      _
  $region6: #{llm_decoder_forward.23} parent=0 // loop_footer
    %s13 = sadd.s32 1, %s9
  $region7: #{llm_decoder_forward.23} parent=0 // loop_footer_branch
    %8 = sbr.rel target = $region3
  $region8: #{llm_decoder_forward.23} parent=0 // loop_exit
    _

// kernel: llm_decoder_forward.32
$region0: #{llm_decoder_forward.32}
  #allocation0 [shape = 'u32[]', space=smem, size = 0x4, offset = 0x4, fixed_abs, tag = 'smem constant byte address 0x4 - core index']
  #allocation1 [shape = 'u32[144,128]{1,0:T(1,128)}', space=vmem, size = 0x12000, scoped, tag = 'internal scratch']
  %s0 = inlined_call_operand.vmem [shape: f32[32,64], index: 0, kind: input, shape index: {}]
  %s1 = inlined_call_operand.vmem [shape: f32[1,64], index: 1, kind: input, shape index: {}]
  %s2 = inlined_call_operand.vmem [shape: f32[32,64], index: 2, kind: output, shape index: {}]
  %s3 = sld [smem:[#allocation0]]
  $region18: #{llm_decoder_forward.32} parent=0
    _
  %s5 = ssub.s32 1, %s3
  %s6 = scalar_select 0, %s5, %s3
  // Predicated region
  $region2: #{llm_decoder_forward.32} parent=0 // pred_check
    _
  $region3: #{llm_decoder_forward.32} parent=0 // pred_check_branch
    %8 = sbr.rel (0) target = $region5
  $region4: #{llm_decoder_forward.32} parent=0 // pred_region
    _
  $region5: #{llm_decoder_forward.32} parent=0 // pred_fallthru
    _
  // Predicated region
  $region6: #{llm_decoder_forward.32} parent=0 // pred_check
    _
  $region7: #{llm_decoder_forward.32} parent=0 // pred_check_branch
    %10 = sbr.rel (0) target = $region9
  $region8: #{llm_decoder_forward.32} parent=0 // pred_region
    _
  $region9: #{llm_decoder_forward.32} parent=0 // pred_fallthru
    _
  %v11 = vld [vmem:[%s0] sm:$0xff]
  %v12 = vld [vmem:[%s0 + $0x8] sm:$0xff]
  %v13 = vld [vmem:[%s0 + $0x10] sm:$0xff]
  %v14 = vld [vmem:[%s0 + $0x18] sm:$0xff]
  %v15 = vmul.f32 %v11, %v11
  %v16 = vmul.f32 %v12, %v12
  %v17 = vmul.f32 %v13, %v13
  %v18 = vmul.f32 %v14, %v14
  %vm19 = vcmask 523264
  %v20 = vsel %vm19, %v15, 0.0
  %21 = vadd.xlane.f32.xlu0 %v20
  %v22 = vpop.xlane.xlu0 %21
  %v23 = vsel %vm19, %v16, 0.0
  %24 = vadd.xlane.f32.xlu0 %v23
  %v25 = vpop.xlane.xlu0 %24
  %v26 = vsel %vm19, %v17, 0.0
  %27 = vadd.xlane.f32.xlu0 %v26
  %v28 = vpop.xlane.xlu0 %27
  %v29 = vsel %vm19, %v18, 0.0
  %30 = vadd.xlane.f32.xlu0 %v29
  %v31 = vpop.xlane.xlu0 %30
  %v32 = vrcp.pop 64.0
  %v33 = vmul.f32 %v22, %v32
  %v34 = vmul.f32 %v25, %v32
  %v35 = vmul.f32 %v28, %v32
  %v36 = vmul.f32 %v31, %v32
  %v37 = vadd.f32 %v33, 1e-05
  %v38 = vadd.f32 %v34, 1e-05
  %v39 = vadd.f32 %v35, 1e-05
  %v40 = vadd.f32 %v36, 1e-05
  %v41 = vrsqrt.pop %v37
  %v42 = vrsqrt.pop %v38
  %v43 = vrsqrt.pop %v39
  %v44 = vrsqrt.pop %v40
  %v45 = vmul.f32 %v11, %v41
  %v46 = vmul.f32 %v12, %v42
  %v47 = vmul.f32 %v13, %v43
  %v48 = vmul.f32 %v14, %v44
  %v49 = vld [vmem:[%s1] sm:$0x1]
  %v51 = vlaneseq
  %v52 = vshrl.u32 %v51, 7
  %v53 = vsub.s32 0, %v52
  %v54 = vrot.slane %v49, %v53
  %v56 = vmul.f32 %v45, %v54
  %v57 = vmul.f32 %v46, %v54
  %v58 = vmul.f32 %v47, %v54
  %v59 = vmul.f32 %v48, %v54
  %60 = vst.msk [vmem:[%s2] sm:$0xff] %vm19, %v56
  %61 = vst.msk [vmem:[%s2 + $0x8] sm:$0xff] %vm19, %v57
  %62 = vst.msk [vmem:[%s2 + $0x10] sm:$0xff] %vm19, %v58
  %63 = vst.msk [vmem:[%s2 + $0x18] sm:$0xff] %vm19, %v59
  // Predicated region
  $region10: #{llm_decoder_forward.32} parent=0 // pred_check
    _
  $region11: #{llm_decoder_forward.32} parent=0 // pred_check_branch
    %65 = sbr.rel (0) target = $region13
  $region12: #{llm_decoder_forward.32} parent=0 // pred_region
    _
  $region13: #{llm_decoder_forward.32} parent=0 // pred_fallthru
    _
  // Predicated region
  $region14: #{llm_decoder_forward.32} parent=0 // pred_check
    _
  $region15: #{llm_decoder_forward.32} parent=0 // pred_check_branch
    %67 = sbr.rel (0) target = $region17
  $region16: #{llm_decoder_forward.32} parent=0 // pred_region
    _
  $region17: #{llm_decoder_forward.32} parent=0 // pred_fallthru
    _

// kernel: llm_decoder_forward.24
$region0: #{llm_decoder_forward.24}
  #allocation0 [shape = 'u32[]', space=smem, size = 0x4, offset = 0x4, fixed_abs, tag = 'smem constant byte address 0x4 - core index']
  #allocation1 [shape = 'u32[144,128]{1,0:T(1,128)}', space=vmem, size = 0x12000, scoped, tag = 'internal scratch']
  #allocation2 [shape = 'f32[32,64]{1,0:T(8,128)}', space=vmem, size = 0x4000, scoped, tag = 'scratch operand']
  %s0 = inlined_call_operand.vmem [shape: bf16[32,64], index: 0, kind: input, shape index: {}]
  %s1 = inlined_call_operand.vmem [shape: bf16[64,64], index: 1, kind: input, shape index: {}]
  %s2 = inlined_call_operand.vmem [shape: f32[1,64], index: 2, kind: input, shape index: {}]
  %s3 = inlined_call_operand.vmem [shape: f32[32,64], index: 3, kind: output, shape index: {}]
  %s4 = sld [smem:[#allocation0]]
  $region30: #{llm_decoder_forward.24} parent=0
    _
  %s6 = ssub.s32 1, %s4
  %s7 = scalar_select 0, %s6, %s4
  // Predicated region
  $region2: #{llm_decoder_forward.24} parent=0 // pred_check
    _
  $region3: #{llm_decoder_forward.24} parent=0 // pred_check_branch
    %9 = sbr.rel (0) target = $region5
  $region4: #{llm_decoder_forward.24} parent=0 // pred_region
    _
  $region5: #{llm_decoder_forward.24} parent=0 // pred_fallthru
    _
  // Predicated region
  $region6: #{llm_decoder_forward.24} parent=0 // pred_check
    _
  $region7: #{llm_decoder_forward.24} parent=0 // pred_check_branch
    %11 = sbr.rel (0) target = $region9
  $region8: #{llm_decoder_forward.24} parent=0 // pred_region
    _
  $region9: #{llm_decoder_forward.24} parent=0 // pred_fallthru
    _
  // Predicated region
  $region10: #{llm_decoder_forward.24} parent=0 // pred_check
    _
  $region11: #{llm_decoder_forward.24} parent=0 // pred_check_branch
    %13 = sbr.rel (0) target = $region13
  $region12: #{llm_decoder_forward.24} parent=0 // pred_region
    _
  $region13: #{llm_decoder_forward.24} parent=0 // pred_fallthru
    _
  %p15 = scmp.eq.s32.totalorder 0, 0
  // Predicated region
  $region14: #{llm_decoder_forward.24} parent=0 // pred_check
    %p16 = pneg %p15
  $region15: #{llm_decoder_forward.24} parent=0 // pred_check_branch
    %18 = sbr.rel (%p16) target = $region17
  $region16: #{llm_decoder_forward.24} parent=0 // pred_region
    %vm19 = vcmask 523264
    %20 = vst.msk [vmem:[#allocation2] sm:$0xff] %vm19, 0.0
    %21 = vst.msk [vmem:[#allocation2 + $0x8] sm:$0xff] %vm19, 0.0
    %22 = vst.msk [vmem:[#allocation2 + $0x10] sm:$0xff] %vm19, 0.0
    %23 = vst.msk [vmem:[#allocation2 + $0x18] sm:$0xff] %vm19, 0.0
  $region17: #{llm_decoder_forward.24} parent=0 // pred_fallthru
    _
  %v24 = vld [vmem:[#allocation2] sm:$0xff]
  %v25 = vld [vmem:[#allocation2 + $0x8] sm:$0xff]
  %v26 = vld [vmem:[#allocation2 + $0x10] sm:$0xff]
  %v27 = vld [vmem:[#allocation2 + $0x18] sm:$0xff]
  %v28 = vld [vmem:[%s0] sm:$0xf]
  %v29 = vld [vmem:[%s0 + $0x4] sm:$0xf]
  %v30 = vld [vmem:[%s0 + $0x8] sm:$0xf]
  %v31 = vld [vmem:[%s0 + $0xc] sm:$0xf]
  %v32 = vld [vmem:[%s1] sm:$0xf]
  %v33 = vld [vmem:[%s1 + $0x4] sm:$0xf]
  %v34 = vld [vmem:[%s1 + $0x8] sm:$0xf]
  %v35 = vld [vmem:[%s1 + $0xc] sm:$0xf]
  %v36 = vld [vmem:[%s1 + $0x10] sm:$0xf]
  %v37 = vld [vmem:[%s1 + $0x14] sm:$0xf]
  %v38 = vld [vmem:[%s1 + $0x18] sm:$0xf]
  %v39 = vld [vmem:[%s1 + $0x1c] sm:$0xf]
  %v44 = vunpack.c.l.b16 %v28
  %v45 = vunpack.c.l.b16 %v29
  %v46 = vunpack.c.l.b16 %v30
  %v47 = vunpack.c.l.b16 %v31
  %v48 = vpack.c.b16 %v45, %v44
  %v49 = vpack.c.b16 %v47, %v46
  %v58 = vunpack.c.l.b16 %v32
  %v59 = vunpack.c.l.b16 %v33
  %v60 = vunpack.c.l.b16 %v34
  %v61 = vunpack.c.l.b16 %v35
  %v62 = vunpack.c.l.b16 %v36
  %v63 = vunpack.c.l.b16 %v37
  %v64 = vunpack.c.l.b16 %v38
  %v65 = vunpack.c.l.b16 %v39
  %v66 = vpack.c.b16 %v59, %v58
  %v67 = vpack.c.b16 %v61, %v60
  %v68 = vpack.c.b16 %v63, %v62
  %v69 = vpack.c.b16 %v65, %v64
  %vm74 = vcmask 523264
  %v76 = vsel %vm74, %v48, 0
  %v79 = vsel %vm74, %v49, 0
  %81 = vmatprep.subr.bf16.mxu0 0
  %82 = vmatpush1.bf16.msra.mxu0 %v66
  %83 = vmatprep.subr.bf16.mxu0 0
  %84 = vmatpush1.bf16.msra.mxu0 %v67
  %85 = vmatprep.subr.bf16.mxu0 0
  %86 = vmatpush1.bf16.msra.mxu0 %v68
  %87 = vmatprep.subr.bf16.mxu0 0
  %88 = vmatpush1.bf16.msra.mxu0 %v69
  %89 = vmatprep.subr.bf16.mxu0 0
  %90 = vmatpush1.bf16.msra.mxu0 0
  %91 = vmatprep.subr.bf16.mxu0 0
  %92 = vmatpush1.bf16.msra.mxu0 0
  %93 = vmatprep.subr.bf16.mxu0 0
  %94 = vmatpush1.bf16.msra.mxu0 0
  %95 = vmatprep.subr.bf16.mxu0 0
  %96 = vmatpush1.bf16.msra.mxu0 0
  %97 = vmatprep.subr.bf16.mxu0 0
  %98 = vmatpush1.bf16.msra.mxu0 0
  %99 = vmatprep.subr.bf16.mxu0 0
  %100 = vmatpush1.bf16.msra.mxu0 0
  %101 = vmatprep.subr.bf16.mxu0 0
  %102 = vmatpush1.bf16.msra.mxu0 0
  %103 = vmatprep.subr.bf16.mxu0 0
  %104 = vmatpush1.bf16.msra.mxu0 0
  %105 = vmatprep.subr.bf16.mxu0 0
  %106 = vmatpush1.bf16.msra.mxu0 0
  %107 = vmatprep.subr.bf16.mxu0 0
  %108 = vmatpush1.bf16.msra.mxu0 0
  %109 = vmatprep.subr.bf16.mxu0 0
  %110 = vmatpush1.bf16.msra.mxu0 0
  %111 = vmatprep.subr.bf16.mxu0 0
  %112 = vmatpush1.bf16.msra.mxu0 0
  %113 = vmatprep.mubr.bf16.mxu0 0
  %114 = vmatmul.mubr.bf16.gmra.mrb[0].mxu0 %v76
  %v115 = vpop.f32.mrb[0].mxu0
  %v116 = vadd.f32 0.0, %v115
  %v117 = vpop.f32.mrb[0].mxu0
  %v118 = vpop.f32.mrb[0].mxu0
  %v119 = vadd.f32 0.0, %v118
  %v120 = vpop.f32.mrb[0].mxu0
  %121 = vmatprep.mubr.bf16.mxu0 0
  %122 = vmatmul.mubr.bf16.gmra.mrb[0].mxu0 %v79
  %v123 = vpop.f32.mrb[0].mxu0
  %v124 = vadd.f32 0.0, %v123
  %v125 = vpop.f32.mrb[0].mxu0
  %v126 = vpop.f32.mrb[0].mxu0
  %v127 = vadd.f32 0.0, %v126
  %v128 = vpop.f32.mrb[0].mxu0
  %129 = vdwg.mxu0
  %v130 = vadd.f32 %v24, %v116
  %v131 = vadd.f32 %v25, %v119
  %v132 = vadd.f32 %v26, %v124
  %v133 = vadd.f32 %v27, %v127
  %134 = vst.msk [vmem:[#allocation2] sm:$0xff] %vm74, %v130
  %135 = vst.msk [vmem:[#allocation2 + $0x8] sm:$0xff] %vm74, %v131
  %136 = vst.msk [vmem:[#allocation2 + $0x10] sm:$0xff] %vm74, %v132
  %137 = vst.msk [vmem:[#allocation2 + $0x18] sm:$0xff] %vm74, %v133
  // Predicated region
  $region18: #{llm_decoder_forward.24} parent=0 // pred_check
    %p138 = pneg %p15
  $region19: #{llm_decoder_forward.24} parent=0 // pred_check_branch
    %140 = sbr.rel (%p138) target = $region21
  $region20: #{llm_decoder_forward.24} parent=0 // pred_region
    %v141 = vld [vmem:[#allocation2] sm:$0xff]
    %v142 = vld [vmem:[#allocation2 + $0x8] sm:$0xff]
    %v143 = vld [vmem:[#allocation2 + $0x10] sm:$0xff]
    %v144 = vld [vmem:[#allocation2 + $0x18] sm:$0xff]
    %v145 = vld [vmem:[%s2] sm:$0x1]
    %v147 = vlaneseq
    %v148 = vshrl.u32 %v147, 7
    %v149 = vsub.s32 0, %v148
    %v150 = vrot.slane %v145, %v149
    %v152 = vadd.f32 %v141, %v150
    %v153 = vadd.f32 %v142, %v150
    %v154 = vadd.f32 %v143, %v150
    %v155 = vadd.f32 %v144, %v150
    %156 = vst.msk [vmem:[%s3] sm:$0xff] %vm74, %v152
    %157 = vst.msk [vmem:[%s3 + $0x8] sm:$0xff] %vm74, %v153
    %158 = vst.msk [vmem:[%s3 + $0x10] sm:$0xff] %vm74, %v154
    %159 = vst.msk [vmem:[%s3 + $0x18] sm:$0xff] %vm74, %v155
  $region21: #{llm_decoder_forward.24} parent=0 // pred_fallthru
    _
  // Predicated region
  $region22: #{llm_decoder_forward.24} parent=0 // pred_check
    _
  $region23: #{llm_decoder_forward.24} parent=0 // pred_check_branch
    %161 = sbr.rel (0) target = $region25
  $region24: #{llm_decoder_forward.24} parent=0 // pred_region
    _
  $region25: #{llm_decoder_forward.24} parent=0 // pred_fallthru
    _
  // Predicated region
  $region26: #{llm_decoder_forward.24} parent=0 // pred_check
    _
  $region27: #{llm_decoder_forward.24} parent=0 // pred_check_branch
    %163 = sbr.rel (0) target = $region29
  $region28: #{llm_decoder_forward.24} parent=0 // pred_region
    _
  $region29: #{llm_decoder_forward.24} parent=0 // pred_fallthru
    _

// kernel: llm_decoder_forward.25
$region0: #{llm_decoder_forward.25}
  #allocation0 [shape = 'u32[]', space=smem, size = 0x4, offset = 0x4, fixed_abs, tag = 'smem constant byte address 0x4 - core index']
  #allocation1 [shape = 'u32[144,128]{1,0:T(1,128)}', space=vmem, size = 0x12000, scoped, tag = 'internal scratch']
  #allocation2 [shape = 'f32[32,64]{1,0:T(8,128)}', space=vmem, size = 0x4000, scoped, tag = 'scratch operand']
  %s0 = inlined_call_operand.vmem [shape: f32[32,64], index: 0, kind: input, shape index: {}]
  %s1 = inlined_call_operand.vmem [shape: f32[1,64], index: 1, kind: input, shape index: {}]
  %s2 = inlined_call_operand.vmem [shape: bf16[64,128], index: 2, kind: input, shape index: {}]
  %s3 = inlined_call_operand.vmem [shape: bf16[64,128], index: 3, kind: input, shape index: {}]
  %s4 = inlined_call_operand.vmem [shape: bf16[128,64], index: 4, kind: input, shape index: {}]
  %s5 = inlined_call_operand.vmem [shape: f32[32,64], index: 5, kind: output, shape index: {}]
  %s6 = sld [smem:[#allocation0]]
  $region38: #{llm_decoder_forward.25} parent=0
    _
  %s8 = ssub.s32 1, %s6
  %s9 = scalar_select 0, %s8, %s6
  // Predicated region
  $region2: #{llm_decoder_forward.25} parent=0 // pred_check
    _
  $region3: #{llm_decoder_forward.25} parent=0 // pred_check_branch
    %11 = sbr.rel (0) target = $region5
  $region4: #{llm_decoder_forward.25} parent=0 // pred_region
    _
  $region5: #{llm_decoder_forward.25} parent=0 // pred_fallthru
    _
  // Predicated region
  $region6: #{llm_decoder_forward.25} parent=0 // pred_check
    _
  $region7: #{llm_decoder_forward.25} parent=0 // pred_check_branch
    %13 = sbr.rel (0) target = $region9
  $region8: #{llm_decoder_forward.25} parent=0 // pred_region
    _
  $region9: #{llm_decoder_forward.25} parent=0 // pred_fallthru
    _
  // Predicated region
  $region10: #{llm_decoder_forward.25} parent=0 // pred_check
    _
  $region11: #{llm_decoder_forward.25} parent=0 // pred_check_branch
    %15 = sbr.rel (0) target = $region13
  $region12: #{llm_decoder_forward.25} parent=0 // pred_region
    _
  $region13: #{llm_decoder_forward.25} parent=0 // pred_fallthru
    _
  // Predicated region
  $region14: #{llm_decoder_forward.25} parent=0 // pred_check
    _
  $region15: #{llm_decoder_forward.25} parent=0 // pred_check_branch
    %17 = sbr.rel (0) target = $region17
  $region16: #{llm_decoder_forward.25} parent=0 // pred_region
    _
  $region17: #{llm_decoder_forward.25} parent=0 // pred_fallthru
    _
  // Predicated region
  $region18: #{llm_decoder_forward.25} parent=0 // pred_check
    _
  $region19: #{llm_decoder_forward.25} parent=0 // pred_check_branch
    %19 = sbr.rel (0) target = $region21
  $region20: #{llm_decoder_forward.25} parent=0 // pred_region
    _
  $region21: #{llm_decoder_forward.25} parent=0 // pred_fallthru
    _
  %p21 = scmp.eq.s32.totalorder 0, 0
  // Predicated region
  $region22: #{llm_decoder_forward.25} parent=0 // pred_check
    %p22 = pneg %p21
  $region23: #{llm_decoder_forward.25} parent=0 // pred_check_branch
    %24 = sbr.rel (%p22) target = $region25
  $region24: #{llm_decoder_forward.25} parent=0 // pred_region
    %vm25 = vcmask 523264
    %26 = vst.msk [vmem:[#allocation2] sm:$0xff] %vm25, 0.0
    %27 = vst.msk [vmem:[#allocation2 + $0x8] sm:$0xff] %vm25, 0.0
    %28 = vst.msk [vmem:[#allocation2 + $0x10] sm:$0xff] %vm25, 0.0
    %29 = vst.msk [vmem:[#allocation2 + $0x18] sm:$0xff] %vm25, 0.0
  $region25: #{llm_decoder_forward.25} parent=0 // pred_fallthru
    _
  %v30 = vld [vmem:[%s0] sm:$0xff]
  %v31 = vld [vmem:[%s0 + $0x8] sm:$0xff]
  %v32 = vld [vmem:[%s0 + $0x10] sm:$0xff]
  %v33 = vld [vmem:[%s0 + $0x18] sm:$0xff]
  %v34 = vmul.f32 %v30, %v30
  %v35 = vmul.f32 %v31, %v31
  %v36 = vmul.f32 %v32, %v32
  %v37 = vmul.f32 %v33, %v33
  %vm38 = vcmask 523264
  %v39 = vsel %vm38, %v34, 0.0
  %40 = vadd.xlane.f32.xlu0 %v39
  %v41 = vpop.xlane.xlu0 %40
  %v42 = vsel %vm38, %v35, 0.0
  %43 = vadd.xlane.f32.xlu0 %v42
  %v44 = vpop.xlane.xlu0 %43
  %v45 = vsel %vm38, %v36, 0.0
  %46 = vadd.xlane.f32.xlu0 %v45
  %v47 = vpop.xlane.xlu0 %46
  %v48 = vsel %vm38, %v37, 0.0
  %49 = vadd.xlane.f32.xlu0 %v48
  %v50 = vpop.xlane.xlu0 %49
  %v51 = vrcp.pop 64.0
  %v52 = vmul.f32 %v41, %v51
  %v53 = vmul.f32 %v44, %v51
  %v54 = vmul.f32 %v47, %v51
  %v55 = vmul.f32 %v50, %v51
  %v56 = vadd.f32 %v52, 1e-05
  %v57 = vadd.f32 %v53, 1e-05
  %v58 = vadd.f32 %v54, 1e-05
  %v59 = vadd.f32 %v55, 1e-05
  %v60 = vrsqrt.pop %v56
  %v61 = vrsqrt.pop %v57
  %v62 = vrsqrt.pop %v58
  %v63 = vrsqrt.pop %v59
  %v64 = vmul.f32 %v30, %v60
  %v65 = vmul.f32 %v31, %v61
  %v66 = vmul.f32 %v32, %v62
  %v67 = vmul.f32 %v33, %v63
  %v68 = vld [vmem:[%s1] sm:$0x1]
  %v70 = vlaneseq
  %v71 = vshrl.u32 %v70, 7
  %v72 = vsub.s32 0, %v71
  %v73 = vrot.slane %v68, %v72
  %v75 = vmul.f32 %v64, %v73
  %v76 = vmul.f32 %v65, %v73
  %v77 = vmul.f32 %v66, %v73
  %v78 = vmul.f32 %v67, %v73
  %v79 = vpack.c.bf16 %v76, %v75
  %v80 = vpack.c.bf16 %v78, %v77
  %v81 = vld [vmem:[%s2] sm:$0xf]
  %v82 = vld [vmem:[%s2 + $0x4] sm:$0xf]
  %v83 = vld [vmem:[%s2 + $0x8] sm:$0xf]
  %v84 = vld [vmem:[%s2 + $0xc] sm:$0xf]
  %v85 = vld [vmem:[%s2 + $0x10] sm:$0xf]
  %v86 = vld [vmem:[%s2 + $0x14] sm:$0xf]
  %v87 = vld [vmem:[%s2 + $0x18] sm:$0xf]
  %v88 = vld [vmem:[%s2 + $0x1c] sm:$0xf]
  %v97 = vunpack.c.l.b16 %v81
  %v98 = vunpack.c.l.b16 %v82
  %v99 = vunpack.c.l.b16 %v83
  %v100 = vunpack.c.l.b16 %v84
  %v101 = vunpack.c.l.b16 %v85
  %v102 = vunpack.c.l.b16 %v86
  %v103 = vunpack.c.l.b16 %v87
  %v104 = vunpack.c.l.b16 %v88
  %v105 = vpack.c.b16 %v98, %v97
  %v106 = vpack.c.b16 %v100, %v99
  %v107 = vpack.c.b16 %v102, %v101
  %v108 = vpack.c.b16 %v104, %v103
  %v114 = vsel %vm38, %v79, 0
  %v117 = vsel %vm38, %v80, 0
  %119 = vmatprep.subr.bf16.mxu0 0
  %120 = vmatpush1.bf16.msra.mxu0 %v105
  %121 = vmatprep.subr.bf16.mxu0 0
  %122 = vmatpush1.bf16.msra.mxu0 %v106
  %123 = vmatprep.subr.bf16.mxu0 0
  %124 = vmatpush1.bf16.msra.mxu0 %v107
  %125 = vmatprep.subr.bf16.mxu0 0
  %126 = vmatpush1.bf16.msra.mxu0 %v108
  %127 = vmatprep.subr.bf16.mxu0 0
  %128 = vmatpush1.bf16.msra.mxu0 0
  %129 = vmatprep.subr.bf16.mxu0 0
  %130 = vmatpush1.bf16.msra.mxu0 0
  %131 = vmatprep.subr.bf16.mxu0 0
  %132 = vmatpush1.bf16.msra.mxu0 0
  %133 = vmatprep.subr.bf16.mxu0 0
  %134 = vmatpush1.bf16.msra.mxu0 0
  %135 = vmatprep.subr.bf16.mxu0 0
  %136 = vmatpush1.bf16.msra.mxu0 0
  %137 = vmatprep.subr.bf16.mxu0 0
  %138 = vmatpush1.bf16.msra.mxu0 0
  %139 = vmatprep.subr.bf16.mxu0 0
  %140 = vmatpush1.bf16.msra.mxu0 0
  %141 = vmatprep.subr.bf16.mxu0 0
  %142 = vmatpush1.bf16.msra.mxu0 0
  %143 = vmatprep.subr.bf16.mxu0 0
  %144 = vmatpush1.bf16.msra.mxu0 0
  %145 = vmatprep.subr.bf16.mxu0 0
  %146 = vmatpush1.bf16.msra.mxu0 0
  %147 = vmatprep.subr.bf16.mxu0 0
  %148 = vmatpush1.bf16.msra.mxu0 0
  %149 = vmatprep.subr.bf16.mxu0 0
  %150 = vmatpush1.bf16.msra.mxu0 0
  %151 = vmatprep.mubr.bf16.mxu0 0
  %152 = vmatmul.mubr.bf16.gmra.mrb[0].mxu0 %v114
  %v153 = vpop.f32.mrb[0].mxu0
  %v154 = vadd.f32 0.0, %v153
  %v155 = vpop.f32.mrb[0].mxu0
  %v156 = vpop.f32.mrb[0].mxu0
  %v157 = vadd.f32 0.0, %v156
  %v158 = vpop.f32.mrb[0].mxu0
  %159 = vmatprep.mubr.bf16.mxu0 0
  %160 = vmatmul.mubr.bf16.gmra.mrb[0].mxu0 %v117
  %v161 = vpop.f32.mrb[0].mxu0
  %v162 = vadd.f32 0.0, %v161
  %v163 = vpop.f32.mrb[0].mxu0
  %v164 = vpop.f32.mrb[0].mxu0
  %v165 = vadd.f32 0.0, %v164
  %v166 = vpop.f32.mrb[0].mxu0
  %167 = vdwg.mxu0
  %v168 = vld [vmem:[%s3] sm:$0xf]
  %v169 = vld [vmem:[%s3 + $0x4] sm:$0xf]
  %v170 = vld [vmem:[%s3 + $0x8] sm:$0xf]
  %v171 = vld [vmem:[%s3 + $0xc] sm:$0xf]
  %v172 = vld [vmem:[%s3 + $0x10] sm:$0xf]
  %v173 = vld [vmem:[%s3 + $0x14] sm:$0xf]
  %v174 = vld [vmem:[%s3 + $0x18] sm:$0xf]
  %v175 = vld [vmem:[%s3 + $0x1c] sm:$0xf]
  %v184 = vunpack.c.l.b16 %v168
  %v185 = vunpack.c.l.b16 %v169
  %v186 = vunpack.c.l.b16 %v170
  %v187 = vunpack.c.l.b16 %v171
  %v188 = vunpack.c.l.b16 %v172
  %v189 = vunpack.c.l.b16 %v173
  %v190 = vunpack.c.l.b16 %v174
  %v191 = vunpack.c.l.b16 %v175
  %v192 = vpack.c.b16 %v185, %v184
  %v193 = vpack.c.b16 %v187, %v186
  %v194 = vpack.c.b16 %v189, %v188
  %v195 = vpack.c.b16 %v191, %v190
  %200 = vmatprep.subr.bf16.mxu0 0
  %201 = vmatpush1.bf16.msra.mxu0 %v192
  %202 = vmatprep.subr.bf16.mxu0 0
  %203 = vmatpush1.bf16.msra.mxu0 %v193
  %204 = vmatprep.subr.bf16.mxu0 0
  %205 = vmatpush1.bf16.msra.mxu0 %v194
  %206 = vmatprep.subr.bf16.mxu0 0
  %207 = vmatpush1.bf16.msra.mxu0 %v195
  %208 = vmatprep.subr.bf16.mxu0 0
  %209 = vmatpush1.bf16.msra.mxu0 0
  %210 = vmatprep.subr.bf16.mxu0 0
  %211 = vmatpush1.bf16.msra.mxu0 0
  %212 = vmatprep.subr.bf16.mxu0 0
  %213 = vmatpush1.bf16.msra.mxu0 0
  %214 = vmatprep.subr.bf16.mxu0 0
  %215 = vmatpush1.bf16.msra.mxu0 0
  %216 = vmatprep.subr.bf16.mxu0 0
  %217 = vmatpush1.bf16.msra.mxu0 0
  %218 = vmatprep.subr.bf16.mxu0 0
  %219 = vmatpush1.bf16.msra.mxu0 0
  %220 = vmatprep.subr.bf16.mxu0 0
  %221 = vmatpush1.bf16.msra.mxu0 0
  %222 = vmatprep.subr.bf16.mxu0 0
  %223 = vmatpush1.bf16.msra.mxu0 0
  %224 = vmatprep.subr.bf16.mxu0 0
  %225 = vmatpush1.bf16.msra.mxu0 0
  %226 = vmatprep.subr.bf16.mxu0 0
  %227 = vmatpush1.bf16.msra.mxu0 0
  %228 = vmatprep.subr.bf16.mxu0 0
  %229 = vmatpush1.bf16.msra.mxu0 0
  %230 = vmatprep.subr.bf16.mxu0 0
  %231 = vmatpush1.bf16.msra.mxu0 0
  %232 = vmatprep.mubr.bf16.mxu0 0
  %233 = vmatmul.mubr.bf16.gmra.mrb[0].mxu0 %v114
  %v234 = vpop.f32.mrb[0].mxu0
  %v235 = vadd.f32 0.0, %v234
  %v236 = vpop.f32.mrb[0].mxu0
  %v237 = vpop.f32.mrb[0].mxu0
  %v238 = vadd.f32 0.0, %v237
  %v239 = vpop.f32.mrb[0].mxu0
  %240 = vmatprep.mubr.bf16.mxu0 0
  %241 = vmatmul.mubr.bf16.gmra.mrb[0].mxu0 %v117
  %v242 = vpop.f32.mrb[0].mxu0
  %v243 = vadd.f32 0.0, %v242
  %v244 = vpop.f32.mrb[0].mxu0
  %v245 = vpop.f32.mrb[0].mxu0
  %v246 = vadd.f32 0.0, %v245
  %v247 = vpop.f32.mrb[0].mxu0
  %248 = vdwg.mxu0
  %v249 = vsub.f32 0.0, %v154
  %v250 = vsub.f32 0.0, %v157
  %v251 = vsub.f32 0.0, %v162
  %v252 = vsub.f32 0.0, %v165
  %v253 = vmul.f32 %v249, 1.442695
  %v254 = vpow.pop %v253
  %v255 = vmul.f32 %v250, 1.442695
  %v256 = vpow.pop %v255
  %v257 = vmul.f32 %v251, 1.442695
  %v258 = vpow.pop %v257
  %v259 = vmul.f32 %v252, 1.442695
  %v260 = vpow.pop %v259
  %v261 = vadd.f32 %v254, 1.0
  %v262 = vadd.f32 %v256, 1.0
  %v263 = vadd.f32 %v258, 1.0
  %v264 = vadd.f32 %v260, 1.0
  %v265 = vrcp.pop %v261
  %v266 = vmul.f32 1.0, %v265
  %v267 = vrcp.pop %v262
  %v268 = vmul.f32 1.0, %v267
  %v269 = vrcp.pop %v263
  %v270 = vmul.f32 1.0, %v269
  %v271 = vrcp.pop %v264
  %v272 = vmul.f32 1.0, %v271
  %v273 = vmul.f32 %v154, %v266
  %v274 = vmul.f32 %v157, %v268
  %v275 = vmul.f32 %v162, %v270
  %v276 = vmul.f32 %v165, %v272
  %v277 = vmul.f32 %v273, %v235
  %v278 = vmul.f32 %v274, %v238
  %v279 = vmul.f32 %v275, %v243
  %v280 = vmul.f32 %v276, %v246
  %v281 = vpack.c.bf16 %v278, %v277
  %v282 = vpack.c.bf16 %v280, %v279
  %v283 = vld [vmem:[#allocation2] sm:$0xff]
  %v284 = vld [vmem:[#allocation2 + $0x8] sm:$0xff]
  %v285 = vld [vmem:[#allocation2 + $0x10] sm:$0xff]
  %v286 = vld [vmem:[#allocation2 + $0x18] sm:$0xff]
  %v287 = vld [vmem:[%s4] sm:$0xf]
  %v288 = vld [vmem:[%s4 + $0x4] sm:$0xf]
  %v289 = vld [vmem:[%s4 + $0x8] sm:$0xf]
  %v290 = vld [vmem:[%s4 + $0xc] sm:$0xf]
  %v291 = vld [vmem:[%s4 + $0x10] sm:$0xf]
  %v292 = vld [vmem:[%s4 + $0x14] sm:$0xf]
  %v293 = vld [vmem:[%s4 + $0x18] sm:$0xf]
  %v294 = vld [vmem:[%s4 + $0x1c] sm:$0xf]
  %v295 = vld [vmem:[%s4 + $0x20] sm:$0xf]
  %v296 = vld [vmem:[%s4 + $0x24] sm:$0xf]
  %v297 = vld [vmem:[%s4 + $0x28] sm:$0xf]
  %v298 = vld [vmem:[%s4 + $0x2c] sm:$0xf]
  %v299 = vld [vmem:[%s4 + $0x30] sm:$0xf]
  %v300 = vld [vmem:[%s4 + $0x34] sm:$0xf]
  %v301 = vld [vmem:[%s4 + $0x38] sm:$0xf]
  %v302 = vld [vmem:[%s4 + $0x3c] sm:$0xf]
  %v319 = vunpack.c.l.b16 %v287
  %v320 = vunpack.c.l.b16 %v288
  %v321 = vunpack.c.l.b16 %v289
  %v322 = vunpack.c.l.b16 %v290
  %v323 = vunpack.c.l.b16 %v291
  %v324 = vunpack.c.l.b16 %v292
  %v325 = vunpack.c.l.b16 %v293
  %v326 = vunpack.c.l.b16 %v294
  %v327 = vunpack.c.l.b16 %v295
  %v328 = vunpack.c.l.b16 %v296
  %v329 = vunpack.c.l.b16 %v297
  %v330 = vunpack.c.l.b16 %v298
  %v331 = vunpack.c.l.b16 %v299
  %v332 = vunpack.c.l.b16 %v300
  %v333 = vunpack.c.l.b16 %v301
  %v334 = vunpack.c.l.b16 %v302
  %v335 = vpack.c.b16 %v320, %v319
  %v336 = vpack.c.b16 %v322, %v321
  %v337 = vpack.c.b16 %v324, %v323
  %v338 = vpack.c.b16 %v326, %v325
  %v339 = vpack.c.b16 %v328, %v327
  %v340 = vpack.c.b16 %v330, %v329
  %v341 = vpack.c.b16 %v332, %v331
  %v342 = vpack.c.b16 %v334, %v333
  %351 = vmatprep.subr.bf16.mxu0 0
  %352 = vmatpush1.bf16.msra.mxu0 %v335
  %353 = vmatprep.subr.bf16.mxu0 0
  %354 = vmatpush1.bf16.msra.mxu0 %v336
  %355 = vmatprep.subr.bf16.mxu0 0
  %356 = vmatpush1.bf16.msra.mxu0 %v337
  %357 = vmatprep.subr.bf16.mxu0 0
  %358 = vmatpush1.bf16.msra.mxu0 %v338
  %359 = vmatprep.subr.bf16.mxu0 0
  %360 = vmatpush1.bf16.msra.mxu0 %v339
  %361 = vmatprep.subr.bf16.mxu0 0
  %362 = vmatpush1.bf16.msra.mxu0 %v340
  %363 = vmatprep.subr.bf16.mxu0 0
  %364 = vmatpush1.bf16.msra.mxu0 %v341
  %365 = vmatprep.subr.bf16.mxu0 0
  %366 = vmatpush1.bf16.msra.mxu0 %v342
  %367 = vmatprep.subr.bf16.mxu0 0
  %368 = vmatpush1.bf16.msra.mxu0 0
  %369 = vmatprep.subr.bf16.mxu0 0
  %370 = vmatpush1.bf16.msra.mxu0 0
  %371 = vmatprep.subr.bf16.mxu0 0
  %372 = vmatpush1.bf16.msra.mxu0 0
  %373 = vmatprep.subr.bf16.mxu0 0
  %374 = vmatpush1.bf16.msra.mxu0 0
  %375 = vmatprep.subr.bf16.mxu0 0
  %376 = vmatpush1.bf16.msra.mxu0 0
  %377 = vmatprep.subr.bf16.mxu0 0
  %378 = vmatpush1.bf16.msra.mxu0 0
  %379 = vmatprep.subr.bf16.mxu0 0
  %380 = vmatpush1.bf16.msra.mxu0 0
  %381 = vmatprep.subr.bf16.mxu0 0
  %382 = vmatpush1.bf16.msra.mxu0 0
  %383 = vmatprep.mubr.bf16.mxu0 0
  %384 = vmatmul.mubr.bf16.gmra.mrb[0].mxu0 %v281
  %v385 = vpop.f32.mrb[0].mxu0
  %v386 = vadd.f32 0.0, %v385
  %v387 = vpop.f32.mrb[0].mxu0
  %v388 = vpop.f32.mrb[0].mxu0
  %v389 = vadd.f32 0.0, %v388
  %v390 = vpop.f32.mrb[0].mxu0
  %391 = vmatprep.mubr.bf16.mxu0 0
  %392 = vmatmul.mubr.bf16.gmra.mrb[0].mxu0 %v282
  %v393 = vpop.f32.mrb[0].mxu0
  %v394 = vadd.f32 0.0, %v393
  %v395 = vpop.f32.mrb[0].mxu0
  %v396 = vpop.f32.mrb[0].mxu0
  %v397 = vadd.f32 0.0, %v396
  %v398 = vpop.f32.mrb[0].mxu0
  %399 = vdwg.mxu0
  %v400 = vadd.f32 %v283, %v386
  %v401 = vadd.f32 %v284, %v389
  %v402 = vadd.f32 %v285, %v394
  %v403 = vadd.f32 %v286, %v397
  %404 = vst.msk [vmem:[#allocation2] sm:$0xff] %vm38, %v400
  %405 = vst.msk [vmem:[#allocation2 + $0x8] sm:$0xff] %vm38, %v401
  %406 = vst.msk [vmem:[#allocation2 + $0x10] sm:$0xff] %vm38, %v402
  %407 = vst.msk [vmem:[#allocation2 + $0x18] sm:$0xff] %vm38, %v403
  // Predicated region
  $region26: #{llm_decoder_forward.25} parent=0 // pred_check
    %p408 = pneg %p21
  $region27: #{llm_decoder_forward.25} parent=0 // pred_check_branch
    %410 = sbr.rel (%p408) target = $region29
  $region28: #{llm_decoder_forward.25} parent=0 // pred_region
    %v411 = vld [vmem:[#allocation2] sm:$0xff]
    %v412 = vld [vmem:[#allocation2 + $0x8] sm:$0xff]
    %v413 = vld [vmem:[#allocation2 + $0x10] sm:$0xff]
    %v414 = vld [vmem:[#allocation2 + $0x18] sm:$0xff]
    %415 = vst.msk [vmem:[%s5] sm:$0xff] %vm38, %v411
    %416 = vst.msk [vmem:[%s5 + $0x8] sm:$0xff] %vm38, %v412
    %417 = vst.msk [vmem:[%s5 + $0x10] sm:$0xff] %vm38, %v413
    %418 = vst.msk [vmem:[%s5 + $0x18] sm:$0xff] %vm38, %v414
  $region29: #{llm_decoder_forward.25} parent=0 // pred_fallthru
    _
  // Predicated region
  $region30: #{llm_decoder_forward.25} parent=0 // pred_check
    _
  $region31: #{llm_decoder_forward.25} parent=0 // pred_check_branch
    %420 = sbr.rel (0) target = $region33
  $region32: #{llm_decoder_forward.25} parent=0 // pred_region
    _
  $region33: #{llm_decoder_forward.25} parent=0 // pred_fallthru
    _
  // Predicated region
  $region34: #{llm_decoder_forward.25} parent=0 // pred_check
    _
  $region35: #{llm_decoder_forward.25} parent=0 // pred_check_branch
    %422 = sbr.rel (0) target = $region37
  $region36: #{llm_decoder_forward.25} parent=0 // pred_region
    _
  $region37: #{llm_decoder_forward.25} parent=0 // pred_fallthru
    _

// kernel: llm_decoder_forward.33
$region0: #{llm_decoder_forward.33}
  #allocation0 [shape = 'u32[]', space=smem, size = 0x4, offset = 0x4, fixed_abs, tag = 'smem constant byte address 0x4 - core index']
  #allocation1 [shape = 'u32[144,128]{1,0:T(1,128)}', space=vmem, size = 0x12000, scoped, tag = 'internal scratch']
  #allocation2 [shape = 'f32[1,1]{1,0:T(1,128)S(1)}', space=vmem, size = 0x200, scoped, tag = 'scoped memory for llm_decoder_forward.33']
  %s0 = inlined_call_operand.vmem [shape: f32[2,64], index: 0, kind: input, shape index: {}]
  %s1 = inlined_call_operand.vmem [shape: bf16[64,32], index: 1, kind: input, shape index: {}]
  %s2 = inlined_call_operand.vmem [shape: f32[1,32], index: 2, kind: input, shape index: {}]
  %s3 = inlined_call_operand.vmem [shape: bf16[32,1], index: 3, kind: input, shape index: {}]
  %s4 = inlined_call_operand.<no memory space> [shape: f32[1,1], index: 4, kind: input, shape index: {}]
  %s5 = inlined_call_operand.vmem [shape: f32[2,1], index: 5, kind: output, shape index: {}]
  %s6 = sld [smem:[#allocation0]]
  $region30: #{llm_decoder_forward.33} parent=0
    _
  %s8 = ssub.s32 1, %s6
  %s9 = scalar_select 0, %s8, %s6
  %v10 = vstv %s4
  %11 = vst [vmem:[#allocation2] sm:$0x1] %v10
  // Predicated region
  $region2: #{llm_decoder_forward.33} parent=0 // pred_check
    _
  $region3: #{llm_decoder_forward.33} parent=0 // pred_check_branch
    %13 = sbr.rel (0) target = $region5
  $region4: #{llm_decoder_forward.33} parent=0 // pred_region
    _
  $region5: #{llm_decoder_forward.33} parent=0 // pred_fallthru
    _
  // Predicated region
  $region6: #{llm_decoder_forward.33} parent=0 // pred_check
    _
  $region7: #{llm_decoder_forward.33} parent=0 // pred_check_branch
    %15 = sbr.rel (0) target = $region9
  $region8: #{llm_decoder_forward.33} parent=0 // pred_region
    _
  $region9: #{llm_decoder_forward.33} parent=0 // pred_fallthru
    _
  // Predicated region
  $region10: #{llm_decoder_forward.33} parent=0 // pred_check
    _
  $region11: #{llm_decoder_forward.33} parent=0 // pred_check_branch
    %17 = sbr.rel (0) target = $region13
  $region12: #{llm_decoder_forward.33} parent=0 // pred_region
    _
  $region13: #{llm_decoder_forward.33} parent=0 // pred_fallthru
    _
  // Predicated region
  $region14: #{llm_decoder_forward.33} parent=0 // pred_check
    _
  $region15: #{llm_decoder_forward.33} parent=0 // pred_check_branch
    %19 = sbr.rel (0) target = $region17
  $region16: #{llm_decoder_forward.33} parent=0 // pred_region
    _
  $region17: #{llm_decoder_forward.33} parent=0 // pred_fallthru
    _
  // Predicated region
  $region18: #{llm_decoder_forward.33} parent=0 // pred_check
    _
  $region19: #{llm_decoder_forward.33} parent=0 // pred_check_branch
    %21 = sbr.rel (0) target = $region21
  $region20: #{llm_decoder_forward.33} parent=0 // pred_region
    _
  $region21: #{llm_decoder_forward.33} parent=0 // pred_fallthru
    _
  %v23 = vld [vmem:[%s0] sm:$0x3]
  %v24 = vpack.c.bf16 %v23, %v23
  %v25 = vld [vmem:[%s1] sm:$0xf]
  %v26 = vld [vmem:[%s1 + $0x4] sm:$0xf]
  %v27 = vld [vmem:[%s1 + $0x8] sm:$0xf]
  %v28 = vld [vmem:[%s1 + $0xc] sm:$0xf]
  %v29 = vld [vmem:[%s1 + $0x10] sm:$0xf]
  %v30 = vld [vmem:[%s1 + $0x14] sm:$0xf]
  %v31 = vld [vmem:[%s1 + $0x18] sm:$0xf]
  %v32 = vld [vmem:[%s1 + $0x1c] sm:$0xf]
  %v33 = vld [vmem:[%s2] sm:$0x1]
  %v35 = vlaneseq
  %v36 = vshrl.u32 %v35, 7
  %v37 = vsub.s32 0, %v36
  %v38 = vrot.slane %v33, %v37
  %v48 = vunpack.c.l.b16 %v25
  %v49 = vunpack.c.l.b16 %v26
  %v50 = vunpack.c.l.b16 %v27
  %v51 = vunpack.c.l.b16 %v28
  %v52 = vunpack.c.l.b16 %v29
  %v53 = vunpack.c.l.b16 %v30
  %v54 = vunpack.c.l.b16 %v31
  %v55 = vunpack.c.l.b16 %v32
  %v56 = vpack.c.b16 %v49, %v48
  %v57 = vpack.c.b16 %v51, %v50
  %v58 = vpack.c.b16 %v53, %v52
  %v59 = vpack.c.b16 %v55, %v54
  %vm64 = vcmask 523264
  %v66 = vsel %vm64, %v24, 0
  %68 = vmatprep.subr.bf16.mxu0 0
  %69 = vmatpush1.bf16.msra.mxu0 %v56
  %70 = vmatprep.subr.bf16.mxu0 0
  %71 = vmatpush1.bf16.msra.mxu0 %v57
  %72 = vmatprep.subr.bf16.mxu0 0
  %73 = vmatpush1.bf16.msra.mxu0 %v58
  %74 = vmatprep.subr.bf16.mxu0 0
  %75 = vmatpush1.bf16.msra.mxu0 %v59
  %76 = vmatprep.subr.bf16.mxu0 0
  %77 = vmatpush1.bf16.msra.mxu0 0
  %78 = vmatprep.subr.bf16.mxu0 0
  %79 = vmatpush1.bf16.msra.mxu0 0
  %80 = vmatprep.subr.bf16.mxu0 0
  %81 = vmatpush1.bf16.msra.mxu0 0
  %82 = vmatprep.subr.bf16.mxu0 0
  %83 = vmatpush1.bf16.msra.mxu0 0
  %84 = vmatprep.subr.bf16.mxu0 0
  %85 = vmatpush1.bf16.msra.mxu0 0
  %86 = vmatprep.subr.bf16.mxu0 0
  %87 = vmatpush1.bf16.msra.mxu0 0
  %88 = vmatprep.subr.bf16.mxu0 0
  %89 = vmatpush1.bf16.msra.mxu0 0
  %90 = vmatprep.subr.bf16.mxu0 0
  %91 = vmatpush1.bf16.msra.mxu0 0
  %92 = vmatprep.subr.bf16.mxu0 0
  %93 = vmatpush1.bf16.msra.mxu0 0
  %94 = vmatprep.subr.bf16.mxu0 0
  %95 = vmatpush1.bf16.msra.mxu0 0
  %96 = vmatprep.subr.bf16.mxu0 0
  %97 = vmatpush1.bf16.msra.mxu0 0
  %98 = vmatprep.subr.bf16.mxu0 0
  %99 = vmatpush1.bf16.msra.mxu0 0
  %100 = vmatprep.mubr.bf16.mxu0 0
  %101 = vmatmul.mubr.bf16.gmra.mrb[0].mxu0 %v66
  %v102 = vpop.f32.mrb[0].mxu0
  %v103 = vadd.f32 %v38, %v102
  %v104 = vpop.f32.mrb[0].mxu0
  %v105 = vpop.f32.mrb[0].mxu0
  %v106 = vpop.f32.mrb[0].mxu0
  %107 = vdwg.mxu0
  %v108 = vpack.c.bf16 %v103, %v103
  %v109 = vld [vmem:[%s3] sm:$0xf]
  %v110 = vld [vmem:[%s3 + $0x4] sm:$0xf]
  %v111 = vld [vmem:[%s3 + $0x8] sm:$0xf]
  %v112 = vld [vmem:[%s3 + $0xc] sm:$0xf]
  %v113 = vld [vmem:[#allocation2] sm:$0x1]
  %v115 = vlaneseq
  %v116 = vshrl.u32 %v115, 7
  %v117 = vsub.s32 0, %v116
  %v118 = vrot.slane %v113, %v117
  %v124 = vunpack.c.l.b16 %v109
  %v125 = vunpack.c.l.b16 %v110
  %v126 = vunpack.c.l.b16 %v111
  %v127 = vunpack.c.l.b16 %v112
  %v128 = vpack.c.b16 %v125, %v124
  %v129 = vpack.c.b16 %v127, %v126
  %vm132 = vcmask 261120
  %v134 = vsel %vm132, %v108, 0
  %136 = vmatprep.subr.bf16.mxu0 0
  %137 = vmatpush1.bf16.msra.mxu0 %v128
  %138 = vmatprep.subr.bf16.mxu0 0
  %139 = vmatpush1.bf16.msra.mxu0 %v129
  %140 = vmatprep.subr.bf16.mxu0 0
  %141 = vmatpush1.bf16.msra.mxu0 0
  %142 = vmatprep.subr.bf16.mxu0 0
  %143 = vmatpush1.bf16.msra.mxu0 0
  %144 = vmatprep.subr.bf16.mxu0 0
  %145 = vmatpush1.bf16.msra.mxu0 0
  %146 = vmatprep.subr.bf16.mxu0 0
  %147 = vmatpush1.bf16.msra.mxu0 0
  %148 = vmatprep.subr.bf16.mxu0 0
  %149 = vmatpush1.bf16.msra.mxu0 0
  %150 = vmatprep.subr.bf16.mxu0 0
  %151 = vmatpush1.bf16.msra.mxu0 0
  %152 = vmatprep.subr.bf16.mxu0 0
  %153 = vmatpush1.bf16.msra.mxu0 0
  %154 = vmatprep.subr.bf16.mxu0 0
  %155 = vmatpush1.bf16.msra.mxu0 0
  %156 = vmatprep.subr.bf16.mxu0 0
  %157 = vmatpush1.bf16.msra.mxu0 0
  %158 = vmatprep.subr.bf16.mxu0 0
  %159 = vmatpush1.bf16.msra.mxu0 0
  %160 = vmatprep.subr.bf16.mxu0 0
  %161 = vmatpush1.bf16.msra.mxu0 0
  %162 = vmatprep.subr.bf16.mxu0 0
  %163 = vmatpush1.bf16.msra.mxu0 0
  %164 = vmatprep.subr.bf16.mxu0 0
  %165 = vmatpush1.bf16.msra.mxu0 0
  %166 = vmatprep.subr.bf16.mxu0 0
  %167 = vmatpush1.bf16.msra.mxu0 0
  %168 = vmatprep.mubr.bf16.mxu0 0
  %169 = vmatmul.mubr.bf16.gmra.mrb[0].mxu0 %v134
  %v170 = vpop.f32.mrb[0].mxu0
  %v171 = vadd.f32 %v118, %v170
  %v172 = vpop.f32.mrb[0].mxu0
  %v173 = vpop.f32.mrb[0].mxu0
  %v174 = vpop.f32.mrb[0].mxu0
  %175 = vdwg.mxu0
  %vm176 = vcmask 1024
  %177 = vst.msk [vmem:[%s5] sm:$0x3] %vm176, %v171
  // Predicated region
  $region22: #{llm_decoder_forward.33} parent=0 // pred_check
    _
  $region23: #{llm_decoder_forward.33} parent=0 // pred_check_branch
    %179 = sbr.rel (0) target = $region25
  $region24: #{llm_decoder_forward.33} parent=0 // pred_region
    _
  $region25: #{llm_decoder_forward.33} parent=0 // pred_fallthru
    _
  // Predicated region
  $region26: #{llm_decoder_forward.33} parent=0 // pred_check
    _
  $region27: #{llm_decoder_forward.33} parent=0 // pred_check_branch
    %181 = sbr.rel (0) target = $region29
  $region28: #{llm_decoder_forward.33} parent=0 // pred_region
    _
  $region29: #{llm_decoder_forward.33} parent=0 // pred_fallthru
    _

// kernel: llm_decoder_forward.19
$region0: #{llm_decoder_forward.19}
  #allocation0 [shape = 'u32[]', space=smem, size = 0x4, offset = 0x4, fixed_abs, tag = 'smem constant byte address 0x4 - core index']
  #allocation1 [shape = 'u32[144,128]{1,0:T(1,128)}', space=vmem, size = 0x12000, scoped, tag = 'internal scratch']
  %s0 = inlined_call_operand.vmem [shape: f32[2,8], index: 0, kind: input, shape index: {}]
  %s1 = inlined_call_operand.hbm [shape: f32[2,4], index: 1, kind: output, shape index: {}]
  %s2 = sld [smem:[#allocation0]]
  $region14: #{llm_decoder_forward.19} parent=0
    _
  %s4 = ssub.s32 1, %s2
  %s5 = scalar_select 0, %s4, %s2
  $region1: #{llm_decoder_forward.19} parent=0
    #allocation2 [shape = 'u8[1024]{0}', space=vmem, size = 0x400, scoped, tag = 'output window, operand 0, single buffered']
    #allocation3 [shape = 's32[1]{0}', space=sflag, size = 0x4, scoped, tag = 'scoped memory for llm_decoder_forward.19']
    %6 = vsyncpa [#allocation3], 0
    // Predicated region
    $region2: #{llm_decoder_forward.19} parent=1 // pred_check
      _
    $region3: #{llm_decoder_forward.19} parent=1 // pred_check_branch
      %8 = sbr.rel (0) target = $region5
    $region4: #{llm_decoder_forward.19} parent=1 // pred_region
      _
    $region5: #{llm_decoder_forward.19} parent=1 // pred_fallthru
      _
    %v9 = vld [vmem:[%s0] sm:$0x3]
    %vm10 = vcmp.ne.f32.partialorder %v9, -11.0
    %v11 = vlaneseq
    %v12 = vand.u32 %v11, 127
    %v13 = vsel %vm10, 1, 0
    %v14 = vcvt.s32.f32 %v13
    %vm15 = vcmask 58368
    %v16 = vsel %vm15, %v14, 0.0
    %17 = vadd.xlane.f32.xlu0 %v16
    %v18 = vpop.xlane.xlu0 %17
    %v19 = vsel %vm10, %v9, inf
    %v20 = vsel %vm15, %v19, inf
    %21 = vmin.xlane.f32.xlu0 %v20
    %v22 = vpop.xlane.xlu0 %21
    %v23 = vsel %vm10, %v9, -inf
    %v24 = vsel %vm15, %v23, -inf
    %25 = vmax.xlane.f32.xlu0 %v24
    %v26 = vpop.xlane.xlu0 %25
    %28 = vset.pattern.permute.xlu0 0
    %29 = vperm.xlu0 %28, %v9
    %v30 = vpop.permute.xlu0 %29
    %vm32 = vcmp.lt.f32.partialorder %v30, %v9
    %vm33 = vcmp.eq.f32.partialorder %v30, %v9
    %vm34 = vcmp.gt.s32.totalorder %v12, 0
    %vm35 = vmand %vm33, %vm34
    %vm36 = vmor %vm32, %vm35
    %37 = vset.pattern.permute.xlu0 0
    %38 = vperm.xlu0 %37, %v13
    %v39 = vpop.permute.xlu0 %38
    %vm40 = vcmp.eq.s32.totalorder %v39, 1
    %vm41 = vmand %vm40, %vm36
    %v42 = vsel %vm41, 1.0, 0.0
    %v43 = vadd.f32 %v42, 0.0
    %44 = vset.pattern.permute.xlu0 1
    %45 = vperm.xlu0 %44, %v9
    %v46 = vpop.permute.xlu0 %45
    %vm48 = vcmp.lt.f32.partialorder %v46, %v9
    %vm49 = vcmp.eq.f32.partialorder %v46, %v9
    %vm50 = vcmp.gt.s32.totalorder %v12, 1
    %vm51 = vmand %vm49, %vm50
    %vm52 = vmor %vm48, %vm51
    %53 = vset.pattern.permute.xlu0 1
    %54 = vperm.xlu0 %53, %v13
    %v55 = vpop.permute.xlu0 %54
    %vm56 = vcmp.eq.s32.totalorder %v55, 1
    %vm57 = vmand %vm56, %vm52
    %v58 = vsel %vm57, 1.0, 0.0
    %v59 = vadd.f32 %v43, %v58
    %60 = vset.pattern.permute.xlu0 2
    %61 = vperm.xlu0 %60, %v9
    %v62 = vpop.permute.xlu0 %61
    %vm64 = vcmp.lt.f32.partialorder %v62, %v9
    %vm65 = vcmp.eq.f32.partialorder %v62, %v9
    %vm66 = vcmp.gt.s32.totalorder %v12, 2
    %vm67 = vmand %vm65, %vm66
    %vm68 = vmor %vm64, %vm67
    %69 = vset.pattern.permute.xlu0 2
    %70 = vperm.xlu0 %69, %v13
    %v71 = vpop.permute.xlu0 %70
    %vm72 = vcmp.eq.s32.totalorder %v71, 1
    %vm73 = vmand %vm72, %vm68
    %v74 = vsel %vm73, 1.0, 0.0
    %v75 = vadd.f32 %v59, %v74
    %76 = vset.pattern.permute.xlu0 3
    %77 = vperm.xlu0 %76, %v9
    %v78 = vpop.permute.xlu0 %77
    %vm80 = vcmp.lt.f32.partialorder %v78, %v9
    %vm81 = vcmp.eq.f32.partialorder %v78, %v9
    %vm82 = vcmp.gt.s32.totalorder %v12, 3
    %vm83 = vmand %vm81, %vm82
    %vm84 = vmor %vm80, %vm83
    %85 = vset.pattern.permute.xlu0 3
    %86 = vperm.xlu0 %85, %v13
    %v87 = vpop.permute.xlu0 %86
    %vm88 = vcmp.eq.s32.totalorder %v87, 1
    %vm89 = vmand %vm88, %vm84
    %v90 = vsel %vm89, 1.0, 0.0
    %v91 = vadd.f32 %v75, %v90
    %92 = vset.pattern.permute.xlu0 4
    %93 = vperm.xlu0 %92, %v9
    %v94 = vpop.permute.xlu0 %93
    %vm96 = vcmp.lt.f32.partialorder %v94, %v9
    %vm97 = vcmp.eq.f32.partialorder %v94, %v9
    %vm98 = vcmp.gt.s32.totalorder %v12, 4
    %vm99 = vmand %vm97, %vm98
    %vm100 = vmor %vm96, %vm99
    %101 = vset.pattern.permute.xlu0 4
    %102 = vperm.xlu0 %101, %v13
    %v103 = vpop.permute.xlu0 %102
    %vm104 = vcmp.eq.s32.totalorder %v103, 1
    %vm105 = vmand %vm104, %vm100
    %v106 = vsel %vm105, 1.0, 0.0
    %v107 = vadd.f32 %v91, %v106
    %108 = vset.pattern.permute.xlu0 5
    %109 = vperm.xlu0 %108, %v9
    %v110 = vpop.permute.xlu0 %109
    %vm112 = vcmp.lt.f32.partialorder %v110, %v9
    %vm113 = vcmp.eq.f32.partialorder %v110, %v9
    %vm114 = vcmp.gt.s32.totalorder %v12, 5
    %vm115 = vmand %vm113, %vm114
    %vm116 = vmor %vm112, %vm115
    %117 = vset.pattern.permute.xlu0 5
    %118 = vperm.xlu0 %117, %v13
    %v119 = vpop.permute.xlu0 %118
    %vm120 = vcmp.eq.s32.totalorder %v119, 1
    %vm121 = vmand %vm120, %vm116
    %v122 = vsel %vm121, 1.0, 0.0
    %v123 = vadd.f32 %v107, %v122
    %124 = vset.pattern.permute.xlu0 6
    %125 = vperm.xlu0 %124, %v9
    %v126 = vpop.permute.xlu0 %125
    %vm128 = vcmp.lt.f32.partialorder %v126, %v9
    %vm129 = vcmp.eq.f32.partialorder %v126, %v9
    %vm130 = vcmp.gt.s32.totalorder %v12, 6
    %vm131 = vmand %vm129, %vm130
    %vm132 = vmor %vm128, %vm131
    %133 = vset.pattern.permute.xlu0 6
    %134 = vperm.xlu0 %133, %v13
    %v135 = vpop.permute.xlu0 %134
    %vm136 = vcmp.eq.s32.totalorder %v135, 1
    %vm137 = vmand %vm136, %vm132
    %v138 = vsel %vm137, 1.0, 0.0
    %v139 = vadd.f32 %v123, %v138
    %140 = vset.pattern.permute.xlu0 7
    %141 = vperm.xlu0 %140, %v9
    %v142 = vpop.permute.xlu0 %141
    %vm144 = vcmp.lt.f32.partialorder %v142, %v9
    %vm145 = vcmp.eq.f32.partialorder %v142, %v9
    %vm146 = vcmp.gt.s32.totalorder %v12, 7
    %vm147 = vmand %vm145, %vm146
    %vm148 = vmor %vm144, %vm147
    %149 = vset.pattern.permute.xlu0 7
    %150 = vperm.xlu0 %149, %v13
    %v151 = vpop.permute.xlu0 %150
    %vm152 = vcmp.eq.s32.totalorder %v151, 1
    %vm153 = vmand %vm152, %vm148
    %v154 = vsel %vm153, 1.0, 0.0
    %v155 = vadd.f32 %v139, %v154
    %v156 = vsub.f32 %v18, 1.0
    %v157 = vmul.f32 %v156, 0.5
    %v158 = vfloor.f32 %v157
    %vm159 = vcmp.eq.f32.partialorder %v155, %v158
    %vm160 = vmand %vm10, %vm159
    %v161 = vsel %vm160, %v9, 0.0
    %v162 = vsel %vm15, %v161, 0.0
    %163 = vadd.xlane.f32.xlu0 %v162
    %v164 = vpop.xlane.xlu0 %163
    %v165 = vcvt.s32.f32 %v12
    %v166 = vsel %vm10, %v165, 8.0
    %v167 = vsel %vm15, %v166, inf
    %168 = vmin.xlane.f32.xlu0 %v167
    %v169 = vpop.xlane.xlu0 %168
    %v170 = vsel %vm10, %v165, -1.0
    %v171 = vsel %vm15, %v170, -inf
    %172 = vmax.xlane.f32.xlu0 %v171
    %v173 = vpop.xlane.xlu0 %172
    %vm174 = vcmp.eq.f32.partialorder %v165, %v169
    %v175 = vsel %vm174, %v9, 0.0
    %v176 = vsel %vm15, %v175, 0.0
    %177 = vadd.xlane.f32.xlu0 %v176
    %v178 = vpop.xlane.xlu0 %177
    %vm179 = vcmp.eq.f32.partialorder %v165, %v173
    %v180 = vsel %vm179, %v9, 0.0
    %v181 = vsel %vm15, %v180, 0.0
    %182 = vadd.xlane.f32.xlu0 %v181
    %v183 = vpop.xlane.xlu0 %182
    %vm184 = vcmp.gt.f32.partialorder %v18, 1.0
    %v185 = vsub.f32 %v183, %v178
    %v186 = vsel %vm184, %v185, 0.0
    %vm187 = vcmp.gt.f32.partialorder %v18, 0.0
    %v188 = vsel %vm187, %v22, nan
    %v189 = vsel %vm187, %v26, nan
    %v190 = vsel %vm187, %v164, nan
    %vm191 = vcmp.eq.s32.totalorder %v12, 0
    %vm192 = vcmp.eq.s32.totalorder %v12, 1
    %vm193 = vcmp.eq.s32.totalorder %v12, 2
    %v194 = vsel %vm193, %v190, %v186
    %v195 = vsel %vm192, %v189, %v194
    %v196 = vsel %vm191, %v188, %v195
    %vm197 = vcmask 25600
    %198 = vst.msk [vmem:[#allocation2] sm:$0x3] %vm197, %v196
    // Predicated region
    $region6: #{llm_decoder_forward.19} parent=1 // pred_check
      _
    $region7: #{llm_decoder_forward.19} parent=1 // pred_check_branch
      %200 = sbr.rel (0) target = $region9
    $region8: #{llm_decoder_forward.19} parent=1 // pred_region
      %s202 = ssub.s32 32, 32
      %203 = vsyncadd [#allocation3], %s202
      %s205 = sshll.u32 [#allocation2], 4
      %s206 = int_to_ptr.vmem [resolvable:$true] %s205
      %208 = dma.vmem_to_hbm [thread:$0]  %s206, 32, %s1, [#allocation3]
    $region9: #{llm_decoder_forward.19} parent=1 // pred_fallthru
      _
    // Predicated region
    $region10: #{llm_decoder_forward.19} parent=1 // pred_check
      _
    $region11: #{llm_decoder_forward.19} parent=1 // pred_check_branch
      %210 = sbr.rel (0) target = $region13
    $region12: #{llm_decoder_forward.19} parent=1 // pred_region
      %211 = dma.done [#allocation3], 32
    $region13: #{llm_decoder_forward.19} parent=1 // pred_fallthru
      _
    %212 = vsyncpa [#allocation3], 1

</llo_original>
